<compile_context>
chip_gen: v7x
topology: tpu7x:2x2x1
jax: 0.10.0
libtpu: 0.0.40
codegen_flags: <defaults>
</compile_context>

<pallas_src>
import math

import jax
import jax.numpy as jnp
from jax.experimental import pallas as pl
from jax.experimental.pallas import tpu as pltpu

# ----------------------------- config (small) ---------------------------------
B = 2                  # batch
D_INPUT = 16           # sequence length
D_CHANNEL = 16         # number of channels
D_MODEL = 64
D_OUTPUT = 2           # gate width (softmax over the two encodings)
E1_DIM = D_INPUT * D_MODEL                        # 1024
E2_DIM = D_CHANNEL * D_MODEL                      # 1024
GATE_OUT_DIM = E1_DIM + E2_DIM                    # 2048 (analog of 192512)
MLP_HIDDEN = GATE_OUT_DIM // 64                   # 32   (analog of 3008)
WCAT = MLP_HIDDEN + D_OUTPUT                      # fused fc1+gate weight width
NUM_BRANCH = 2                                    # time + frequency
BPAD = 8                                          # batch padded to one sublane tile
BN_EPS = 1e-5


# ----------------------------- BlockSpec helpers ------------------------------
def _full(shape):
    """Whole array as one block (last two dims == array dims -> exempt from (8,128))."""
    n = len(shape)
    return pl.BlockSpec(shape, lambda i, n=n: (0,) * n)


def _branch(shape):
    """Per-branch block: leading axis indexed by the branch grid id."""
    n = len(shape)
    return pl.BlockSpec(shape, lambda i, n=n: (i,) + (0,) * (n - 1))


# ------------------------------- fused kernel ---------------------------------
def _tfc_kernel(x1_ref, x2_ref, pe_ref,
                ecw_ref, ecb_ref, eiw_ref, eib_ref,
                w1_ref, w2_ref, gb_ref, f1b_ref,
                f2w_ref, f2b_ref,
                d1w_ref, d1b_ref, bng_ref, bnb_ref, d2w_ref, d2b_ref,
                h_ref, z_ref):
    # ---- embeddings (Linear + bias, + positional encoding on branch 1) ------
    # rows are (position, padded-batch); features in lanes.
    e1 = jnp.dot(x1_ref[0], ecw_ref[...], preferred_element_type=jnp.float32)
    e1 = e1 + ecb_ref[...] + pe_ref[...]                     # (L*8, D)
    e2 = jnp.dot(x2_ref[0], eiw_ref[...], preferred_element_type=jnp.float32)
    e2 = e2 + eib_ref[...]                                   # (C*8, D)
    # TODO(synk): Encoder stacks (encoder_list_1_t / encoder_list_2_t) are not
    #             defined in the provided source -> identity passthrough.

    # (L*8, D) -> (L, 8, D): splits the major dim on a sublane-tile boundary
    # (no data movement).
    e1 = e1.reshape(D_INPUT, BPAD, D_MODEL)
    e2 = e2.reshape(D_CHANNEL, BPAD, D_MODEL)

    # flatten(B, L*D) @ W == sum_l e[:, l, :] @ W.reshape(L, D, N)[l]
    # w*_ref fuses [fc1 columns | gate columns] per position -> one batched
    # matmul per embedding, then a cheap reduction over the major axis.
    u1 = jnp.einsum('lbd,ldn->lbn', e1, w1_ref[...],
                    preferred_element_type=jnp.float32).sum(axis=0)   # (8, 34)
    u2 = jnp.einsum('lbd,ldn->lbn', e2, w2_ref[...],
                    preferred_element_type=jnp.float32).sum(axis=0)   # (8, 34)

    # gate_t: Linear(2048 -> 2) + softmax; 2-way softmax == sigmoid of the
    # logit difference (exact).
    logits = u1[:, MLP_HIDDEN:WCAT] + u2[:, MLP_HIDDEN:WCAT] + gb_ref[...]   # (8, 2)
    diff = logits[:, 0:1] - logits[:, 1:2]
    g0 = jax.nn.sigmoid(diff)
    g1 = jax.nn.sigmoid(-diff)

    # mlp_fc1 on the gated concat:  (e*g) @ W == g * (e @ W)  (g is per-row).
    h = g0 * u1[:, :MLP_HIDDEN] + g1 * u2[:, :MLP_HIDDEN] + f1b_ref[...]     # (8, 32)
    h = jnp.maximum(h, 0.0)                                   # mlp_relu
    h = jnp.dot(h, f2w_ref[...], preferred_element_type=jnp.float32) + f2b_ref[...]
    h = h[:B]                                    # drop padded batch rows      (B, 32)

    # dense_t: Linear -> BatchNorm1d(train, batch stats) -> ReLU -> Linear
    z = jnp.dot(h, d1w_ref[...], preferred_element_type=jnp.float32) + d1b_ref[...]
    mean = jnp.mean(z, axis=0, keepdims=True)
    var = jnp.mean((z - mean) ** 2, axis=0, keepdims=True)    # biased, as BN uses
    z = (z - mean) * jax.lax.rsqrt(var + BN_EPS) * bng_ref[...] + bnb_ref[...]
    z = jnp.maximum(z, 0.0)
    z = jnp.dot(z, d2w_ref[...], preferred_element_type=jnp.float32) + d2b_ref[...]

    h_ref[0] = h.astype(h_ref.dtype)                          # (B, 32)
    z_ref[0] = z.astype(z_ref.dtype)                          # (B, 128)


# ------------------------------ pallas wrapper ---------------------------------
def _tfc_pallas(params, pe_rep, x1, x2):
    L, C, D = D_INPUT, D_CHANNEL, D_MODEL
    # Weight layout prep (reshape/concat only): per-position [fc1 | gate] slabs.
    w1 = jnp.concatenate(
        [params["fc1_w"][:E1_DIM].reshape(L, D, MLP_HIDDEN),
         params["gate_w"][:E1_DIM].reshape(L, D, D_OUTPUT)], axis=-1)   # (L, D, 34)
    w2 = jnp.concatenate(
        [params["fc1_w"][E1_DIM:].reshape(C, D, MLP_HIDDEN),
         params["gate_w"][E1_DIM:].reshape(C, D, D_OUTPUT)], axis=-1)   # (C, D, 34)

    return pl.pallas_call(
        _tfc_kernel,
        out_shape=(
            jax.ShapeDtypeStruct((NUM_BRANCH, B, MLP_HIDDEN), jnp.float32),
            jax.ShapeDtypeStruct((NUM_BRANCH, B, 128), jnp.float32),
        ),
        grid=(NUM_BRANCH,),
        in_specs=[
            _branch((1, L * BPAD, C)),
            _branch((1, C * BPAD, L)),
            _full((L * BPAD, D)),
            _full((C, D)), _full((1, D)),
            _full((L, D)), _full((1, D)),
            _full((L, D, WCAT)),
            _full((C, D, WCAT)),
            _full((1, D_OUTPUT)),
            _full((1, MLP_HIDDEN)),
            _full((MLP_HIDDEN, MLP_HIDDEN)), _full((1, MLP_HIDDEN)),
            _full((MLP_HIDDEN, 256)), _full((1, 256)),
            _full((1, 256)), _full((1, 256)),
            _full((256, 128)), _full((1, 128)),
        ],
        out_specs=(
            _branch((1, B, MLP_HIDDEN)),
            _branch((1, B, 128)),
        ),
        compiler_params=pltpu.CompilerParams(dimension_semantics=("parallel",)),
    )(x1, x2, pe_rep,
      params["emb_ch_w"], params["emb_ch_b"],
      params["emb_in_w"], params["emb_in_b"],
      w1, w2, params["gate_b"], params["fc1_b"],
      params["fc2_w"], params["fc2_b"],
      params["d1_w"], params["d1_b"],
      params["bn_gamma"], params["bn_beta"],
      params["d2_w"], params["d2_b"])


# ----------------------------- parameter init ---------------------------------
def _linear_init(key, fan_in, fan_out):
    kw, kb = jax.random.split(key)
    bound = 1.0 / math.sqrt(fan_in)
    w = jax.random.uniform(kw, (fan_in, fan_out), jnp.float32, -bound, bound)
    b = jax.random.uniform(kb, (1, fan_out), jnp.float32, -bound, bound)
    return w, b


def init_params(key):
    keys = jax.random.split(key, 8)
    p = {}
    p["emb_ch_w"], p["emb_ch_b"] = _linear_init(keys[0], D_CHANNEL, D_MODEL)
    p["emb_in_w"], p["emb_in_b"] = _linear_init(keys[1], D_INPUT, D_MODEL)
    p["gate_w"], p["gate_b"] = _linear_init(keys[2], GATE_OUT_DIM, D_OUTPUT)
    p["fc1_w"], p["fc1_b"] = _linear_init(keys[3], GATE_OUT_DIM, MLP_HIDDEN)
    p["fc2_w"], p["fc2_b"] = _linear_init(keys[4], MLP_HIDDEN, MLP_HIDDEN)
    p["d1_w"], p["d1_b"] = _linear_init(keys[5], MLP_HIDDEN, 256)
    p["d2_w"], p["d2_b"] = _linear_init(keys[6], 256, 128)
    p["bn_gamma"] = jnp.ones((1, 256), jnp.float32)
    p["bn_beta"] = jnp.zeros((1, 256), jnp.float32)
    return p


def positional_encoding(d_input, d_model):
    pos = jnp.arange(d_input, dtype=jnp.float32)[:, None]
    temp = jnp.arange(0, d_model, 2, dtype=jnp.float32)
    temp = jnp.exp(temp * (-math.log(10000.0) / d_model))[None, :]
    ang = pos @ temp
    pe = jnp.ones((d_input, d_model), jnp.float32)
    pe = pe.at[:, 0::2].set(jnp.sin(ang))
    pe = pe.at[:, 1::2].set(jnp.cos(ang))
    return pe


# ------------------------------- forward ---------------------------------------
@jax.jit
def tfc_forward(params, pe, x_in_t, x_in_f):
    # Both inputs go through the shared time-branch weights (as the original
    # forward does); stack them on a leading branch axis -> one pallas_call.
    x = jnp.stack([x_in_t, x_in_f], axis=0)                    # (2, B, L, C)

    # rows (l, padded-batch) for embedding_channel_t
    x_lb = jnp.transpose(x, (0, 2, 1, 3))                      # (2, L, B, C)
    x_lb = jnp.pad(x_lb, ((0, 0), (0, 0), (0, BPAD - B), (0, 0)))
    x1 = x_lb.reshape(NUM_BRANCH, D_INPUT * BPAD, D_CHANNEL)

    # rows (c, padded-batch) for embedding_input_t (input transposed over -1,-2)
    x_cb = jnp.transpose(x, (0, 3, 1, 2))                      # (2, C, B, L)
    x_cb = jnp.pad(x_cb, ((0, 0), (0, 0), (0, BPAD - B), (0, 0)))
    x2 = x_cb.reshape(NUM_BRANCH, D_CHANNEL * BPAD, D_INPUT)

    pe_rep = jnp.repeat(pe, BPAD, axis=0)                      # (L*8, D)

    h, z = _tfc_pallas(params, pe_rep, x1, x2)
    return h[0], z[0], h[1], z[1]                              # time, freq


# --------------------------- pure-JAX reference --------------------------------
@jax.jit
def _reference_branch(params, pe, x):
    """Un-fused forward in the original module's op order (for verification)."""
    e1 = x @ params["emb_ch_w"] + params["emb_ch_b"] + pe[None]          # (B,L,D)
    e2 = jnp.swapaxes(x, -1, -2) @ params["emb_in_w"] + params["emb_in_b"]  # (B,C,D)
    e1f = e1.reshape(B, -1)
    e2f = e2.reshape(B, -1)
    cat = jnp.concatenate([e1f, e2f], axis=-1)
    gate = jax.nn.softmax(cat @ params["gate_w"] + params["gate_b"], axis=-1)
    enc = jnp.concatenate([e1f * gate[:, 0:1], e2f * gate[:, 1:2]], axis=-1)
    h = enc @ params["fc1_w"] + params["fc1_b"]
    h = jnp.maximum(h, 0.0)
    h = h @ params["fc2_w"] + params["fc2_b"]
    z = h @ params["d1_w"] + params["d1_b"]
    mean = z.mean(axis=0, keepdims=True)
    var = ((z - mean) ** 2).mean(axis=0, keepdims=True)
    z = (z - mean) * jax.lax.rsqrt(var + BN_EPS) * params["bn_gamma"] + params["bn_beta"]
    z = jnp.maximum(z, 0.0)
    z = z @ params["d2_w"] + params["d2_b"]
    return h, z


# --------------------------------- main -----------------------------------------
if __name__ == "__main__":
    params = init_params(jax.random.PRNGKey(42))
    pe = positional_encoding(D_INPUT, D_MODEL)

    key = jax.random.PRNGKey(0)
    k_t, k_f = jax.random.split(key)
    x_in_t = jax.random.normal(k_t, (B, D_INPUT, D_CHANNEL), jnp.float32)
    x_in_f = jax.random.normal(k_f, (B, D_INPUT, D_CHANNEL), jnp.float32)

    h_time, z_time, h_freq, z_freq = tfc_forward(params, pe, x_in_t, x_in_f)
    jax.block_until_ready((h_time, z_time, h_freq, z_freq))

    assert h_time.shape == (B, MLP_HIDDEN) and h_freq.shape == (B, MLP_HIDDEN)
    assert z_time.shape == (B, 128) and z_freq.shape == (B, 128)

    # Verify the fused kernel against the un-fused reference (loose tolerance
    # to absorb MXU matmul-precision / reassociation differences).
    rh_t, rz_t = _reference_branch(params, pe, x_in_t)
    rh_f, rz_f = _reference_branch(params, pe, x_in_f)
    ok = (bool(jnp.allclose(h_time, rh_t, rtol=2e-2, atol=2e-2)) and
          bool(jnp.allclose(z_time, rz_t, rtol=2e-2, atol=2e-2)) and
          bool(jnp.allclose(h_freq, rh_f, rtol=2e-2, atol=2e-2)) and
          bool(jnp.allclose(z_freq, rz_f, rtol=2e-2, atol=2e-2)))
    assert ok, "Pallas kernel does not match pure-JAX reference"

    print("KERNEL_OK")
</pallas_src>

<mosaic_0001>
module attributes {stable_mosaic.version = 11 : i64} {
  func.func @_tfc_kernel(%arg0: i32, %arg1: memref<1x128x16xf32, #tpu.memory_space<vmem>>, %arg2: memref<1x128x16xf32, #tpu.memory_space<vmem>>, %arg3: memref<128x64xf32, #tpu.memory_space<vmem>>, %arg4: memref<16x64xf32, #tpu.memory_space<vmem>>, %arg5: memref<1x64xf32, #tpu.memory_space<vmem>>, %arg6: memref<16x64xf32, #tpu.memory_space<vmem>>, %arg7: memref<1x64xf32, #tpu.memory_space<vmem>>, %arg8: memref<16x64x34xf32, #tpu.memory_space<vmem>>, %arg9: memref<16x64x34xf32, #tpu.memory_space<vmem>>, %arg10: memref<1x2xf32, #tpu.memory_space<vmem>>, %arg11: memref<1x32xf32, #tpu.memory_space<vmem>>, %arg12: memref<32x32xf32, #tpu.memory_space<vmem>>, %arg13: memref<1x32xf32, #tpu.memory_space<vmem>>, %arg14: memref<32x256xf32, #tpu.memory_space<vmem>>, %arg15: memref<1x256xf32, #tpu.memory_space<vmem>>, %arg16: memref<1x256xf32, #tpu.memory_space<vmem>>, %arg17: memref<1x256xf32, #tpu.memory_space<vmem>>, %arg18: memref<256x128xf32, #tpu.memory_space<vmem>>, %arg19: memref<1x128xf32, #tpu.memory_space<vmem>>, %arg20: memref<1x2x32xf32, #tpu.memory_space<vmem>>, %arg21: memref<1x2x128xf32, #tpu.memory_space<vmem>>) attributes {dimension_semantics = [#tpu.dimension_semantics<parallel>], iteration_bounds = array<i64: 2>, scalar_prefetch = 0 : i64, scratch_operands = 0 : i64, tpu.core_type = #tpu.core_type<tc>, window_params = [{transform_indices = @transform_0, window_bounds = array<i64: 1, 128, 16>}, {transform_indices = @transform_1, window_bounds = array<i64: 1, 128, 16>}, {pipeline_mode = #tpu.pipeline_mode<synchronous>, transform_indices = @transform_2, window_bounds = array<i64: 128, 64>}, {pipeline_mode = #tpu.pipeline_mode<synchronous>, transform_indices = @transform_3, window_bounds = array<i64: 16, 64>}, {pipeline_mode = #tpu.pipeline_mode<synchronous>, transform_indices = @transform_4, window_bounds = array<i64: 1, 64>}, {pipeline_mode = #tpu.pipeline_mode<synchronous>, transform_indices = @transform_5, window_bounds = array<i64: 16, 64>}, {pipeline_mode = #tpu.pipeline_mode<synchronous>, transform_indices = @transform_6, window_bounds = array<i64: 1, 64>}, {pipeline_mode = #tpu.pipeline_mode<synchronous>, transform_indices = @transform_7, window_bounds = array<i64: 16, 64, 34>}, {pipeline_mode = #tpu.pipeline_mode<synchronous>, transform_indices = @transform_8, window_bounds = array<i64: 16, 64, 34>}, {pipeline_mode = #tpu.pipeline_mode<synchronous>, transform_indices = @transform_9, window_bounds = array<i64: 1, 2>}, {pipeline_mode = #tpu.pipeline_mode<synchronous>, transform_indices = @transform_10, window_bounds = array<i64: 1, 32>}, {pipeline_mode = #tpu.pipeline_mode<synchronous>, transform_indices = @transform_11, window_bounds = array<i64: 32, 32>}, {pipeline_mode = #tpu.pipeline_mode<synchronous>, transform_indices = @transform_12, window_bounds = array<i64: 1, 32>}, {pipeline_mode = #tpu.pipeline_mode<synchronous>, transform_indices = @transform_13, window_bounds = array<i64: 32, 256>}, {pipeline_mode = #tpu.pipeline_mode<synchronous>, transform_indices = @transform_14, window_bounds = array<i64: 1, 256>}, {pipeline_mode = #tpu.pipeline_mode<synchronous>, transform_indices = @transform_15, window_bounds = array<i64: 1, 256>}, {pipeline_mode = #tpu.pipeline_mode<synchronous>, transform_indices = @transform_16, window_bounds = array<i64: 1, 256>}, {pipeline_mode = #tpu.pipeline_mode<synchronous>, transform_indices = @transform_17, window_bounds = array<i64: 256, 128>}, {pipeline_mode = #tpu.pipeline_mode<synchronous>, transform_indices = @transform_18, window_bounds = array<i64: 1, 128>}, {transform_indices = @transform_19, window_bounds = array<i64: 1, 2, 32>}, {transform_indices = @transform_20, window_bounds = array<i64: 1, 2, 128>}]} {
    %c0 = arith.constant 0 : index
    %c0_0 = arith.constant 0 : index
    %c0_1 = arith.constant 0 : index
    %0 = vector.load %arg1[%c0, %c0_0, %c0_1] : memref<1x128x16xf32, #tpu.memory_space<vmem>>, vector<1x128x16xf32>
    %1 = vector.shape_cast %0 : vector<1x128x16xf32> to vector<128x16xf32>
    %c0_2 = arith.constant 0 : index
    %c0_3 = arith.constant 0 : index
    %2 = vector.load %arg4[%c0_2, %c0_3] : memref<16x64xf32, #tpu.memory_space<vmem>>, vector<16x64xf32>
    %cst = arith.constant dense<0.000000e+00> : vector<128x64xf32>
    %3 = tpu.matmul %1, %2, %cst {dimension_numbers = #tpu.dot_dimension_numbers<[1], [0], [0], [1], [0, 0, 1, 1], [], []>} : vector<128x16xf32>, vector<16x64xf32>, vector<128x64xf32> -> vector<128x64xf32>
    %c0_4 = arith.constant 0 : index
    %c0_5 = arith.constant 0 : index
    %4 = vector.load %arg5[%c0_4, %c0_5] : memref<1x64xf32, #tpu.memory_space<vmem>>, vector<1x64xf32>
    %5 = vector.broadcast %4 : vector<1x64xf32> to vector<128x64xf32>
    %6 = arith.addf %3, %5 : vector<128x64xf32>
    %c0_6 = arith.constant 0 : index
    %c0_7 = arith.constant 0 : index
    %7 = vector.load %arg3[%c0_6, %c0_7] : memref<128x64xf32, #tpu.memory_space<vmem>>, vector<128x64xf32>
    %8 = arith.addf %6, %7 : vector<128x64xf32>
    %c0_8 = arith.constant 0 : index
    %c0_9 = arith.constant 0 : index
    %c0_10 = arith.constant 0 : index
    %9 = vector.load %arg2[%c0_8, %c0_9, %c0_10] : memref<1x128x16xf32, #tpu.memory_space<vmem>>, vector<1x128x16xf32>
    %10 = vector.shape_cast %9 : vector<1x128x16xf32> to vector<128x16xf32>
    %c0_11 = arith.constant 0 : index
    %c0_12 = arith.constant 0 : index
    %11 = vector.load %arg6[%c0_11, %c0_12] : memref<16x64xf32, #tpu.memory_space<vmem>>, vector<16x64xf32>
    %cst_13 = arith.constant dense<0.000000e+00> : vector<128x64xf32>
    %12 = tpu.matmul %10, %11, %cst_13 {dimension_numbers = #tpu.dot_dimension_numbers<[1], [0], [0], [1], [0, 0, 1, 1], [], []>} : vector<128x16xf32>, vector<16x64xf32>, vector<128x64xf32> -> vector<128x64xf32>
    %c0_14 = arith.constant 0 : index
    %c0_15 = arith.constant 0 : index
    %13 = vector.load %arg7[%c0_14, %c0_15] : memref<1x64xf32, #tpu.memory_space<vmem>>, vector<1x64xf32>
    %14 = vector.broadcast %13 : vector<1x64xf32> to vector<128x64xf32>
    %15 = arith.addf %12, %14 : vector<128x64xf32>
    %16 = vector.shape_cast %8 : vector<128x64xf32> to vector<16x8x64xf32>
    %17 = vector.shape_cast %15 : vector<128x64xf32> to vector<16x8x64xf32>
    %c0_16 = arith.constant 0 : index
    %c0_17 = arith.constant 0 : index
    %c0_18 = arith.constant 0 : index
    %18 = vector.load %arg8[%c0_16, %c0_17, %c0_18] : memref<16x64x34xf32, #tpu.memory_space<vmem>>, vector<16x64x34xf32>
    "tpu.trace_start"() <{level = 10 : i32, message = "lbd,ldn->lbn"}> : () -> ()
    %cst_19 = arith.constant dense<0.000000e+00> : vector<16x8x34xf32>
    %19 = tpu.matmul %16, %18, %cst_19 {dimension_numbers = #tpu.dot_dimension_numbers<[2], [1], [1], [2], [0, 0, 0, 1, 1, 2], [0], [0]>} : vector<16x8x64xf32>, vector<16x64x34xf32>, vector<16x8x34xf32> -> vector<16x8x34xf32>
    "tpu.trace_stop"() : () -> ()
    %cst_20 = arith.constant dense<0.000000e+00> : vector<8x34xf32>
    %20 = vector.multi_reduction <add>, %19, %cst_20 [0] : vector<16x8x34xf32> to vector<8x34xf32>
    %c0_21 = arith.constant 0 : index
    %c0_22 = arith.constant 0 : index
    %c0_23 = arith.constant 0 : index
    %21 = vector.load %arg9[%c0_21, %c0_22, %c0_23] : memref<16x64x34xf32, #tpu.memory_space<vmem>>, vector<16x64x34xf32>
    "tpu.trace_start"() <{level = 10 : i32, message = "lbd,ldn->lbn"}> : () -> ()
    %cst_24 = arith.constant dense<0.000000e+00> : vector<16x8x34xf32>
    %22 = tpu.matmul %17, %21, %cst_24 {dimension_numbers = #tpu.dot_dimension_numbers<[2], [1], [1], [2], [0, 0, 0, 1, 1, 2], [0], [0]>} : vector<16x8x64xf32>, vector<16x64x34xf32>, vector<16x8x34xf32> -> vector<16x8x34xf32>
    "tpu.trace_stop"() : () -> ()
    %cst_25 = arith.constant dense<0.000000e+00> : vector<8x34xf32>
    %23 = vector.multi_reduction <add>, %22, %cst_25 [0] : vector<16x8x34xf32> to vector<8x34xf32>
    %24 = vector.extract_strided_slice %20 {offsets = [0, 32], sizes = [8, 2], strides = [1, 1]} : vector<8x34xf32> to vector<8x2xf32>
    %25 = vector.extract_strided_slice %23 {offsets = [0, 32], sizes = [8, 2], strides = [1, 1]} : vector<8x34xf32> to vector<8x2xf32>
    %26 = arith.addf %24, %25 : vector<8x2xf32>
    %c0_26 = arith.constant 0 : index
    %c0_27 = arith.constant 0 : index
    %27 = vector.load %arg10[%c0_26, %c0_27] : memref<1x2xf32, #tpu.memory_space<vmem>>, vector<1x2xf32>
    %28 = vector.broadcast %27 : vector<1x2xf32> to vector<8x2xf32>
    %29 = arith.addf %26, %28 : vector<8x2xf32>
    %30 = vector.extract_strided_slice %29 {offsets = [0, 0], sizes = [8, 1], strides = [1, 1]} : vector<8x2xf32> to vector<8x1xf32>
    %31 = vector.extract_strided_slice %29 {offsets = [0, 1], sizes = [8, 1], strides = [1, 1]} : vector<8x2xf32> to vector<8x1xf32>
    %32 = arith.subf %30, %31 : vector<8x1xf32>
    %33 = arith.negf %32 : vector<8x1xf32>
    %34 = math.exp %33 : vector<8x1xf32>
    %cst_28 = arith.constant 1.000000e+00 : f32
    %35 = vector.broadcast %cst_28 : f32 to vector<8x1xf32>
    %36 = arith.addf %35, %34 : vector<8x1xf32>
    %37 = arith.divf %35, %36 : vector<8x1xf32>
    %cst_29 = arith.constant 0.000000e+00 : f32
    %38 = vector.broadcast %cst_29 : f32 to vector<8x1xf32>
    %39 = arith.subf %38, %32 : vector<8x1xf32>
    %40 = arith.negf %39 : vector<8x1xf32>
    %41 = math.exp %40 : vector<8x1xf32>
    %cst_30 = arith.constant 1.000000e+00 : f32
    %42 = vector.broadcast %cst_30 : f32 to vector<8x1xf32>
    %43 = arith.addf %42, %41 : vector<8x1xf32>
    %44 = arith.divf %42, %43 : vector<8x1xf32>
    %45 = vector.extract_strided_slice %20 {offsets = [0, 0], sizes = [8, 32], strides = [1, 1]} : vector<8x34xf32> to vector<8x32xf32>
    %46 = vector.broadcast %37 : vector<8x1xf32> to vector<8x32xf32>
    %47 = arith.mulf %46, %45 : vector<8x32xf32>
    %48 = vector.extract_strided_slice %23 {offsets = [0, 0], sizes = [8, 32], strides = [1, 1]} : vector<8x34xf32> to vector<8x32xf32>
    %49 = vector.broadcast %44 : vector<8x1xf32> to vector<8x32xf32>
    %50 = arith.mulf %49, %48 : vector<8x32xf32>
    %51 = arith.addf %47, %50 : vector<8x32xf32>
    %c0_31 = arith.constant 0 : index
    %c0_32 = arith.constant 0 : index
    %52 = vector.load %arg11[%c0_31, %c0_32] : memref<1x32xf32, #tpu.memory_space<vmem>>, vector<1x32xf32>
    %53 = vector.broadcast %52 : vector<1x32xf32> to vector<8x32xf32>
    %54 = arith.addf %51, %53 : vector<8x32xf32>
    %cst_33 = arith.constant 0.000000e+00 : f32
    %55 = vector.broadcast %cst_33 : f32 to vector<8x32xf32>
    %56 = arith.maximumf %54, %55 : vector<8x32xf32>
    %c0_34 = arith.constant 0 : index
    %c0_35 = arith.constant 0 : index
    %57 = vector.load %arg12[%c0_34, %c0_35] : memref<32x32xf32, #tpu.memory_space<vmem>>, vector<32x32xf32>
    %cst_36 = arith.constant dense<0.000000e+00> : vector<8x32xf32>
    %58 = tpu.matmul %56, %57, %cst_36 {dimension_numbers = #tpu.dot_dimension_numbers<[1], [0], [0], [1], [0, 0, 1, 1], [], []>} : vector<8x32xf32>, vector<32x32xf32>, vector<8x32xf32> -> vector<8x32xf32>
    %c0_37 = arith.constant 0 : index
    %c0_38 = arith.constant 0 : index
    %59 = vector.load %arg13[%c0_37, %c0_38] : memref<1x32xf32, #tpu.memory_space<vmem>>, vector<1x32xf32>
    %60 = vector.broadcast %59 : vector<1x32xf32> to vector<8x32xf32>
    %61 = arith.addf %58, %60 : vector<8x32xf32>
    %62 = vector.extract_strided_slice %61 {offsets = [0, 0], sizes = [2, 32], strides = [1, 1]} : vector<8x32xf32> to vector<2x32xf32>
    %c0_39 = arith.constant 0 : index
    %c0_40 = arith.constant 0 : index
    %63 = vector.load %arg14[%c0_39, %c0_40] : memref<32x256xf32, #tpu.memory_space<vmem>>, vector<32x256xf32>
    %cst_41 = arith.constant dense<0.000000e+00> : vector<2x256xf32>
    %64 = tpu.matmul %62, %63, %cst_41 {dimension_numbers = #tpu.dot_dimension_numbers<[1], [0], [0], [1], [0, 0, 1, 1], [], []>} : vector<2x32xf32>, vector<32x256xf32>, vector<2x256xf32> -> vector<2x256xf32>
    %c0_42 = arith.constant 0 : index
    %c0_43 = arith.constant 0 : index
    %65 = vector.load %arg15[%c0_42, %c0_43] : memref<1x256xf32, #tpu.memory_space<vmem>>, vector<1x256xf32>
    %66 = vector.broadcast %65 : vector<1x256xf32> to vector<2x256xf32>
    %67 = arith.addf %64, %66 : vector<2x256xf32>
    %cst_44 = arith.constant dense<0.000000e+00> : vector<256xf32>
    %68 = vector.multi_reduction <add>, %67, %cst_44 [0] : vector<2x256xf32> to vector<256xf32>
    %69 = vector.shape_cast %68 : vector<256xf32> to vector<1x256xf32>
    %cst_45 = arith.constant 2.000000e+00 : f32
    %70 = vector.broadcast %cst_45 : f32 to vector<1x256xf32>
    %71 = arith.divf %69, %70 : vector<1x256xf32>
    %72 = vector.broadcast %71 : vector<1x256xf32> to vector<2x256xf32>
    %73 = arith.subf %67, %72 : vector<2x256xf32>
    %74 = arith.mulf %73, %73 : vector<2x256xf32>
    %cst_46 = arith.constant dense<0.000000e+00> : vector<256xf32>
    %75 = vector.multi_reduction <add>, %74, %cst_46 [0] : vector<2x256xf32> to vector<256xf32>
    %76 = vector.shape_cast %75 : vector<256xf32> to vector<1x256xf32>
    %cst_47 = arith.constant 2.000000e+00 : f32
    %77 = vector.broadcast %cst_47 : f32 to vector<1x256xf32>
    %78 = arith.divf %76, %77 : vector<1x256xf32>
    %79 = vector.broadcast %71 : vector<1x256xf32> to vector<2x256xf32>
    %80 = arith.subf %67, %79 : vector<2x256xf32>
    %cst_48 = arith.constant 9.99999974E-6 : f32
    %81 = vector.broadcast %cst_48 : f32 to vector<1x256xf32>
    %82 = arith.addf %78, %81 : vector<1x256xf32>
    %83 = math.rsqrt %82 : vector<1x256xf32>
    %84 = vector.broadcast %83 : vector<1x256xf32> to vector<2x256xf32>
    %85 = arith.mulf %80, %84 : vector<2x256xf32>
    %c0_49 = arith.constant 0 : index
    %c0_50 = arith.constant 0 : index
    %86 = vector.load %arg16[%c0_49, %c0_50] : memref<1x256xf32, #tpu.memory_space<vmem>>, vector<1x256xf32>
    %87 = vector.broadcast %86 : vector<1x256xf32> to vector<2x256xf32>
    %88 = arith.mulf %85, %87 : vector<2x256xf32>
    %c0_51 = arith.constant 0 : index
    %c0_52 = arith.constant 0 : index
    %89 = vector.load %arg17[%c0_51, %c0_52] : memref<1x256xf32, #tpu.memory_space<vmem>>, vector<1x256xf32>
    %90 = vector.broadcast %89 : vector<1x256xf32> to vector<2x256xf32>
    %91 = arith.addf %88, %90 : vector<2x256xf32>
    %cst_53 = arith.constant 0.000000e+00 : f32
    %92 = vector.broadcast %cst_53 : f32 to vector<2x256xf32>
    %93 = arith.maximumf %91, %92 : vector<2x256xf32>
    %c0_54 = arith.constant 0 : index
    %c0_55 = arith.constant 0 : index
    %94 = vector.load %arg18[%c0_54, %c0_55] : memref<256x128xf32, #tpu.memory_space<vmem>>, vector<256x128xf32>
    %cst_56 = arith.constant dense<0.000000e+00> : vector<2x128xf32>
    %95 = tpu.matmul %93, %94, %cst_56 {dimension_numbers = #tpu.dot_dimension_numbers<[1], [0], [0], [1], [0, 0, 1, 1], [], []>} : vector<2x256xf32>, vector<256x128xf32>, vector<2x128xf32> -> vector<2x128xf32>
    %c0_57 = arith.constant 0 : index
    %c0_58 = arith.constant 0 : index
    %96 = vector.load %arg19[%c0_57, %c0_58] : memref<1x128xf32, #tpu.memory_space<vmem>>, vector<1x128xf32>
    %97 = vector.broadcast %96 : vector<1x128xf32> to vector<2x128xf32>
    %98 = arith.addf %95, %97 : vector<2x128xf32>
    %c0_59 = arith.constant 0 : index
    %c0_60 = arith.constant 0 : index
    %c0_61 = arith.constant 0 : index
    %99 = vector.load %arg20[%c0_59, %c0_60, %c0_61] : memref<1x2x32xf32, #tpu.memory_space<vmem>>, vector<1x2x32xf32>
    %100 = vector.shape_cast %99 : vector<1x2x32xf32> to vector<2x32xf32>
    %101 = vector.shape_cast %62 : vector<2x32xf32> to vector<1x2x32xf32>
    tpu.vector_store %arg20[%c0_59, %c0_60, %c0_61], %101 {strides = array<i32>} : memref<1x2x32xf32, #tpu.memory_space<vmem>>, vector<1x2x32xf32>,
    %c0_62 = arith.constant 0 : index
    %c0_63 = arith.constant 0 : index
    %c0_64 = arith.constant 0 : index
    %102 = vector.load %arg21[%c0_62, %c0_63, %c0_64] : memref<1x2x128xf32, #tpu.memory_space<vmem>>, vector<1x2x128xf32>
    %103 = vector.shape_cast %102 : vector<1x2x128xf32> to vector<2x128xf32>
    %104 = vector.shape_cast %98 : vector<2x128xf32> to vector<1x2x128xf32>
    tpu.vector_store %arg21[%c0_62, %c0_63, %c0_64], %104 {strides = array<i32>} : memref<1x2x128xf32, #tpu.memory_space<vmem>>, vector<1x2x128xf32>,
    return
  }
  func.func @transform_0(%arg0: i32) -> (i32, i32, i32) {
    %c0_i32 = arith.constant 0 : i32
    %c0_i32_0 = arith.constant 0 : i32
    %c0_i32_1 = arith.constant 0 : i32
    return %arg0, %c0_i32, %c0_i32_0 : i32, i32, i32
  }
  func.func @transform_1(%arg0: i32) -> (i32, i32, i32) {
    %c0_i32 = arith.constant 0 : i32
    %c0_i32_0 = arith.constant 0 : i32
    %c0_i32_1 = arith.constant 0 : i32
    return %arg0, %c0_i32, %c0_i32_0 : i32, i32, i32
  }
  func.func @transform_2(%arg0: i32) -> (i32, i32) {
    %c0_i32 = arith.constant 0 : i32
    %c0_i32_0 = arith.constant 0 : i32
    %c0_i32_1 = arith.constant 0 : i32
    return %c0_i32, %c0_i32_0 : i32, i32
  }
  func.func @transform_3(%arg0: i32) -> (i32, i32) {
    %c0_i32 = arith.constant 0 : i32
    %c0_i32_0 = arith.constant 0 : i32
    %c0_i32_1 = arith.constant 0 : i32
    return %c0_i32, %c0_i32_0 : i32, i32
  }
  func.func @transform_4(%arg0: i32) -> (i32, i32) {
    %c0_i32 = arith.constant 0 : i32
    %c0_i32_0 = arith.constant 0 : i32
    %c0_i32_1 = arith.constant 0 : i32
    return %c0_i32, %c0_i32_0 : i32, i32
  }
  func.func @transform_5(%arg0: i32) -> (i32, i32) {
    %c0_i32 = arith.constant 0 : i32
    %c0_i32_0 = arith.constant 0 : i32
    %c0_i32_1 = arith.constant 0 : i32
    return %c0_i32, %c0_i32_0 : i32, i32
  }
  func.func @transform_6(%arg0: i32) -> (i32, i32) {
    %c0_i32 = arith.constant 0 : i32
    %c0_i32_0 = arith.constant 0 : i32
    %c0_i32_1 = arith.constant 0 : i32
    return %c0_i32, %c0_i32_0 : i32, i32
  }
  func.func @transform_7(%arg0: i32) -> (i32, i32, i32) {
    %c0_i32 = arith.constant 0 : i32
    %c0_i32_0 = arith.constant 0 : i32
    %c0_i32_1 = arith.constant 0 : i32
    %c0_i32_2 = arith.constant 0 : i32
    return %c0_i32, %c0_i32_0, %c0_i32_1 : i32, i32, i32
  }
  func.func @transform_8(%arg0: i32) -> (i32, i32, i32) {
    %c0_i32 = arith.constant 0 : i32
    %c0_i32_0 = arith.constant 0 : i32
    %c0_i32_1 = arith.constant 0 : i32
    %c0_i32_2 = arith.constant 0 : i32
    return %c0_i32, %c0_i32_0, %c0_i32_1 : i32, i32, i32
  }
  func.func @transform_9(%arg0: i32) -> (i32, i32) {
    %c0_i32 = arith.constant 0 : i32
    %c0_i32_0 = arith.constant 0 : i32
    %c0_i32_1 = arith.constant 0 : i32
    return %c0_i32, %c0_i32_0 : i32, i32
  }
  func.func @transform_10(%arg0: i32) -> (i32, i32) {
    %c0_i32 = arith.constant 0 : i32
    %c0_i32_0 = arith.constant 0 : i32
    %c0_i32_1 = arith.constant 0 : i32
    return %c0_i32, %c0_i32_0 : i32, i32
  }
  func.func @transform_11(%arg0: i32) -> (i32, i32) {
    %c0_i32 = arith.constant 0 : i32
    %c0_i32_0 = arith.constant 0 : i32
    %c0_i32_1 = arith.constant 0 : i32
    return %c0_i32, %c0_i32_0 : i32, i32
  }
  func.func @transform_12(%arg0: i32) -> (i32, i32) {
    %c0_i32 = arith.constant 0 : i32
    %c0_i32_0 = arith.constant 0 : i32
    %c0_i32_1 = arith.constant 0 : i32
    return %c0_i32, %c0_i32_0 : i32, i32
  }
  func.func @transform_13(%arg0: i32) -> (i32, i32) {
    %c0_i32 = arith.constant 0 : i32
    %c0_i32_0 = arith.constant 0 : i32
    %c0_i32_1 = arith.constant 0 : i32
    return %c0_i32, %c0_i32_0 : i32, i32
  }
  func.func @transform_14(%arg0: i32) -> (i32, i32) {
    %c0_i32 = arith.constant 0 : i32
    %c0_i32_0 = arith.constant 0 : i32
    %c0_i32_1 = arith.constant 0 : i32
    return %c0_i32, %c0_i32_0 : i32, i32
  }
  func.func @transform_15(%arg0: i32) -> (i32, i32) {
    %c0_i32 = arith.constant 0 : i32
    %c0_i32_0 = arith.constant 0 : i32
    %c0_i32_1 = arith.constant 0 : i32
    return %c0_i32, %c0_i32_0 : i32, i32
  }
  func.func @transform_16(%arg0: i32) -> (i32, i32) {
    %c0_i32 = arith.constant 0 : i32
    %c0_i32_0 = arith.constant 0 : i32
    %c0_i32_1 = arith.constant 0 : i32
    return %c0_i32, %c0_i32_0 : i32, i32
  }
  func.func @transform_17(%arg0: i32) -> (i32, i32) {
    %c0_i32 = arith.constant 0 : i32
    %c0_i32_0 = arith.constant 0 : i32
    %c0_i32_1 = arith.constant 0 : i32
    return %c0_i32, %c0_i32_0 : i32, i32
  }
  func.func @transform_18(%arg0: i32) -> (i32, i32) {
    %c0_i32 = arith.constant 0 : i32
    %c0_i32_0 = arith.constant 0 : i32
    %c0_i32_1 = arith.constant 0 : i32
    return %c0_i32, %c0_i32_0 : i32, i32
  }
  func.func @transform_19(%arg0: i32) -> (i32, i32, i32) {
    %c0_i32 = arith.constant 0 : i32
    %c0_i32_0 = arith.constant 0 : i32
    %c0_i32_1 = arith.constant 0 : i32
    return %arg0, %c0_i32, %c0_i32_0 : i32, i32, i32
  }
  func.func @transform_20(%arg0: i32) -> (i32, i32, i32) {
    %c0_i32 = arith.constant 0 : i32
    %c0_i32_0 = arith.constant 0 : i32
    %c0_i32_1 = arith.constant 0 : i32
    return %arg0, %c0_i32, %c0_i32_0 : i32, i32, i32
  }
}

</mosaic_0001>

<llo_original>
// kernel: tfc_forward.1
$region0: #{tfc_forward.1}
  #allocation0 [shape = 'u32[]', space=smem, size = 0x4, offset = 0x4, fixed_abs, tag = 'smem constant byte address 0x4 - core index']
  #allocation1 [shape = 'u32[144,128]{1,0:T(1,128)}', space=vmem, size = 0x12000, scoped, tag = 'internal scratch']
  %s0 = inlined_call_operand.vmem [shape: f32[2,128,16], index: 0, kind: input, shape index: {}]
  %s1 = inlined_call_operand.vmem [shape: f32[2,128,16], index: 1, kind: input, shape index: {}]
  %s2 = inlined_call_operand.vmem [shape: f32[128,64], index: 2, kind: input, shape index: {}]
  %s3 = inlined_call_operand.vmem [shape: f32[16,64], index: 3, kind: input, shape index: {}]
  %s4 = inlined_call_operand.vmem [shape: f32[1,64], index: 4, kind: input, shape index: {}]
  %s5 = inlined_call_operand.vmem [shape: f32[16,64], index: 5, kind: input, shape index: {}]
  %s6 = inlined_call_operand.vmem [shape: f32[1,64], index: 6, kind: input, shape index: {}]
  %s7 = inlined_call_operand.vmem [shape: f32[16,64,34], index: 7, kind: input, shape index: {}]
  %s8 = inlined_call_operand.vmem [shape: f32[16,64,34], index: 8, kind: input, shape index: {}]
  %s9 = inlined_call_operand.vmem [shape: f32[1,2], index: 9, kind: input, shape index: {}]
  %s10 = inlined_call_operand.vmem [shape: f32[1,32], index: 10, kind: input, shape index: {}]
  %s11 = inlined_call_operand.vmem [shape: f32[32,32], index: 11, kind: input, shape index: {}]
  %s12 = inlined_call_operand.vmem [shape: f32[1,32], index: 12, kind: input, shape index: {}]
  %s13 = inlined_call_operand.vmem [shape: f32[32,256], index: 13, kind: input, shape index: {}]
  %s14 = inlined_call_operand.vmem [shape: f32[1,256], index: 14, kind: input, shape index: {}]
  %s15 = inlined_call_operand.vmem [shape: f32[1,256], index: 15, kind: input, shape index: {}]
  %s16 = inlined_call_operand.vmem [shape: f32[1,256], index: 16, kind: input, shape index: {}]
  %s17 = inlined_call_operand.vmem [shape: f32[256,128], index: 17, kind: input, shape index: {}]
  %s18 = inlined_call_operand.vmem [shape: f32[1,128], index: 18, kind: input, shape index: {}]
  %s19 = inlined_call_operand.vmem [shape: f32[2,2,32], index: 19, kind: output, shape index: {0}]
  %s20 = inlined_call_operand.vmem [shape: f32[2,2,128], index: 20, kind: output, shape index: {1}]
  %21 = xla_tuple %s19, %s20
  %s22 = sld [smem:[#allocation0]]
  $region117: #{tfc_forward.1} parent=0
    _
  %s24 = ssub.s32 1, %s22
  %s25 = scalar_select 0, %s24, %s22
  loop: start=0, step=1, limit=4
  $region2: #{tfc_forward.1} parent=0 // loop_pre_header
    _
  $region3: #{tfc_forward.1} parent=0 // loop_header
    %s27 = sphi 0, %s31
    %p28 = scmp.ge.s32.totalorder %s27, 4
    %s37 = sphi 0, %s39
    %s40 = sphi 0, %s37
    %s41 = sphi 0, %s40
    %s57 = sphi 0, %s41
    %s63 = sphi 0, %s65
    %s66 = sphi 0, %s63
    %s67 = sphi 0, %s66
    %s83 = sphi 0, %s67
    %s87 = sphi 0, %s87
    %s89 = sphi 0, %s87
    %s90 = sphi 0, %s89
    %s104 = sphi 0, %s90
    %s108 = sphi 0, %s108
    %s110 = sphi 0, %s108
    %s111 = sphi 0, %s110
    %s125 = sphi 0, %s111
    %s129 = sphi 0, %s129
    %s131 = sphi 0, %s129
    %s132 = sphi 0, %s131
    %s146 = sphi 0, %s132
    %s150 = sphi 0, %s150
    %s152 = sphi 0, %s150
    %s153 = sphi 0, %s152
    %s167 = sphi 0, %s153
    %s171 = sphi 0, %s171
    %s173 = sphi 0, %s171
    %s174 = sphi 0, %s173
    %s188 = sphi 0, %s174
    %s192 = sphi 0, %s192
    %s194 = sphi 0, %s192
    %s195 = sphi 0, %s194
    %s209 = sphi 0, %s195
    %s213 = sphi 0, %s213
    %s215 = sphi 0, %s213
    %s216 = sphi 0, %s215
    %s230 = sphi 0, %s216
    %s234 = sphi 0, %s234
    %s236 = sphi 0, %s234
    %s237 = sphi 0, %s236
    %s251 = sphi 0, %s237
    %s255 = sphi 0, %s255
    %s257 = sphi 0, %s255
    %s258 = sphi 0, %s257
    %s272 = sphi 0, %s258
    %s276 = sphi 0, %s276
    %s278 = sphi 0, %s276
    %s279 = sphi 0, %s278
    %s293 = sphi 0, %s279
    %s297 = sphi 0, %s297
    %s299 = sphi 0, %s297
    %s300 = sphi 0, %s299
    %s314 = sphi 0, %s300
    %s318 = sphi 0, %s318
    %s320 = sphi 0, %s318
    %s321 = sphi 0, %s320
    %s335 = sphi 0, %s321
    %s339 = sphi 0, %s339
    %s341 = sphi 0, %s339
    %s342 = sphi 0, %s341
    %s356 = sphi 0, %s342
    %s360 = sphi 0, %s360
    %s362 = sphi 0, %s360
    %s363 = sphi 0, %s362
    %s377 = sphi 0, %s363
    %s381 = sphi 0, %s381
    %s383 = sphi 0, %s381
    %s384 = sphi 0, %s383
    %s398 = sphi 0, %s384
    %s402 = sphi 0, %s402
    %s404 = sphi 0, %s402
    %s405 = sphi 0, %s404
    %s419 = sphi 0, %s405
    %s423 = sphi 0, %s423
    %s425 = sphi 0, %s423
    %s426 = sphi 0, %s425
    %s440 = sphi 0, %s426
    %s446 = sphi 0, %s448
    %s449 = sphi 0, %s446
    %s450 = sphi 0, %s449
    %s466 = sphi 0, %s450
    %s472 = sphi 0, %s474
    %s475 = sphi 0, %s472
    %s476 = sphi 0, %s475
    %s492 = sphi 0, %s476
  $region4: #{tfc_forward.1} parent=0 // loop_header_branch
    %30 = sbr.rel (%p28) target = $region8
  $region5: #{tfc_forward.1} parent=0 // loop_body
    %s32 = ssub.s32 %s27, 1
    %s33 = ssub.s32 %s27, 2
    %s34 = sadd.s32 %s27, 1
    %s35 = ssub.s32 %s27, %s34
    %p36 = scmp.eq.s32.totalorder %s35, 0
    %s38 = sadd.s32 %s37, 1
    %s39 = scalar_select %p36, %s37, %s38
    %p42 = pneg %p36
    %p43 = scmp.eq.s32.totalorder %s27, 1
    %p44 = por %p42, %p43
    %p45 = scmp.ne.s32.totalorder %s37, %s40
    %p46 = scmp.eq.s32.totalorder %s27, 0
    %p47 = por %p45, %p46
    %p48 = scmp.ne.s32.totalorder %s37, %s40
    %p49 = scmp.eq.s32.totalorder %s32, 1
    %p50 = por %p48, %p49
    %p51 = scmp.ne.s32.totalorder %s40, %s41
    %p52 = scmp.eq.s32.totalorder %s32, 0
    %p53 = por %p51, %p52
    %p54 = scmp.ne.s32.totalorder %s40, %s41
    %p55 = scmp.eq.s32.totalorder %s33, 1
    %p56 = por %p54, %p55
    %p58 = scmp.ne.s32.totalorder %s41, %s57
    %p59 = scmp.eq.s32.totalorder %s33, 0
    %p60 = por %p58, %p59
    %s61 = ssub.s32 %s27, %s34
    %p62 = scmp.eq.s32.totalorder %s61, 0
    %s64 = sadd.s32 %s63, 1
    %s65 = scalar_select %p62, %s63, %s64
    %p68 = pneg %p62
    %p69 = scmp.eq.s32.totalorder %s27, 1
    %p70 = por %p68, %p69
    %p71 = scmp.ne.s32.totalorder %s63, %s66
    %p72 = scmp.eq.s32.totalorder %s27, 0
    %p73 = por %p71, %p72
    %p74 = scmp.ne.s32.totalorder %s63, %s66
    %p75 = scmp.eq.s32.totalorder %s32, 1
    %p76 = por %p74, %p75
    %p77 = scmp.ne.s32.totalorder %s66, %s67
    %p78 = scmp.eq.s32.totalorder %s32, 0
    %p79 = por %p77, %p78
    %p80 = scmp.ne.s32.totalorder %s66, %s67
    %p81 = scmp.eq.s32.totalorder %s33, 1
    %p82 = por %p80, %p81
    %p84 = scmp.ne.s32.totalorder %s67, %s83
    %p85 = scmp.eq.s32.totalorder %s33, 0
    %p86 = por %p84, %p85
    %s88 = sadd.s32 %s87, 1
    %p91 = scmp.eq.s32.totalorder %s27, 1
    %p92 = scmp.ne.s32.totalorder %s87, %s89
    %p93 = scmp.eq.s32.totalorder %s27, 0
    %p94 = por %p92, %p93
    %p95 = scmp.ne.s32.totalorder %s87, %s89
    %p96 = scmp.eq.s32.totalorder %s32, 1
    %p97 = por %p95, %p96
    %p98 = scmp.ne.s32.totalorder %s89, %s90
    %p99 = scmp.eq.s32.totalorder %s32, 0
    %p100 = por %p98, %p99
    %p101 = scmp.ne.s32.totalorder %s89, %s90
    %p102 = scmp.eq.s32.totalorder %s33, 1
    %p103 = por %p101, %p102
    %p105 = scmp.ne.s32.totalorder %s90, %s104
    %p106 = scmp.eq.s32.totalorder %s33, 0
    %p107 = por %p105, %p106
    %s109 = sadd.s32 %s108, 1
    %p112 = scmp.eq.s32.totalorder %s27, 1
    %p113 = scmp.ne.s32.totalorder %s108, %s110
    %p114 = scmp.eq.s32.totalorder %s27, 0
    %p115 = por %p113, %p114
    %p116 = scmp.ne.s32.totalorder %s108, %s110
    %p117 = scmp.eq.s32.totalorder %s32, 1
    %p118 = por %p116, %p117
    %p119 = scmp.ne.s32.totalorder %s110, %s111
    %p120 = scmp.eq.s32.totalorder %s32, 0
    %p121 = por %p119, %p120
    %p122 = scmp.ne.s32.totalorder %s110, %s111
    %p123 = scmp.eq.s32.totalorder %s33, 1
    %p124 = por %p122, %p123
    %p126 = scmp.ne.s32.totalorder %s111, %s125
    %p127 = scmp.eq.s32.totalorder %s33, 0
    %p128 = por %p126, %p127
    %s130 = sadd.s32 %s129, 1
    %p133 = scmp.eq.s32.totalorder %s27, 1
    %p134 = scmp.ne.s32.totalorder %s129, %s131
    %p135 = scmp.eq.s32.totalorder %s27, 0
    %p136 = por %p134, %p135
    %p137 = scmp.ne.s32.totalorder %s129, %s131
    %p138 = scmp.eq.s32.totalorder %s32, 1
    %p139 = por %p137, %p138
    %p140 = scmp.ne.s32.totalorder %s131, %s132
    %p141 = scmp.eq.s32.totalorder %s32, 0
    %p142 = por %p140, %p141
    %p143 = scmp.ne.s32.totalorder %s131, %s132
    %p144 = scmp.eq.s32.totalorder %s33, 1
    %p145 = por %p143, %p144
    %p147 = scmp.ne.s32.totalorder %s132, %s146
    %p148 = scmp.eq.s32.totalorder %s33, 0
    %p149 = por %p147, %p148
    %s151 = sadd.s32 %s150, 1
    %p154 = scmp.eq.s32.totalorder %s27, 1
    %p155 = scmp.ne.s32.totalorder %s150, %s152
    %p156 = scmp.eq.s32.totalorder %s27, 0
    %p157 = por %p155, %p156
    %p158 = scmp.ne.s32.totalorder %s150, %s152
    %p159 = scmp.eq.s32.totalorder %s32, 1
    %p160 = por %p158, %p159
    %p161 = scmp.ne.s32.totalorder %s152, %s153
    %p162 = scmp.eq.s32.totalorder %s32, 0
    %p163 = por %p161, %p162
    %p164 = scmp.ne.s32.totalorder %s152, %s153
    %p165 = scmp.eq.s32.totalorder %s33, 1
    %p166 = por %p164, %p165
    %p168 = scmp.ne.s32.totalorder %s153, %s167
    %p169 = scmp.eq.s32.totalorder %s33, 0
    %p170 = por %p168, %p169
    %s172 = sadd.s32 %s171, 1
    %p175 = scmp.eq.s32.totalorder %s27, 1
    %p176 = scmp.ne.s32.totalorder %s171, %s173
    %p177 = scmp.eq.s32.totalorder %s27, 0
    %p178 = por %p176, %p177
    %p179 = scmp.ne.s32.totalorder %s171, %s173
    %p180 = scmp.eq.s32.totalorder %s32, 1
    %p181 = por %p179, %p180
    %p182 = scmp.ne.s32.totalorder %s173, %s174
    %p183 = scmp.eq.s32.totalorder %s32, 0
    %p184 = por %p182, %p183
    %p185 = scmp.ne.s32.totalorder %s173, %s174
    %p186 = scmp.eq.s32.totalorder %s33, 1
    %p187 = por %p185, %p186
    %p189 = scmp.ne.s32.totalorder %s174, %s188
    %p190 = scmp.eq.s32.totalorder %s33, 0
    %p191 = por %p189, %p190
    %s193 = sadd.s32 %s192, 1
    %p196 = scmp.eq.s32.totalorder %s27, 1
    %p197 = scmp.ne.s32.totalorder %s192, %s194
    %p198 = scmp.eq.s32.totalorder %s27, 0
    %p199 = por %p197, %p198
    %p200 = scmp.ne.s32.totalorder %s192, %s194
    %p201 = scmp.eq.s32.totalorder %s32, 1
    %p202 = por %p200, %p201
    %p203 = scmp.ne.s32.totalorder %s194, %s195
    %p204 = scmp.eq.s32.totalorder %s32, 0
    %p205 = por %p203, %p204
    %p206 = scmp.ne.s32.totalorder %s194, %s195
    %p207 = scmp.eq.s32.totalorder %s33, 1
    %p208 = por %p206, %p207
    %p210 = scmp.ne.s32.totalorder %s195, %s209
    %p211 = scmp.eq.s32.totalorder %s33, 0
    %p212 = por %p210, %p211
    %s214 = sadd.s32 %s213, 1
    %p217 = scmp.eq.s32.totalorder %s27, 1
    %p218 = scmp.ne.s32.totalorder %s213, %s215
    %p219 = scmp.eq.s32.totalorder %s27, 0
    %p220 = por %p218, %p219
    %p221 = scmp.ne.s32.totalorder %s213, %s215
    %p222 = scmp.eq.s32.totalorder %s32, 1
    %p223 = por %p221, %p222
    %p224 = scmp.ne.s32.totalorder %s215, %s216
    %p225 = scmp.eq.s32.totalorder %s32, 0
    %p226 = por %p224, %p225
    %p227 = scmp.ne.s32.totalorder %s215, %s216
    %p228 = scmp.eq.s32.totalorder %s33, 1
    %p229 = por %p227, %p228
    %p231 = scmp.ne.s32.totalorder %s216, %s230
    %p232 = scmp.eq.s32.totalorder %s33, 0
    %p233 = por %p231, %p232
    %s235 = sadd.s32 %s234, 1
    %p238 = scmp.eq.s32.totalorder %s27, 1
    %p239 = scmp.ne.s32.totalorder %s234, %s236
    %p240 = scmp.eq.s32.totalorder %s27, 0
    %p241 = por %p239, %p240
    %p242 = scmp.ne.s32.totalorder %s234, %s236
    %p243 = scmp.eq.s32.totalorder %s32, 1
    %p244 = por %p242, %p243
    %p245 = scmp.ne.s32.totalorder %s236, %s237
    %p246 = scmp.eq.s32.totalorder %s32, 0
    %p247 = por %p245, %p246
    %p248 = scmp.ne.s32.totalorder %s236, %s237
    %p249 = scmp.eq.s32.totalorder %s33, 1
    %p250 = por %p248, %p249
    %p252 = scmp.ne.s32.totalorder %s237, %s251
    %p253 = scmp.eq.s32.totalorder %s33, 0
    %p254 = por %p252, %p253
    %s256 = sadd.s32 %s255, 1
    %p259 = scmp.eq.s32.totalorder %s27, 1
    %p260 = scmp.ne.s32.totalorder %s255, %s257
    %p261 = scmp.eq.s32.totalorder %s27, 0
    %p262 = por %p260, %p261
    %p263 = scmp.ne.s32.totalorder %s255, %s257
    %p264 = scmp.eq.s32.totalorder %s32, 1
    %p265 = por %p263, %p264
    %p266 = scmp.ne.s32.totalorder %s257, %s258
    %p267 = scmp.eq.s32.totalorder %s32, 0
    %p268 = por %p266, %p267
    %p269 = scmp.ne.s32.totalorder %s257, %s258
    %p270 = scmp.eq.s32.totalorder %s33, 1
    %p271 = por %p269, %p270
    %p273 = scmp.ne.s32.totalorder %s258, %s272
    %p274 = scmp.eq.s32.totalorder %s33, 0
    %p275 = por %p273, %p274
    %s277 = sadd.s32 %s276, 1
    %p280 = scmp.eq.s32.totalorder %s27, 1
    %p281 = scmp.ne.s32.totalorder %s276, %s278
    %p282 = scmp.eq.s32.totalorder %s27, 0
    %p283 = por %p281, %p282
    %p284 = scmp.ne.s32.totalorder %s276, %s278
    %p285 = scmp.eq.s32.totalorder %s32, 1
    %p286 = por %p284, %p285
    %p287 = scmp.ne.s32.totalorder %s278, %s279
    %p288 = scmp.eq.s32.totalorder %s32, 0
    %p289 = por %p287, %p288
    %p290 = scmp.ne.s32.totalorder %s278, %s279
    %p291 = scmp.eq.s32.totalorder %s33, 1
    %p292 = por %p290, %p291
    %p294 = scmp.ne.s32.totalorder %s279, %s293
    %p295 = scmp.eq.s32.totalorder %s33, 0
    %p296 = por %p294, %p295
    %s298 = sadd.s32 %s297, 1
    %p301 = scmp.eq.s32.totalorder %s27, 1
    %p302 = scmp.ne.s32.totalorder %s297, %s299
    %p303 = scmp.eq.s32.totalorder %s27, 0
    %p304 = por %p302, %p303
    %p305 = scmp.ne.s32.totalorder %s297, %s299
    %p306 = scmp.eq.s32.totalorder %s32, 1
    %p307 = por %p305, %p306
    %p308 = scmp.ne.s32.totalorder %s299, %s300
    %p309 = scmp.eq.s32.totalorder %s32, 0
    %p310 = por %p308, %p309
    %p311 = scmp.ne.s32.totalorder %s299, %s300
    %p312 = scmp.eq.s32.totalorder %s33, 1
    %p313 = por %p311, %p312
    %p315 = scmp.ne.s32.totalorder %s300, %s314
    %p316 = scmp.eq.s32.totalorder %s33, 0
    %p317 = por %p315, %p316
    %s319 = sadd.s32 %s318, 1
    %p322 = scmp.eq.s32.totalorder %s27, 1
    %p323 = scmp.ne.s32.totalorder %s318, %s320
    %p324 = scmp.eq.s32.totalorder %s27, 0
    %p325 = por %p323, %p324
    %p326 = scmp.ne.s32.totalorder %s318, %s320
    %p327 = scmp.eq.s32.totalorder %s32, 1
    %p328 = por %p326, %p327
    %p329 = scmp.ne.s32.totalorder %s320, %s321
    %p330 = scmp.eq.s32.totalorder %s32, 0
    %p331 = por %p329, %p330
    %p332 = scmp.ne.s32.totalorder %s320, %s321
    %p333 = scmp.eq.s32.totalorder %s33, 1
    %p334 = por %p332, %p333
    %p336 = scmp.ne.s32.totalorder %s321, %s335
    %p337 = scmp.eq.s32.totalorder %s33, 0
    %p338 = por %p336, %p337
    %s340 = sadd.s32 %s339, 1
    %p343 = scmp.eq.s32.totalorder %s27, 1
    %p344 = scmp.ne.s32.totalorder %s339, %s341
    %p345 = scmp.eq.s32.totalorder %s27, 0
    %p346 = por %p344, %p345
    %p347 = scmp.ne.s32.totalorder %s339, %s341
    %p348 = scmp.eq.s32.totalorder %s32, 1
    %p349 = por %p347, %p348
    %p350 = scmp.ne.s32.totalorder %s341, %s342
    %p351 = scmp.eq.s32.totalorder %s32, 0
    %p352 = por %p350, %p351
    %p353 = scmp.ne.s32.totalorder %s341, %s342
    %p354 = scmp.eq.s32.totalorder %s33, 1
    %p355 = por %p353, %p354
    %p357 = scmp.ne.s32.totalorder %s342, %s356
    %p358 = scmp.eq.s32.totalorder %s33, 0
    %p359 = por %p357, %p358
    %s361 = sadd.s32 %s360, 1
    %p364 = scmp.eq.s32.totalorder %s27, 1
    %p365 = scmp.ne.s32.totalorder %s360, %s362
    %p366 = scmp.eq.s32.totalorder %s27, 0
    %p367 = por %p365, %p366
    %p368 = scmp.ne.s32.totalorder %s360, %s362
    %p369 = scmp.eq.s32.totalorder %s32, 1
    %p370 = por %p368, %p369
    %p371 = scmp.ne.s32.totalorder %s362, %s363
    %p372 = scmp.eq.s32.totalorder %s32, 0
    %p373 = por %p371, %p372
    %p374 = scmp.ne.s32.totalorder %s362, %s363
    %p375 = scmp.eq.s32.totalorder %s33, 1
    %p376 = por %p374, %p375
    %p378 = scmp.ne.s32.totalorder %s363, %s377
    %p379 = scmp.eq.s32.totalorder %s33, 0
    %p380 = por %p378, %p379
    %s382 = sadd.s32 %s381, 1
    %p385 = scmp.eq.s32.totalorder %s27, 1
    %p386 = scmp.ne.s32.totalorder %s381, %s383
    %p387 = scmp.eq.s32.totalorder %s27, 0
    %p388 = por %p386, %p387
    %p389 = scmp.ne.s32.totalorder %s381, %s383
    %p390 = scmp.eq.s32.totalorder %s32, 1
    %p391 = por %p389, %p390
    %p392 = scmp.ne.s32.totalorder %s383, %s384
    %p393 = scmp.eq.s32.totalorder %s32, 0
    %p394 = por %p392, %p393
    %p395 = scmp.ne.s32.totalorder %s383, %s384
    %p396 = scmp.eq.s32.totalorder %s33, 1
    %p397 = por %p395, %p396
    %p399 = scmp.ne.s32.totalorder %s384, %s398
    %p400 = scmp.eq.s32.totalorder %s33, 0
    %p401 = por %p399, %p400
    %s403 = sadd.s32 %s402, 1
    %p406 = scmp.eq.s32.totalorder %s27, 1
    %p407 = scmp.ne.s32.totalorder %s402, %s404
    %p408 = scmp.eq.s32.totalorder %s27, 0
    %p409 = por %p407, %p408
    %p410 = scmp.ne.s32.totalorder %s402, %s404
    %p411 = scmp.eq.s32.totalorder %s32, 1
    %p412 = por %p410, %p411
    %p413 = scmp.ne.s32.totalorder %s404, %s405
    %p414 = scmp.eq.s32.totalorder %s32, 0
    %p415 = por %p413, %p414
    %p416 = scmp.ne.s32.totalorder %s404, %s405
    %p417 = scmp.eq.s32.totalorder %s33, 1
    %p418 = por %p416, %p417
    %p420 = scmp.ne.s32.totalorder %s405, %s419
    %p421 = scmp.eq.s32.totalorder %s33, 0
    %p422 = por %p420, %p421
    %s424 = sadd.s32 %s423, 1
    %p427 = scmp.eq.s32.totalorder %s27, 1
    %p428 = scmp.ne.s32.totalorder %s423, %s425
    %p429 = scmp.eq.s32.totalorder %s27, 0
    %p430 = por %p428, %p429
    %p431 = scmp.ne.s32.totalorder %s423, %s425
    %p432 = scmp.eq.s32.totalorder %s32, 1
    %p433 = por %p431, %p432
    %p434 = scmp.ne.s32.totalorder %s425, %s426
    %p435 = scmp.eq.s32.totalorder %s32, 0
    %p436 = por %p434, %p435
    %p437 = scmp.ne.s32.totalorder %s425, %s426
    %p438 = scmp.eq.s32.totalorder %s33, 1
    %p439 = por %p437, %p438
    %p441 = scmp.ne.s32.totalorder %s426, %s440
    %p442 = scmp.eq.s32.totalorder %s33, 0
    %p443 = por %p441, %p442
    %s444 = ssub.s32 %s27, %s34
    %p445 = scmp.eq.s32.totalorder %s444, 0
    %s447 = sadd.s32 %s446, 1
    %s448 = scalar_select %p445, %s446, %s447
    %p451 = pneg %p445
    %p452 = scmp.eq.s32.totalorder %s27, 1
    %p453 = por %p451, %p452
    %p454 = scmp.ne.s32.totalorder %s446, %s449
    %p455 = scmp.eq.s32.totalorder %s27, 0
    %p456 = por %p454, %p455
    %p457 = scmp.ne.s32.totalorder %s446, %s449
    %p458 = scmp.eq.s32.totalorder %s32, 1
    %p459 = por %p457, %p458
    %p460 = scmp.ne.s32.totalorder %s449, %s450
    %p461 = scmp.eq.s32.totalorder %s32, 0
    %p462 = por %p460, %p461
    %p463 = scmp.ne.s32.totalorder %s449, %s450
    %p464 = scmp.eq.s32.totalorder %s33, 1
    %p465 = por %p463, %p464
    %p467 = scmp.ne.s32.totalorder %s450, %s466
    %p468 = scmp.eq.s32.totalorder %s33, 0
    %p469 = por %p467, %p468
    %s470 = ssub.s32 %s27, %s34
    %p471 = scmp.eq.s32.totalorder %s470, 0
    %s473 = sadd.s32 %s472, 1
    %s474 = scalar_select %p471, %s472, %s473
    %p477 = pneg %p471
    %p478 = scmp.eq.s32.totalorder %s27, 1
    %p479 = por %p477, %p478
    %p480 = scmp.ne.s32.totalorder %s472, %s475
    %p481 = scmp.eq.s32.totalorder %s27, 0
    %p482 = por %p480, %p481
    %p483 = scmp.ne.s32.totalorder %s472, %s475
    %p484 = scmp.eq.s32.totalorder %s32, 1
    %p485 = por %p483, %p484
    %p486 = scmp.ne.s32.totalorder %s475, %s476
    %p487 = scmp.eq.s32.totalorder %s32, 0
    %p488 = por %p486, %p487
    %p489 = scmp.ne.s32.totalorder %s475, %s476
    %p490 = scmp.eq.s32.totalorder %s33, 1
    %p491 = por %p489, %p490
    %p493 = scmp.ne.s32.totalorder %s476, %s492
    %p494 = scmp.eq.s32.totalorder %s33, 0
    %p495 = por %p493, %p494
    %p496 = scmp.le.s32.totalorder 1, %s27
    %p497 = scmp.lt.s32.totalorder %s27, 3
    %p498 = pnand %p496, %p497
    %p499 = pneg %p498
    // Predicated region
    $region9: #{tfc_forward.1} parent=5 // pred_check
      _
    $region10: #{tfc_forward.1} parent=5 // pred_check_branch
      %501 = sbr.rel (%p498) target = $region12
    $region11: #{tfc_forward.1} parent=5 // pred_region
      %s502 = ssub.s32 %s27, 1
      // Predicated region
      $region13: #{tfc_forward.1} parent=11 // pred_check
        %p503 = pneg %p100
      $region14: #{tfc_forward.1} parent=11 // pred_check_branch
        %505 = sbr.rel (%p503) target = $region16
      $region15: #{tfc_forward.1} parent=11 // pred_region
        _
      $region16: #{tfc_forward.1} parent=11 // pred_fallthru
        _
      // Predicated region
      $region17: #{tfc_forward.1} parent=11 // pred_check
        %p506 = pneg %p121
      $region18: #{tfc_forward.1} parent=11 // pred_check_branch
        %508 = sbr.rel (%p506) target = $region20
      $region19: #{tfc_forward.1} parent=11 // pred_region
        _
      $region20: #{tfc_forward.1} parent=11 // pred_fallthru
        _
      // Predicated region
      $region21: #{tfc_forward.1} parent=11 // pred_check
        %p509 = pneg %p142
      $region22: #{tfc_forward.1} parent=11 // pred_check_branch
        %511 = sbr.rel (%p509) target = $region24
      $region23: #{tfc_forward.1} parent=11 // pred_region
        _
      $region24: #{tfc_forward.1} parent=11 // pred_fallthru
        _
      // Predicated region
      $region25: #{tfc_forward.1} parent=11 // pred_check
        %p512 = pneg %p163
      $region26: #{tfc_forward.1} parent=11 // pred_check_branch
        %514 = sbr.rel (%p512) target = $region28
      $region27: #{tfc_forward.1} parent=11 // pred_region
        _
      $region28: #{tfc_forward.1} parent=11 // pred_fallthru
        _
      // Predicated region
      $region29: #{tfc_forward.1} parent=11 // pred_check
        %p515 = pneg %p184
      $region30: #{tfc_forward.1} parent=11 // pred_check_branch
        %517 = sbr.rel (%p515) target = $region32
      $region31: #{tfc_forward.1} parent=11 // pred_region
        _
      $region32: #{tfc_forward.1} parent=11 // pred_fallthru
        _
      // Predicated region
      $region33: #{tfc_forward.1} parent=11 // pred_check
        %p518 = pneg %p205
      $region34: #{tfc_forward.1} parent=11 // pred_check_branch
        %520 = sbr.rel (%p518) target = $region36
      $region35: #{tfc_forward.1} parent=11 // pred_region
        _
      $region36: #{tfc_forward.1} parent=11 // pred_fallthru
        _
      // Predicated region
      $region37: #{tfc_forward.1} parent=11 // pred_check
        %p521 = pneg %p226
      $region38: #{tfc_forward.1} parent=11 // pred_check_branch
        %523 = sbr.rel (%p521) target = $region40
      $region39: #{tfc_forward.1} parent=11 // pred_region
        _
      $region40: #{tfc_forward.1} parent=11 // pred_fallthru
        _
      // Predicated region
      $region41: #{tfc_forward.1} parent=11 // pred_check
        %p524 = pneg %p247
      $region42: #{tfc_forward.1} parent=11 // pred_check_branch
        %526 = sbr.rel (%p524) target = $region44
      $region43: #{tfc_forward.1} parent=11 // pred_region
        _
      $region44: #{tfc_forward.1} parent=11 // pred_fallthru
        _
      // Predicated region
      $region45: #{tfc_forward.1} parent=11 // pred_check
        %p527 = pneg %p268
      $region46: #{tfc_forward.1} parent=11 // pred_check_branch
        %529 = sbr.rel (%p527) target = $region48
      $region47: #{tfc_forward.1} parent=11 // pred_region
        _
      $region48: #{tfc_forward.1} parent=11 // pred_fallthru
        _
      // Predicated region
      $region49: #{tfc_forward.1} parent=11 // pred_check
        %p530 = pneg %p289
      $region50: #{tfc_forward.1} parent=11 // pred_check_branch
        %532 = sbr.rel (%p530) target = $region52
      $region51: #{tfc_forward.1} parent=11 // pred_region
        _
      $region52: #{tfc_forward.1} parent=11 // pred_fallthru
        _
      // Predicated region
      $region53: #{tfc_forward.1} parent=11 // pred_check
        %p533 = pneg %p310
      $region54: #{tfc_forward.1} parent=11 // pred_check_branch
        %535 = sbr.rel (%p533) target = $region56
      $region55: #{tfc_forward.1} parent=11 // pred_region
        _
      $region56: #{tfc_forward.1} parent=11 // pred_fallthru
        _
      // Predicated region
      $region57: #{tfc_forward.1} parent=11 // pred_check
        %p536 = pneg %p331
      $region58: #{tfc_forward.1} parent=11 // pred_check_branch
        %538 = sbr.rel (%p536) target = $region60
      $region59: #{tfc_forward.1} parent=11 // pred_region
        _
      $region60: #{tfc_forward.1} parent=11 // pred_fallthru
        _
      // Predicated region
      $region61: #{tfc_forward.1} parent=11 // pred_check
        %p539 = pneg %p352
      $region62: #{tfc_forward.1} parent=11 // pred_check_branch
        %541 = sbr.rel (%p539) target = $region64
      $region63: #{tfc_forward.1} parent=11 // pred_region
        _
      $region64: #{tfc_forward.1} parent=11 // pred_fallthru
        _
      // Predicated region
      $region65: #{tfc_forward.1} parent=11 // pred_check
        %p542 = pneg %p373
      $region66: #{tfc_forward.1} parent=11 // pred_check_branch
        %544 = sbr.rel (%p542) target = $region68
      $region67: #{tfc_forward.1} parent=11 // pred_region
        _
      $region68: #{tfc_forward.1} parent=11 // pred_fallthru
        _
      // Predicated region
      $region69: #{tfc_forward.1} parent=11 // pred_check
        %p545 = pneg %p394
      $region70: #{tfc_forward.1} parent=11 // pred_check_branch
        %547 = sbr.rel (%p545) target = $region72
      $region71: #{tfc_forward.1} parent=11 // pred_region
        _
      $region72: #{tfc_forward.1} parent=11 // pred_fallthru
        _
      // Predicated region
      $region73: #{tfc_forward.1} parent=11 // pred_check
        %p548 = pneg %p415
      $region74: #{tfc_forward.1} parent=11 // pred_check_branch
        %550 = sbr.rel (%p548) target = $region76
      $region75: #{tfc_forward.1} parent=11 // pred_region
        _
      $region76: #{tfc_forward.1} parent=11 // pred_fallthru
        _
      // Predicated region
      $region77: #{tfc_forward.1} parent=11 // pred_check
        %p551 = pneg %p436
      $region78: #{tfc_forward.1} parent=11 // pred_check_branch
        %553 = sbr.rel (%p551) target = $region80
      $region79: #{tfc_forward.1} parent=11 // pred_region
        _
      $region80: #{tfc_forward.1} parent=11 // pred_fallthru
        _
    $region12: #{tfc_forward.1} parent=5 // pred_fallthru
      _
    %p554 = scmp.lt.s32.totalorder %s27, 2
    // Predicated region
    $region81: #{tfc_forward.1} parent=5 // pred_check
      %p555 = pneg %p554
    $region82: #{tfc_forward.1} parent=5 // pred_check_branch
      %557 = sbr.rel (%p555) target = $region84
    $region83: #{tfc_forward.1} parent=5 // pred_region
      // Predicated region
      $region85: #{tfc_forward.1} parent=83 // pred_check
        %p558 = pneg %p47
      $region86: #{tfc_forward.1} parent=83 // pred_check_branch
        %560 = sbr.rel (%p558) target = $region88
      $region87: #{tfc_forward.1} parent=83 // pred_region
        %p561 = scmp.lt.s32.totalorder %s27, 1
        %s562 = scalar_select %p561, %s27, 1
        %s563 = smul.addr %s562, 16
        %s564 = smul.addr %s563, 8
        %s565 = scalar_lea.vmem %s0, %s564
      $region88: #{tfc_forward.1} parent=83 // pred_fallthru
        _
      // Predicated region
      $region89: #{tfc_forward.1} parent=83 // pred_check
        %p566 = pneg %p73
      $region90: #{tfc_forward.1} parent=83 // pred_check_branch
        %568 = sbr.rel (%p566) target = $region92
      $region91: #{tfc_forward.1} parent=83 // pred_region
        %p569 = scmp.lt.s32.totalorder %s27, 1
        %s570 = scalar_select %p569, %s27, 1
        %s571 = smul.addr %s570, 16
        %s572 = smul.addr %s571, 8
        %s573 = scalar_lea.vmem %s1, %s572
      $region92: #{tfc_forward.1} parent=83 // pred_fallthru
        _
    $region84: #{tfc_forward.1} parent=5 // pred_fallthru
      _
    %p574 = scmp.le.s32.totalorder 1, %s27
    %p575 = scmp.lt.s32.totalorder %s27, 3
    %p576 = pnand %p574, %p575
    %p577 = pneg %p576
    // Predicated region
    $region93: #{tfc_forward.1} parent=5 // pred_check
      _
    $region94: #{tfc_forward.1} parent=5 // pred_check_branch
      %579 = sbr.rel (%p576) target = $region96
    $region95: #{tfc_forward.1} parent=5 // pred_region
      %s580 = ssub.s32 %s27, 1
      %p581 = scmp.lt.s32.totalorder %s32, 1
      %s582 = scalar_select %p581, %s32, 1
      %s583 = smul.addr %s582, 16
      %s584 = smul.addr %s583, 8
      %s585 = scalar_lea.vmem %s0, %s584
      %p586 = pneg %p53
      %p587 = pneg %p50
      %p588 = scmp.lt.s32.totalorder %s32, 1
      %s589 = scalar_select %p588, %s32, 1
      %s590 = smul.addr %s589, 16
      %s591 = smul.addr %s590, 8
      %s592 = scalar_lea.vmem %s1, %s591
      %p593 = pneg %p79
      %p594 = pneg %p76
      %p595 = pneg %p100
      %p596 = pneg %p97
      %p597 = pneg %p121
      %p598 = pneg %p118
      %p599 = pneg %p142
      %p600 = pneg %p139
      %p601 = pneg %p163
      %p602 = pneg %p160
      %p603 = pneg %p184
      %p604 = pneg %p181
      %p605 = pneg %p205
      %p606 = pneg %p202
      %p607 = pneg %p226
      %p608 = pneg %p223
      %p609 = pneg %p247
      %p610 = pneg %p244
      %p611 = pneg %p268
      %p612 = pneg %p265
      %p613 = pneg %p289
      %p614 = pneg %p286
      %p615 = pneg %p310
      %p616 = pneg %p307
      %p617 = pneg %p331
      %p618 = pneg %p328
      %p619 = pneg %p352
      %p620 = pneg %p349
      %p621 = pneg %p373
      %p622 = pneg %p370
      %p623 = pneg %p394
      %p624 = pneg %p391
      %p625 = pneg %p415
      %p626 = pneg %p412
      %p627 = pneg %p436
      %p628 = pneg %p433
      %p629 = pneg %p462
      %p630 = pneg %p459
      %p631 = scmp.lt.s32.totalorder %s32, 1
      %s632 = scalar_select %p631, %s32, 1
      %s633 = smul.addr %s632, 2
      %s634 = scalar_lea.vmem %s19, %s633
      %p635 = pneg %p488
      %p636 = pneg %p485
      %p637 = scmp.lt.s32.totalorder %s32, 1
      %s638 = scalar_select %p637, %s32, 1
      %s639 = smul.addr %s638, 2
      %s640 = scalar_lea.vmem %s20, %s639
      %p641 = scmp.lt.s32.totalorder %s32, 1
      %s642 = scalar_select %p641, %s32, 1
      %s643 = smul.addr %s642, 16
      %s644 = smul.addr %s643, 8
      %s645 = scalar_lea.vmem %s0, %s644
      %p646 = scmp.lt.s32.totalorder %s32, 1
      %s647 = scalar_select %p646, %s32, 1
      %s648 = smul.addr %s647, 16
      %s649 = smul.addr %s648, 8
      %s650 = scalar_lea.vmem %s1, %s649
      %p651 = scmp.lt.s32.totalorder %s32, 1
      %s652 = scalar_select %p651, %s32, 1
      %s653 = smul.addr %s652, 2
      %s654 = scalar_lea.vmem %s19, %s653
      %p655 = scmp.lt.s32.totalorder %s32, 1
      %s656 = scalar_select %p655, %s32, 1
      %s657 = smul.addr %s656, 2
      %s658 = scalar_lea.vmem %s20, %s657
      %v659 = vld [vmem:[%s645] sm:$0xff]
      %v660 = vld [vmem:[%s645 + $0x8] sm:$0xff]
      %v661 = vld [vmem:[%s645 + $0x10] sm:$0xff]
      %v662 = vld [vmem:[%s645 + $0x18] sm:$0xff]
      %v663 = vld [vmem:[%s645 + $0x20] sm:$0xff]
      %v664 = vld [vmem:[%s645 + $0x28] sm:$0xff]
      %v665 = vld [vmem:[%s645 + $0x30] sm:$0xff]
      %v666 = vld [vmem:[%s645 + $0x38] sm:$0xff]
      %v667 = vld [vmem:[%s645 + $0x40] sm:$0xff]
      %v668 = vld [vmem:[%s645 + $0x48] sm:$0xff]
      %v669 = vld [vmem:[%s645 + $0x50] sm:$0xff]
      %v670 = vld [vmem:[%s645 + $0x58] sm:$0xff]
      %v671 = vld [vmem:[%s645 + $0x60] sm:$0xff]
      %v672 = vld [vmem:[%s645 + $0x68] sm:$0xff]
      %v673 = vld [vmem:[%s645 + $0x70] sm:$0xff]
      %v674 = vld [vmem:[%s645 + $0x78] sm:$0xff]
      %v675 = vld [vmem:[%s3] sm:$0xff]
      %v676 = vld [vmem:[%s3 + $0x8] sm:$0xff]
      %v677 = vld [vmem:[%s4] sm:$0x1]
      %v679 = vlaneseq
      %v680 = vshrl.u32 %v679, 7
      %v681 = vsub.s32 0, %v680
      %v682 = vrot.slane %v677, %v681
      %vm684 = vcmask 130048
      %v686 = vsel %vm684, %v659, 0
      %v689 = vsel %vm684, %v660, 0
      %v692 = vsel %vm684, %v661, 0
      %v695 = vsel %vm684, %v662, 0
      %v698 = vsel %vm684, %v663, 0
      %v701 = vsel %vm684, %v664, 0
      %v704 = vsel %vm684, %v665, 0
      %v707 = vsel %vm684, %v666, 0
      %v710 = vsel %vm684, %v667, 0
      %v713 = vsel %vm684, %v668, 0
      %v716 = vsel %vm684, %v669, 0
      %v719 = vsel %vm684, %v670, 0
      %v722 = vsel %vm684, %v671, 0
      %v725 = vsel %vm684, %v672, 0
      %v728 = vsel %vm684, %v673, 0
      %v731 = vsel %vm684, %v674, 0
      %733 = vmatprep.subr.mxu0 0.0
      %734 = vmatpush1.msra.mxu0 %v675
      %735 = vmatprep.subr.mxu0 0.0
      %736 = vmatpush1.msra.mxu0 %v676
      %737 = vmatprep.subr.mxu0 0.0
      %738 = vmatpush1.msra.mxu0 0.0
      %739 = vmatprep.subr.mxu0 0.0
      %740 = vmatpush1.msra.mxu0 0.0
      %741 = vmatprep.subr.mxu0 0.0
      %742 = vmatpush1.msra.mxu0 0.0
      %743 = vmatprep.subr.mxu0 0.0
      %744 = vmatpush1.msra.mxu0 0.0
      %745 = vmatprep.subr.mxu0 0.0
      %746 = vmatpush1.msra.mxu0 0.0
      %747 = vmatprep.subr.mxu0 0.0
      %748 = vmatpush1.msra.mxu0 0.0
      %749 = vmatprep.subr.mxu0 0.0
      %750 = vmatpush1.msra.mxu0 0.0
      %751 = vmatprep.subr.mxu0 0.0
      %752 = vmatpush1.msra.mxu0 0.0
      %753 = vmatprep.subr.mxu0 0.0
      %754 = vmatpush1.msra.mxu0 0.0
      %755 = vmatprep.subr.mxu0 0.0
      %756 = vmatpush1.msra.mxu0 0.0
      %757 = vmatprep.subr.mxu0 0.0
      %758 = vmatpush1.msra.mxu0 0.0
      %759 = vmatprep.subr.mxu0 0.0
      %760 = vmatpush1.msra.mxu0 0.0
      %761 = vmatprep.subr.mxu0 0.0
      %762 = vmatpush1.msra.mxu0 0.0
      %763 = vmatprep.subr.mxu0 0.0
      %764 = vmatpush1.msra.mxu0 0.0
      %765 = vmatprep.subr.mxu0 0.0
      %766 = vmatpush1.msra.mxu0 0.0
      %767 = vmatprep.subr.mxu0 0.0
      %768 = vmatpush1.msra.mxu0 0.0
      %769 = vmatprep.subr.mxu0 0.0
      %770 = vmatpush1.msra.mxu0 0.0
      %771 = vmatprep.subr.mxu0 0.0
      %772 = vmatpush1.msra.mxu0 0.0
      %773 = vmatprep.subr.mxu0 0.0
      %774 = vmatpush1.msra.mxu0 0.0
      %775 = vmatprep.subr.mxu0 0.0
      %776 = vmatpush1.msra.mxu0 0.0
      %777 = vmatprep.subr.mxu0 0.0
      %778 = vmatpush1.msra.mxu0 0.0
      %779 = vmatprep.subr.mxu0 0.0
      %780 = vmatpush1.msra.mxu0 0.0
      %781 = vmatprep.subr.mxu0 0.0
      %782 = vmatpush1.msra.mxu0 0.0
      %783 = vmatprep.subr.mxu0 0.0
      %784 = vmatpush1.msra.mxu0 0.0
      %785 = vmatprep.subr.mxu0 0.0
      %786 = vmatpush1.msra.mxu0 0.0
      %787 = vmatprep.subr.mxu0 0.0
      %788 = vmatpush1.msra.mxu0 0.0
      %789 = vmatprep.subr.mxu0 0.0
      %790 = vmatpush1.msra.mxu0 0.0
      %791 = vmatprep.subr.mxu0 0.0
      %792 = vmatpush1.msra.mxu0 0.0
      %793 = vmatprep.subr.mxu0 0.0
      %794 = vmatpush1.msra.mxu0 0.0
      %795 = vmatprep.subr.mxu0 0.0
      %796 = vmatpush1.msra.mxu0 0.0
      %797 = vmatprep.mubr.f32.mxu0 0.0
      %798 = vmatmul.mubr.f32.gmra.mrb[0].mxu0 %v686
      %v799 = vpop.f32.mrb[0].mxu0
      %v800 = vadd.f32 %v682, %v799
      %v801 = vpop.f32.mrb[0].mxu0
      %802 = vmatprep.mubr.f32.mxu0 0.0
      %803 = vmatmul.mubr.f32.gmra.mrb[0].mxu0 %v689
      %v804 = vpop.f32.mrb[0].mxu0
      %v805 = vadd.f32 %v682, %v804
      %v806 = vpop.f32.mrb[0].mxu0
      %807 = vmatprep.mubr.f32.mxu0 0.0
      %808 = vmatmul.mubr.f32.gmra.mrb[0].mxu0 %v692
      %v809 = vpop.f32.mrb[0].mxu0
      %v810 = vadd.f32 %v682, %v809
      %v811 = vpop.f32.mrb[0].mxu0
      %812 = vmatprep.mubr.f32.mxu0 0.0
      %813 = vmatmul.mubr.f32.gmra.mrb[0].mxu0 %v695
      %v814 = vpop.f32.mrb[0].mxu0
      %v815 = vadd.f32 %v682, %v814
      %v816 = vpop.f32.mrb[0].mxu0
      %817 = vmatprep.mubr.f32.mxu0 0.0
      %818 = vmatmul.mubr.f32.gmra.mrb[0].mxu0 %v698
      %v819 = vpop.f32.mrb[0].mxu0
      %v820 = vadd.f32 %v682, %v819
      %v821 = vpop.f32.mrb[0].mxu0
      %822 = vmatprep.mubr.f32.mxu0 0.0
      %823 = vmatmul.mubr.f32.gmra.mrb[0].mxu0 %v701
      %v824 = vpop.f32.mrb[0].mxu0
      %v825 = vadd.f32 %v682, %v824
      %v826 = vpop.f32.mrb[0].mxu0
      %827 = vmatprep.mubr.f32.mxu0 0.0
      %828 = vmatmul.mubr.f32.gmra.mrb[0].mxu0 %v704
      %v829 = vpop.f32.mrb[0].mxu0
      %v830 = vadd.f32 %v682, %v829
      %v831 = vpop.f32.mrb[0].mxu0
      %832 = vmatprep.mubr.f32.mxu0 0.0
      %833 = vmatmul.mubr.f32.gmra.mrb[0].mxu0 %v707
      %v834 = vpop.f32.mrb[0].mxu0
      %v835 = vadd.f32 %v682, %v834
      %v836 = vpop.f32.mrb[0].mxu0
      %837 = vmatprep.mubr.f32.mxu0 0.0
      %838 = vmatmul.mubr.f32.gmra.mrb[0].mxu0 %v710
      %v839 = vpop.f32.mrb[0].mxu0
      %v840 = vadd.f32 %v682, %v839
      %v841 = vpop.f32.mrb[0].mxu0
      %842 = vmatprep.mubr.f32.mxu0 0.0
      %843 = vmatmul.mubr.f32.gmra.mrb[0].mxu0 %v713
      %v844 = vpop.f32.mrb[0].mxu0
      %v845 = vadd.f32 %v682, %v844
      %v846 = vpop.f32.mrb[0].mxu0
      %847 = vmatprep.mubr.f32.mxu0 0.0
      %848 = vmatmul.mubr.f32.gmra.mrb[0].mxu0 %v716
      %v849 = vpop.f32.mrb[0].mxu0
      %v850 = vadd.f32 %v682, %v849
      %v851 = vpop.f32.mrb[0].mxu0
      %852 = vmatprep.mubr.f32.mxu0 0.0
      %853 = vmatmul.mubr.f32.gmra.mrb[0].mxu0 %v719
      %v854 = vpop.f32.mrb[0].mxu0
      %v855 = vadd.f32 %v682, %v854
      %v856 = vpop.f32.mrb[0].mxu0
      %857 = vmatprep.mubr.f32.mxu0 0.0
      %858 = vmatmul.mubr.f32.gmra.mrb[0].mxu0 %v722
      %v859 = vpop.f32.mrb[0].mxu0
      %v860 = vadd.f32 %v682, %v859
      %v861 = vpop.f32.mrb[0].mxu0
      %862 = vmatprep.mubr.f32.mxu0 0.0
      %863 = vmatmul.mubr.f32.gmra.mrb[0].mxu0 %v725
      %v864 = vpop.f32.mrb[0].mxu0
      %v865 = vadd.f32 %v682, %v864
      %v866 = vpop.f32.mrb[0].mxu0
      %867 = vmatprep.mubr.f32.mxu0 0.0
      %868 = vmatmul.mubr.f32.gmra.mrb[0].mxu0 %v728
      %v869 = vpop.f32.mrb[0].mxu0
      %v870 = vadd.f32 %v682, %v869
      %v871 = vpop.f32.mrb[0].mxu0
      %872 = vmatprep.mubr.f32.mxu0 0.0
      %873 = vmatmul.mubr.f32.gmra.mrb[0].mxu0 %v731
      %v874 = vpop.f32.mrb[0].mxu0
      %v875 = vadd.f32 %v682, %v874
      %v876 = vpop.f32.mrb[0].mxu0
      %877 = vdwg.mxu0
      %v878 = vld [vmem:[%s2] sm:$0xff]
      %v879 = vld [vmem:[%s2 + $0x8] sm:$0xff]
      %v880 = vld [vmem:[%s2 + $0x10] sm:$0xff]
      %v881 = vld [vmem:[%s2 + $0x18] sm:$0xff]
      %v882 = vld [vmem:[%s2 + $0x20] sm:$0xff]
      %v883 = vld [vmem:[%s2 + $0x28] sm:$0xff]
      %v884 = vld [vmem:[%s2 + $0x30] sm:$0xff]
      %v885 = vld [vmem:[%s2 + $0x38] sm:$0xff]
      %v886 = vld [vmem:[%s2 + $0x40] sm:$0xff]
      %v887 = vld [vmem:[%s2 + $0x48] sm:$0xff]
      %v888 = vld [vmem:[%s2 + $0x50] sm:$0xff]
      %v889 = vld [vmem:[%s2 + $0x58] sm:$0xff]
      %v890 = vld [vmem:[%s2 + $0x60] sm:$0xff]
      %v891 = vld [vmem:[%s2 + $0x68] sm:$0xff]
      %v892 = vld [vmem:[%s2 + $0x70] sm:$0xff]
      %v893 = vld [vmem:[%s2 + $0x78] sm:$0xff]
      %v894 = vadd.f32 %v800, %v878
      %v895 = vadd.f32 %v805, %v879
      %v896 = vadd.f32 %v810, %v880
      %v897 = vadd.f32 %v815, %v881
      %v898 = vadd.f32 %v820, %v882
      %v899 = vadd.f32 %v825, %v883
      %v900 = vadd.f32 %v830, %v884
      %v901 = vadd.f32 %v835, %v885
      %v902 = vadd.f32 %v840, %v886
      %v903 = vadd.f32 %v845, %v887
      %v904 = vadd.f32 %v850, %v888
      %v905 = vadd.f32 %v855, %v889
      %v906 = vadd.f32 %v860, %v890
      %v907 = vadd.f32 %v865, %v891
      %v908 = vadd.f32 %v870, %v892
      %v909 = vadd.f32 %v875, %v893
      %v910 = vld [vmem:[%s650] sm:$0xff]
      %v911 = vld [vmem:[%s650 + $0x8] sm:$0xff]
      %v912 = vld [vmem:[%s650 + $0x10] sm:$0xff]
      %v913 = vld [vmem:[%s650 + $0x18] sm:$0xff]
      %v914 = vld [vmem:[%s650 + $0x20] sm:$0xff]
      %v915 = vld [vmem:[%s650 + $0x28] sm:$0xff]
      %v916 = vld [vmem:[%s650 + $0x30] sm:$0xff]
      %v917 = vld [vmem:[%s650 + $0x38] sm:$0xff]
      %v918 = vld [vmem:[%s650 + $0x40] sm:$0xff]
      %v919 = vld [vmem:[%s650 + $0x48] sm:$0xff]
      %v920 = vld [vmem:[%s650 + $0x50] sm:$0xff]
      %v921 = vld [vmem:[%s650 + $0x58] sm:$0xff]
      %v922 = vld [vmem:[%s650 + $0x60] sm:$0xff]
      %v923 = vld [vmem:[%s650 + $0x68] sm:$0xff]
      %v924 = vld [vmem:[%s650 + $0x70] sm:$0xff]
      %v925 = vld [vmem:[%s650 + $0x78] sm:$0xff]
      %v926 = vld [vmem:[%s5] sm:$0xff]
      %v927 = vld [vmem:[%s5 + $0x8] sm:$0xff]
      %v928 = vld [vmem:[%s6] sm:$0x1]
      %v930 = vlaneseq
      %v931 = vshrl.u32 %v930, 7
      %v932 = vsub.s32 0, %v931
      %v933 = vrot.slane %v928, %v932
      %v936 = vsel %vm684, %v910, 0
      %v939 = vsel %vm684, %v911, 0
      %v942 = vsel %vm684, %v912, 0
      %v945 = vsel %vm684, %v913, 0
      %v948 = vsel %vm684, %v914, 0
      %v951 = vsel %vm684, %v915, 0
      %v954 = vsel %vm684, %v916, 0
      %v957 = vsel %vm684, %v917, 0
      %v960 = vsel %vm684, %v918, 0
      %v963 = vsel %vm684, %v919, 0
      %v966 = vsel %vm684, %v920, 0
      %v969 = vsel %vm684, %v921, 0
      %v972 = vsel %vm684, %v922, 0
      %v975 = vsel %vm684, %v923, 0
      %v978 = vsel %vm684, %v924, 0
      %v981 = vsel %vm684, %v925, 0
      %983 = vmatprep.subr.mxu0 0.0
      %984 = vmatpush1.msra.mxu0 %v926
      %985 = vmatprep.subr.mxu0 0.0
      %986 = vmatpush1.msra.mxu0 %v927
      %987 = vmatprep.subr.mxu0 0.0
      %988 = vmatpush1.msra.mxu0 0.0
      %989 = vmatprep.subr.mxu0 0.0
      %990 = vmatpush1.msra.mxu0 0.0
      %991 = vmatprep.subr.mxu0 0.0
      %992 = vmatpush1.msra.mxu0 0.0
      %993 = vmatprep.subr.mxu0 0.0
      %994 = vmatpush1.msra.mxu0 0.0
      %995 = vmatprep.subr.mxu0 0.0
      %996 = vmatpush1.msra.mxu0 0.0
      %997 = vmatprep.subr.mxu0 0.0
      %998 = vmatpush1.msra.mxu0 0.0
      %999 = vmatprep.subr.mxu0 0.0
      %1000 = vmatpush1.msra.mxu0 0.0
      %1001 = vmatprep.subr.mxu0 0.0
      %1002 = vmatpush1.msra.mxu0 0.0
      %1003 = vmatprep.subr.mxu0 0.0
      %1004 = vmatpush1.msra.mxu0 0.0
      %1005 = vmatprep.subr.mxu0 0.0
      %1006 = vmatpush1.msra.mxu0 0.0
      %1007 = vmatprep.subr.mxu0 0.0
      %1008 = vmatpush1.msra.mxu0 0.0
      %1009 = vmatprep.subr.mxu0 0.0
      %1010 = vmatpush1.msra.mxu0 0.0
      %1011 = vmatprep.subr.mxu0 0.0
      %1012 = vmatpush1.msra.mxu0 0.0
      %1013 = vmatprep.subr.mxu0 0.0
      %1014 = vmatpush1.msra.mxu0 0.0
      %1015 = vmatprep.subr.mxu0 0.0
      %1016 = vmatpush1.msra.mxu0 0.0
      %1017 = vmatprep.subr.mxu0 0.0
      %1018 = vmatpush1.msra.mxu0 0.0
      %1019 = vmatprep.subr.mxu0 0.0
      %1020 = vmatpush1.msra.mxu0 0.0
      %1021 = vmatprep.subr.mxu0 0.0
      %1022 = vmatpush1.msra.mxu0 0.0
      %1023 = vmatprep.subr.mxu0 0.0
      %1024 = vmatpush1.msra.mxu0 0.0
      %1025 = vmatprep.subr.mxu0 0.0
      %1026 = vmatpush1.msra.mxu0 0.0
      %1027 = vmatprep.subr.mxu0 0.0
      %1028 = vmatpush1.msra.mxu0 0.0
      %1029 = vmatprep.subr.mxu0 0.0
      %1030 = vmatpush1.msra.mxu0 0.0
      %1031 = vmatprep.subr.mxu0 0.0
      %1032 = vmatpush1.msra.mxu0 0.0
      %1033 = vmatprep.subr.mxu0 0.0
      %1034 = vmatpush1.msra.mxu0 0.0
      %1035 = vmatprep.subr.mxu0 0.0
      %1036 = vmatpush1.msra.mxu0 0.0
      %1037 = vmatprep.subr.mxu0 0.0
      %1038 = vmatpush1.msra.mxu0 0.0
      %1039 = vmatprep.subr.mxu0 0.0
      %1040 = vmatpush1.msra.mxu0 0.0
      %1041 = vmatprep.subr.mxu0 0.0
      %1042 = vmatpush1.msra.mxu0 0.0
      %1043 = vmatprep.subr.mxu0 0.0
      %1044 = vmatpush1.msra.mxu0 0.0
      %1045 = vmatprep.subr.mxu0 0.0
      %1046 = vmatpush1.msra.mxu0 0.0
      %1047 = vmatprep.mubr.f32.mxu0 0.0
      %1048 = vmatmul.mubr.f32.gmra.mrb[0].mxu0 %v936
      %v1049 = vpop.f32.mrb[0].mxu0
      %v1050 = vadd.f32 %v933, %v1049
      %v1051 = vpop.f32.mrb[0].mxu0
      %1052 = vmatprep.mubr.f32.mxu0 0.0
      %1053 = vmatmul.mubr.f32.gmra.mrb[0].mxu0 %v939
      %v1054 = vpop.f32.mrb[0].mxu0
      %v1055 = vadd.f32 %v933, %v1054
      %v1056 = vpop.f32.mrb[0].mxu0
      %1057 = vmatprep.mubr.f32.mxu0 0.0
      %1058 = vmatmul.mubr.f32.gmra.mrb[0].mxu0 %v942
      %v1059 = vpop.f32.mrb[0].mxu0
      %v1060 = vadd.f32 %v933, %v1059
      %v1061 = vpop.f32.mrb[0].mxu0
      %1062 = vmatprep.mubr.f32.mxu0 0.0
      %1063 = vmatmul.mubr.f32.gmra.mrb[0].mxu0 %v945
      %v1064 = vpop.f32.mrb[0].mxu0
      %v1065 = vadd.f32 %v933, %v1064
      %v1066 = vpop.f32.mrb[0].mxu0
      %1067 = vmatprep.mubr.f32.mxu0 0.0
      %1068 = vmatmul.mubr.f32.gmra.mrb[0].mxu0 %v948
      %v1069 = vpop.f32.mrb[0].mxu0
      %v1070 = vadd.f32 %v933, %v1069
      %v1071 = vpop.f32.mrb[0].mxu0
      %1072 = vmatprep.mubr.f32.mxu0 0.0
      %1073 = vmatmul.mubr.f32.gmra.mrb[0].mxu0 %v951
      %v1074 = vpop.f32.mrb[0].mxu0
      %v1075 = vadd.f32 %v933, %v1074
      %v1076 = vpop.f32.mrb[0].mxu0
      %1077 = vmatprep.mubr.f32.mxu0 0.0
      %1078 = vmatmul.mubr.f32.gmra.mrb[0].mxu0 %v954
      %v1079 = vpop.f32.mrb[0].mxu0
      %v1080 = vadd.f32 %v933, %v1079
      %v1081 = vpop.f32.mrb[0].mxu0
      %1082 = vmatprep.mubr.f32.mxu0 0.0
      %1083 = vmatmul.mubr.f32.gmra.mrb[0].mxu0 %v957
      %v1084 = vpop.f32.mrb[0].mxu0
      %v1085 = vadd.f32 %v933, %v1084
      %v1086 = vpop.f32.mrb[0].mxu0
      %1087 = vmatprep.mubr.f32.mxu0 0.0
      %1088 = vmatmul.mubr.f32.gmra.mrb[0].mxu0 %v960
      %v1089 = vpop.f32.mrb[0].mxu0
      %v1090 = vadd.f32 %v933, %v1089
      %v1091 = vpop.f32.mrb[0].mxu0
      %1092 = vmatprep.mubr.f32.mxu0 0.0
      %1093 = vmatmul.mubr.f32.gmra.mrb[0].mxu0 %v963
      %v1094 = vpop.f32.mrb[0].mxu0
      %v1095 = vadd.f32 %v933, %v1094
      %v1096 = vpop.f32.mrb[0].mxu0
      %1097 = vmatprep.mubr.f32.mxu0 0.0
      %1098 = vmatmul.mubr.f32.gmra.mrb[0].mxu0 %v966
      %v1099 = vpop.f32.mrb[0].mxu0
      %v1100 = vadd.f32 %v933, %v1099
      %v1101 = vpop.f32.mrb[0].mxu0
      %1102 = vmatprep.mubr.f32.mxu0 0.0
      %1103 = vmatmul.mubr.f32.gmra.mrb[0].mxu0 %v969
      %v1104 = vpop.f32.mrb[0].mxu0
      %v1105 = vadd.f32 %v933, %v1104
      %v1106 = vpop.f32.mrb[0].mxu0
      %1107 = vmatprep.mubr.f32.mxu0 0.0
      %1108 = vmatmul.mubr.f32.gmra.mrb[0].mxu0 %v972
      %v1109 = vpop.f32.mrb[0].mxu0
      %v1110 = vadd.f32 %v933, %v1109
      %v1111 = vpop.f32.mrb[0].mxu0
      %1112 = vmatprep.mubr.f32.mxu0 0.0
      %1113 = vmatmul.mubr.f32.gmra.mrb[0].mxu0 %v975
      %v1114 = vpop.f32.mrb[0].mxu0
      %v1115 = vadd.f32 %v933, %v1114
      %v1116 = vpop.f32.mrb[0].mxu0
      %1117 = vmatprep.mubr.f32.mxu0 0.0
      %1118 = vmatmul.mubr.f32.gmra.mrb[0].mxu0 %v978
      %v1119 = vpop.f32.mrb[0].mxu0
      %v1120 = vadd.f32 %v933, %v1119
      %v1121 = vpop.f32.mrb[0].mxu0
      %1122 = vmatprep.mubr.f32.mxu0 0.0
      %1123 = vmatmul.mubr.f32.gmra.mrb[0].mxu0 %v981
      %v1124 = vpop.f32.mrb[0].mxu0
      %v1125 = vadd.f32 %v933, %v1124
      %v1126 = vpop.f32.mrb[0].mxu0
      %1127 = vdwg.mxu0
      %v1128 = vld [vmem:[%s7] sm:$0xff]
      %v1129 = vld [vmem:[%s7 + $0x8] sm:$0xff]
      %v1130 = vld [vmem:[%s7 + $0x10] sm:$0xff]
      %v1131 = vld [vmem:[%s7 + $0x18] sm:$0xff]
      %v1132 = vld [vmem:[%s7 + $0x20] sm:$0xff]
      %v1133 = vld [vmem:[%s7 + $0x28] sm:$0xff]
      %v1134 = vld [vmem:[%s7 + $0x30] sm:$0xff]
      %v1135 = vld [vmem:[%s7 + $0x38] sm:$0xff]
      %v1136 = vld [vmem:[%s7 + $0x40] sm:$0xff]
      %v1137 = vld [vmem:[%s7 + $0x48] sm:$0xff]
      %v1138 = vld [vmem:[%s7 + $0x50] sm:$0xff]
      %v1139 = vld [vmem:[%s7 + $0x58] sm:$0xff]
      %v1140 = vld [vmem:[%s7 + $0x60] sm:$0xff]
      %v1141 = vld [vmem:[%s7 + $0x68] sm:$0xff]
      %v1142 = vld [vmem:[%s7 + $0x70] sm:$0xff]
      %v1143 = vld [vmem:[%s7 + $0x78] sm:$0xff]
      %v1144 = vld [vmem:[%s7 + $0x80] sm:$0xff]
      %v1145 = vld [vmem:[%s7 + $0x88] sm:$0xff]
      %v1146 = vld [vmem:[%s7 + $0x90] sm:$0xff]
      %v1147 = vld [vmem:[%s7 + $0x98] sm:$0xff]
      %v1148 = vld [vmem:[%s7 + $0xa0] sm:$0xff]
      %v1149 = vld [vmem:[%s7 + $0xa8] sm:$0xff]
      %v1150 = vld [vmem:[%s7 + $0xb0] sm:$0xff]
      %v1151 = vld [vmem:[%s7 + $0xb8] sm:$0xff]
      %v1152 = vld [vmem:[%s7 + $0xc0] sm:$0xff]
      %v1153 = vld [vmem:[%s7 + $0xc8] sm:$0xff]
      %v1154 = vld [vmem:[%s7 + $0xd0] sm:$0xff]
      %v1155 = vld [vmem:[%s7 + $0xd8] sm:$0xff]
      %v1156 = vld [vmem:[%s7 + $0xe0] sm:$0xff]
      %v1157 = vld [vmem:[%s7 + $0xe8] sm:$0xff]
      %v1158 = vld [vmem:[%s7 + $0xf0] sm:$0xff]
      %v1159 = vld [vmem:[%s7 + $0xf8] sm:$0xff]
      %v1160 = vld [vmem:[%s7 + $0x100] sm:$0xff]
      %v1161 = vld [vmem:[%s7 + $0x108] sm:$0xff]
      %v1162 = vld [vmem:[%s7 + $0x110] sm:$0xff]
      %v1163 = vld [vmem:[%s7 + $0x118] sm:$0xff]
      %v1164 = vld [vmem:[%s7 + $0x120] sm:$0xff]
      %v1165 = vld [vmem:[%s7 + $0x128] sm:$0xff]
      %v1166 = vld [vmem:[%s7 + $0x130] sm:$0xff]
      %v1167 = vld [vmem:[%s7 + $0x138] sm:$0xff]
      %v1168 = vld [vmem:[%s7 + $0x140] sm:$0xff]
      %v1169 = vld [vmem:[%s7 + $0x148] sm:$0xff]
      %v1170 = vld [vmem:[%s7 + $0x150] sm:$0xff]
      %v1171 = vld [vmem:[%s7 + $0x158] sm:$0xff]
      %v1172 = vld [vmem:[%s7 + $0x160] sm:$0xff]
      %v1173 = vld [vmem:[%s7 + $0x168] sm:$0xff]
      %v1174 = vld [vmem:[%s7 + $0x170] sm:$0xff]
      %v1175 = vld [vmem:[%s7 + $0x178] sm:$0xff]
      %v1176 = vld [vmem:[%s7 + $0x180] sm:$0xff]
      %v1177 = vld [vmem:[%s7 + $0x188] sm:$0xff]
      %v1178 = vld [vmem:[%s7 + $0x190] sm:$0xff]
      %v1179 = vld [vmem:[%s7 + $0x198] sm:$0xff]
      %v1180 = vld [vmem:[%s7 + $0x1a0] sm:$0xff]
      %v1181 = vld [vmem:[%s7 + $0x1a8] sm:$0xff]
      %v1182 = vld [vmem:[%s7 + $0x1b0] sm:$0xff]
      %v1183 = vld [vmem:[%s7 + $0x1b8] sm:$0xff]
      %v1184 = vld [vmem:[%s7 + $0x1c0] sm:$0xff]
      %v1185 = vld [vmem:[%s7 + $0x1c8] sm:$0xff]
      %v1186 = vld [vmem:[%s7 + $0x1d0] sm:$0xff]
      %v1187 = vld [vmem:[%s7 + $0x1d8] sm:$0xff]
      %v1188 = vld [vmem:[%s7 + $0x1e0] sm:$0xff]
      %v1189 = vld [vmem:[%s7 + $0x1e8] sm:$0xff]
      %v1190 = vld [vmem:[%s7 + $0x1f0] sm:$0xff]
      %v1191 = vld [vmem:[%s7 + $0x1f8] sm:$0xff]
      %v1192 = vld [vmem:[%s7 + $0x200] sm:$0xff]
      %v1193 = vld [vmem:[%s7 + $0x208] sm:$0xff]
      %v1194 = vld [vmem:[%s7 + $0x210] sm:$0xff]
      %v1195 = vld [vmem:[%s7 + $0x218] sm:$0xff]
      %v1196 = vld [vmem:[%s7 + $0x220] sm:$0xff]
      %v1197 = vld [vmem:[%s7 + $0x228] sm:$0xff]
      %v1198 = vld [vmem:[%s7 + $0x230] sm:$0xff]
      %v1199 = vld [vmem:[%s7 + $0x238] sm:$0xff]
      %v1200 = vld [vmem:[%s7 + $0x240] sm:$0xff]
      %v1201 = vld [vmem:[%s7 + $0x248] sm:$0xff]
      %v1202 = vld [vmem:[%s7 + $0x250] sm:$0xff]
      %v1203 = vld [vmem:[%s7 + $0x258] sm:$0xff]
      %v1204 = vld [vmem:[%s7 + $0x260] sm:$0xff]
      %v1205 = vld [vmem:[%s7 + $0x268] sm:$0xff]
      %v1206 = vld [vmem:[%s7 + $0x270] sm:$0xff]
      %v1207 = vld [vmem:[%s7 + $0x278] sm:$0xff]
      %v1208 = vld [vmem:[%s7 + $0x280] sm:$0xff]
      %v1209 = vld [vmem:[%s7 + $0x288] sm:$0xff]
      %v1210 = vld [vmem:[%s7 + $0x290] sm:$0xff]
      %v1211 = vld [vmem:[%s7 + $0x298] sm:$0xff]
      %v1212 = vld [vmem:[%s7 + $0x2a0] sm:$0xff]
      %v1213 = vld [vmem:[%s7 + $0x2a8] sm:$0xff]
      %v1214 = vld [vmem:[%s7 + $0x2b0] sm:$0xff]
      %v1215 = vld [vmem:[%s7 + $0x2b8] sm:$0xff]
      %v1216 = vld [vmem:[%s7 + $0x2c0] sm:$0xff]
      %v1217 = vld [vmem:[%s7 + $0x2c8] sm:$0xff]
      %v1218 = vld [vmem:[%s7 + $0x2d0] sm:$0xff]
      %v1219 = vld [vmem:[%s7 + $0x2d8] sm:$0xff]
      %v1220 = vld [vmem:[%s7 + $0x2e0] sm:$0xff]
      %v1221 = vld [vmem:[%s7 + $0x2e8] sm:$0xff]
      %v1222 = vld [vmem:[%s7 + $0x2f0] sm:$0xff]
      %v1223 = vld [vmem:[%s7 + $0x2f8] sm:$0xff]
      %v1224 = vld [vmem:[%s7 + $0x300] sm:$0xff]
      %v1225 = vld [vmem:[%s7 + $0x308] sm:$0xff]
      %v1226 = vld [vmem:[%s7 + $0x310] sm:$0xff]
      %v1227 = vld [vmem:[%s7 + $0x318] sm:$0xff]
      %v1228 = vld [vmem:[%s7 + $0x320] sm:$0xff]
      %v1229 = vld [vmem:[%s7 + $0x328] sm:$0xff]
      %v1230 = vld [vmem:[%s7 + $0x330] sm:$0xff]
      %v1231 = vld [vmem:[%s7 + $0x338] sm:$0xff]
      %v1232 = vld [vmem:[%s7 + $0x340] sm:$0xff]
      %v1233 = vld [vmem:[%s7 + $0x348] sm:$0xff]
      %v1234 = vld [vmem:[%s7 + $0x350] sm:$0xff]
      %v1235 = vld [vmem:[%s7 + $0x358] sm:$0xff]
      %v1236 = vld [vmem:[%s7 + $0x360] sm:$0xff]
      %v1237 = vld [vmem:[%s7 + $0x368] sm:$0xff]
      %v1238 = vld [vmem:[%s7 + $0x370] sm:$0xff]
      %v1239 = vld [vmem:[%s7 + $0x378] sm:$0xff]
      %v1240 = vld [vmem:[%s7 + $0x380] sm:$0xff]
      %v1241 = vld [vmem:[%s7 + $0x388] sm:$0xff]
      %v1242 = vld [vmem:[%s7 + $0x390] sm:$0xff]
      %v1243 = vld [vmem:[%s7 + $0x398] sm:$0xff]
      %v1244 = vld [vmem:[%s7 + $0x3a0] sm:$0xff]
      %v1245 = vld [vmem:[%s7 + $0x3a8] sm:$0xff]
      %v1246 = vld [vmem:[%s7 + $0x3b0] sm:$0xff]
      %v1247 = vld [vmem:[%s7 + $0x3b8] sm:$0xff]
      %v1248 = vld [vmem:[%s7 + $0x3c0] sm:$0xff]
      %v1249 = vld [vmem:[%s7 + $0x3c8] sm:$0xff]
      %v1250 = vld [vmem:[%s7 + $0x3d0] sm:$0xff]
      %v1251 = vld [vmem:[%s7 + $0x3d8] sm:$0xff]
      %v1252 = vld [vmem:[%s7 + $0x3e0] sm:$0xff]
      %v1253 = vld [vmem:[%s7 + $0x3e8] sm:$0xff]
      %v1254 = vld [vmem:[%s7 + $0x3f0] sm:$0xff]
      %v1255 = vld [vmem:[%s7 + $0x3f8] sm:$0xff]
      %vm1256 = vcmask 523264
      %v1258 = vsel %vm1256, %v894, 0
      %1260 = vmatprep.subr.mxu0 0.0
      %1261 = vmatpush1.msra.mxu0 %v1128
      %1262 = vmatprep.subr.mxu0 0.0
      %1263 = vmatpush1.msra.mxu0 %v1129
      %1264 = vmatprep.subr.mxu0 0.0
      %1265 = vmatpush1.msra.mxu0 %v1130
      %1266 = vmatprep.subr.mxu0 0.0
      %1267 = vmatpush1.msra.mxu0 %v1131
      %1268 = vmatprep.subr.mxu0 0.0
      %1269 = vmatpush1.msra.mxu0 %v1132
      %1270 = vmatprep.subr.mxu0 0.0
      %1271 = vmatpush1.msra.mxu0 %v1133
      %1272 = vmatprep.subr.mxu0 0.0
      %1273 = vmatpush1.msra.mxu0 %v1134
      %1274 = vmatprep.subr.mxu0 0.0
      %1275 = vmatpush1.msra.mxu0 %v1135
      %1276 = vmatprep.subr.mxu0 0.0
      %1277 = vmatpush1.msra.mxu0 0.0
      %1278 = vmatprep.subr.mxu0 0.0
      %1279 = vmatpush1.msra.mxu0 0.0
      %1280 = vmatprep.subr.mxu0 0.0
      %1281 = vmatpush1.msra.mxu0 0.0
      %1282 = vmatprep.subr.mxu0 0.0
      %1283 = vmatpush1.msra.mxu0 0.0
      %1284 = vmatprep.subr.mxu0 0.0
      %1285 = vmatpush1.msra.mxu0 0.0
      %1286 = vmatprep.subr.mxu0 0.0
      %1287 = vmatpush1.msra.mxu0 0.0
      %1288 = vmatprep.subr.mxu0 0.0
      %1289 = vmatpush1.msra.mxu0 0.0
      %1290 = vmatprep.subr.mxu0 0.0
      %1291 = vmatpush1.msra.mxu0 0.0
      %1292 = vmatprep.subr.mxu0 0.0
      %1293 = vmatpush1.msra.mxu0 0.0
      %1294 = vmatprep.subr.mxu0 0.0
      %1295 = vmatpush1.msra.mxu0 0.0
      %1296 = vmatprep.subr.mxu0 0.0
      %1297 = vmatpush1.msra.mxu0 0.0
      %1298 = vmatprep.subr.mxu0 0.0
      %1299 = vmatpush1.msra.mxu0 0.0
      %1300 = vmatprep.subr.mxu0 0.0
      %1301 = vmatpush1.msra.mxu0 0.0
      %1302 = vmatprep.subr.mxu0 0.0
      %1303 = vmatpush1.msra.mxu0 0.0
      %1304 = vmatprep.subr.mxu0 0.0
      %1305 = vmatpush1.msra.mxu0 0.0
      %1306 = vmatprep.subr.mxu0 0.0
      %1307 = vmatpush1.msra.mxu0 0.0
      %1308 = vmatprep.subr.mxu0 0.0
      %1309 = vmatpush1.msra.mxu0 0.0
      %1310 = vmatprep.subr.mxu0 0.0
      %1311 = vmatpush1.msra.mxu0 0.0
      %1312 = vmatprep.subr.mxu0 0.0
      %1313 = vmatpush1.msra.mxu0 0.0
      %1314 = vmatprep.subr.mxu0 0.0
      %1315 = vmatpush1.msra.mxu0 0.0
      %1316 = vmatprep.subr.mxu0 0.0
      %1317 = vmatpush1.msra.mxu0 0.0
      %1318 = vmatprep.subr.mxu0 0.0
      %1319 = vmatpush1.msra.mxu0 0.0
      %1320 = vmatprep.subr.mxu0 0.0
      %1321 = vmatpush1.msra.mxu0 0.0
      %1322 = vmatprep.subr.mxu0 0.0
      %1323 = vmatpush1.msra.mxu0 0.0
      %1324 = vmatprep.mubr.f32.mxu0 0.0
      %1325 = vmatmul.mubr.f32.gmra.mrb[0].mxu0 %v1258
      %v1326 = vpop.f32.mrb[0].mxu0
      %v1327 = vadd.f32 0.0, %v1326
      %v1328 = vpop.f32.mrb[0].mxu0
      %1329 = vdwg.mxu0
      %v1331 = vsel %vm1256, %v895, 0
      %1333 = vmatprep.subr.mxu0 0.0
      %1334 = vmatpush1.msra.mxu0 %v1136
      %1335 = vmatprep.subr.mxu0 0.0
      %1336 = vmatpush1.msra.mxu0 %v1137
      %1337 = vmatprep.subr.mxu0 0.0
      %1338 = vmatpush1.msra.mxu0 %v1138
      %1339 = vmatprep.subr.mxu0 0.0
      %1340 = vmatpush1.msra.mxu0 %v1139
      %1341 = vmatprep.subr.mxu0 0.0
      %1342 = vmatpush1.msra.mxu0 %v1140
      %1343 = vmatprep.subr.mxu0 0.0
      %1344 = vmatpush1.msra.mxu0 %v1141
      %1345 = vmatprep.subr.mxu0 0.0
      %1346 = vmatpush1.msra.mxu0 %v1142
      %1347 = vmatprep.subr.mxu0 0.0
      %1348 = vmatpush1.msra.mxu0 %v1143
      %1349 = vmatprep.subr.mxu0 0.0
      %1350 = vmatpush1.msra.mxu0 0.0
      %1351 = vmatprep.subr.mxu0 0.0
      %1352 = vmatpush1.msra.mxu0 0.0
      %1353 = vmatprep.subr.mxu0 0.0
      %1354 = vmatpush1.msra.mxu0 0.0
      %1355 = vmatprep.subr.mxu0 0.0
      %1356 = vmatpush1.msra.mxu0 0.0
      %1357 = vmatprep.subr.mxu0 0.0
      %1358 = vmatpush1.msra.mxu0 0.0
      %1359 = vmatprep.subr.mxu0 0.0
      %1360 = vmatpush1.msra.mxu0 0.0
      %1361 = vmatprep.subr.mxu0 0.0
      %1362 = vmatpush1.msra.mxu0 0.0
      %1363 = vmatprep.subr.mxu0 0.0
      %1364 = vmatpush1.msra.mxu0 0.0
      %1365 = vmatprep.subr.mxu0 0.0
      %1366 = vmatpush1.msra.mxu0 0.0
      %1367 = vmatprep.subr.mxu0 0.0
      %1368 = vmatpush1.msra.mxu0 0.0
      %1369 = vmatprep.subr.mxu0 0.0
      %1370 = vmatpush1.msra.mxu0 0.0
      %1371 = vmatprep.subr.mxu0 0.0
      %1372 = vmatpush1.msra.mxu0 0.0
      %1373 = vmatprep.subr.mxu0 0.0
      %1374 = vmatpush1.msra.mxu0 0.0
      %1375 = vmatprep.subr.mxu0 0.0
      %1376 = vmatpush1.msra.mxu0 0.0
      %1377 = vmatprep.subr.mxu0 0.0
      %1378 = vmatpush1.msra.mxu0 0.0
      %1379 = vmatprep.subr.mxu0 0.0
      %1380 = vmatpush1.msra.mxu0 0.0
      %1381 = vmatprep.subr.mxu0 0.0
      %1382 = vmatpush1.msra.mxu0 0.0
      %1383 = vmatprep.subr.mxu0 0.0
      %1384 = vmatpush1.msra.mxu0 0.0
      %1385 = vmatprep.subr.mxu0 0.0
      %1386 = vmatpush1.msra.mxu0 0.0
      %1387 = vmatprep.subr.mxu0 0.0
      %1388 = vmatpush1.msra.mxu0 0.0
      %1389 = vmatprep.subr.mxu0 0.0
      %1390 = vmatpush1.msra.mxu0 0.0
      %1391 = vmatprep.subr.mxu0 0.0
      %1392 = vmatpush1.msra.mxu0 0.0
      %1393 = vmatprep.subr.mxu0 0.0
      %1394 = vmatpush1.msra.mxu0 0.0
      %1395 = vmatprep.subr.mxu0 0.0
      %1396 = vmatpush1.msra.mxu0 0.0
      %1397 = vmatprep.mubr.f32.mxu0 0.0
      %1398 = vmatmul.mubr.f32.gmra.mrb[0].mxu0 %v1331
      %v1399 = vpop.f32.mrb[0].mxu0
      %v1400 = vadd.f32 0.0, %v1399
      %v1401 = vpop.f32.mrb[0].mxu0
      %1402 = vdwg.mxu0
      %v1404 = vsel %vm1256, %v896, 0
      %1406 = vmatprep.subr.mxu0 0.0
      %1407 = vmatpush1.msra.mxu0 %v1144
      %1408 = vmatprep.subr.mxu0 0.0
      %1409 = vmatpush1.msra.mxu0 %v1145
      %1410 = vmatprep.subr.mxu0 0.0
      %1411 = vmatpush1.msra.mxu0 %v1146
      %1412 = vmatprep.subr.mxu0 0.0
      %1413 = vmatpush1.msra.mxu0 %v1147
      %1414 = vmatprep.subr.mxu0 0.0
      %1415 = vmatpush1.msra.mxu0 %v1148
      %1416 = vmatprep.subr.mxu0 0.0
      %1417 = vmatpush1.msra.mxu0 %v1149
      %1418 = vmatprep.subr.mxu0 0.0
      %1419 = vmatpush1.msra.mxu0 %v1150
      %1420 = vmatprep.subr.mxu0 0.0
      %1421 = vmatpush1.msra.mxu0 %v1151
      %1422 = vmatprep.subr.mxu0 0.0
      %1423 = vmatpush1.msra.mxu0 0.0
      %1424 = vmatprep.subr.mxu0 0.0
      %1425 = vmatpush1.msra.mxu0 0.0
      %1426 = vmatprep.subr.mxu0 0.0
      %1427 = vmatpush1.msra.mxu0 0.0
      %1428 = vmatprep.subr.mxu0 0.0
      %1429 = vmatpush1.msra.mxu0 0.0
      %1430 = vmatprep.subr.mxu0 0.0
      %1431 = vmatpush1.msra.mxu0 0.0
      %1432 = vmatprep.subr.mxu0 0.0
      %1433 = vmatpush1.msra.mxu0 0.0
      %1434 = vmatprep.subr.mxu0 0.0
      %1435 = vmatpush1.msra.mxu0 0.0
      %1436 = vmatprep.subr.mxu0 0.0
      %1437 = vmatpush1.msra.mxu0 0.0
      %1438 = vmatprep.subr.mxu0 0.0
      %1439 = vmatpush1.msra.mxu0 0.0
      %1440 = vmatprep.subr.mxu0 0.0
      %1441 = vmatpush1.msra.mxu0 0.0
      %1442 = vmatprep.subr.mxu0 0.0
      %1443 = vmatpush1.msra.mxu0 0.0
      %1444 = vmatprep.subr.mxu0 0.0
      %1445 = vmatpush1.msra.mxu0 0.0
      %1446 = vmatprep.subr.mxu0 0.0
      %1447 = vmatpush1.msra.mxu0 0.0
      %1448 = vmatprep.subr.mxu0 0.0
      %1449 = vmatpush1.msra.mxu0 0.0
      %1450 = vmatprep.subr.mxu0 0.0
      %1451 = vmatpush1.msra.mxu0 0.0
      %1452 = vmatprep.subr.mxu0 0.0
      %1453 = vmatpush1.msra.mxu0 0.0
      %1454 = vmatprep.subr.mxu0 0.0
      %1455 = vmatpush1.msra.mxu0 0.0
      %1456 = vmatprep.subr.mxu0 0.0
      %1457 = vmatpush1.msra.mxu0 0.0
      %1458 = vmatprep.subr.mxu0 0.0
      %1459 = vmatpush1.msra.mxu0 0.0
      %1460 = vmatprep.subr.mxu0 0.0
      %1461 = vmatpush1.msra.mxu0 0.0
      %1462 = vmatprep.subr.mxu0 0.0
      %1463 = vmatpush1.msra.mxu0 0.0
      %1464 = vmatprep.subr.mxu0 0.0
      %1465 = vmatpush1.msra.mxu0 0.0
      %1466 = vmatprep.subr.mxu0 0.0
      %1467 = vmatpush1.msra.mxu0 0.0
      %1468 = vmatprep.subr.mxu0 0.0
      %1469 = vmatpush1.msra.mxu0 0.0
      %1470 = vmatprep.mubr.f32.mxu0 0.0
      %1471 = vmatmul.mubr.f32.gmra.mrb[0].mxu0 %v1404
      %v1472 = vpop.f32.mrb[0].mxu0
      %v1473 = vadd.f32 0.0, %v1472
      %v1474 = vpop.f32.mrb[0].mxu0
      %1475 = vdwg.mxu0
      %v1477 = vsel %vm1256, %v897, 0
      %1479 = vmatprep.subr.mxu0 0.0
      %1480 = vmatpush1.msra.mxu0 %v1152
      %1481 = vmatprep.subr.mxu0 0.0
      %1482 = vmatpush1.msra.mxu0 %v1153
      %1483 = vmatprep.subr.mxu0 0.0
      %1484 = vmatpush1.msra.mxu0 %v1154
      %1485 = vmatprep.subr.mxu0 0.0
      %1486 = vmatpush1.msra.mxu0 %v1155
      %1487 = vmatprep.subr.mxu0 0.0
      %1488 = vmatpush1.msra.mxu0 %v1156
      %1489 = vmatprep.subr.mxu0 0.0
      %1490 = vmatpush1.msra.mxu0 %v1157
      %1491 = vmatprep.subr.mxu0 0.0
      %1492 = vmatpush1.msra.mxu0 %v1158
      %1493 = vmatprep.subr.mxu0 0.0
      %1494 = vmatpush1.msra.mxu0 %v1159
      %1495 = vmatprep.subr.mxu0 0.0
      %1496 = vmatpush1.msra.mxu0 0.0
      %1497 = vmatprep.subr.mxu0 0.0
      %1498 = vmatpush1.msra.mxu0 0.0
      %1499 = vmatprep.subr.mxu0 0.0
      %1500 = vmatpush1.msra.mxu0 0.0
      %1501 = vmatprep.subr.mxu0 0.0
      %1502 = vmatpush1.msra.mxu0 0.0
      %1503 = vmatprep.subr.mxu0 0.0
      %1504 = vmatpush1.msra.mxu0 0.0
      %1505 = vmatprep.subr.mxu0 0.0
      %1506 = vmatpush1.msra.mxu0 0.0
      %1507 = vmatprep.subr.mxu0 0.0
      %1508 = vmatpush1.msra.mxu0 0.0
      %1509 = vmatprep.subr.mxu0 0.0
      %1510 = vmatpush1.msra.mxu0 0.0
      %1511 = vmatprep.subr.mxu0 0.0
      %1512 = vmatpush1.msra.mxu0 0.0
      %1513 = vmatprep.subr.mxu0 0.0
      %1514 = vmatpush1.msra.mxu0 0.0
      %1515 = vmatprep.subr.mxu0 0.0
      %1516 = vmatpush1.msra.mxu0 0.0
      %1517 = vmatprep.subr.mxu0 0.0
      %1518 = vmatpush1.msra.mxu0 0.0
      %1519 = vmatprep.subr.mxu0 0.0
      %1520 = vmatpush1.msra.mxu0 0.0
      %1521 = vmatprep.subr.mxu0 0.0
      %1522 = vmatpush1.msra.mxu0 0.0
      %1523 = vmatprep.subr.mxu0 0.0
      %1524 = vmatpush1.msra.mxu0 0.0
      %1525 = vmatprep.subr.mxu0 0.0
      %1526 = vmatpush1.msra.mxu0 0.0
      %1527 = vmatprep.subr.mxu0 0.0
      %1528 = vmatpush1.msra.mxu0 0.0
      %1529 = vmatprep.subr.mxu0 0.0
      %1530 = vmatpush1.msra.mxu0 0.0
      %1531 = vmatprep.subr.mxu0 0.0
      %1532 = vmatpush1.msra.mxu0 0.0
      %1533 = vmatprep.subr.mxu0 0.0
      %1534 = vmatpush1.msra.mxu0 0.0
      %1535 = vmatprep.subr.mxu0 0.0
      %1536 = vmatpush1.msra.mxu0 0.0
      %1537 = vmatprep.subr.mxu0 0.0
      %1538 = vmatpush1.msra.mxu0 0.0
      %1539 = vmatprep.subr.mxu0 0.0
      %1540 = vmatpush1.msra.mxu0 0.0
      %1541 = vmatprep.subr.mxu0 0.0
      %1542 = vmatpush1.msra.mxu0 0.0
      %1543 = vmatprep.mubr.f32.mxu0 0.0
      %1544 = vmatmul.mubr.f32.gmra.mrb[0].mxu0 %v1477
      %v1545 = vpop.f32.mrb[0].mxu0
      %v1546 = vadd.f32 0.0, %v1545
      %v1547 = vpop.f32.mrb[0].mxu0
      %1548 = vdwg.mxu0
      %v1550 = vsel %vm1256, %v898, 0
      %1552 = vmatprep.subr.mxu0 0.0
      %1553 = vmatpush1.msra.mxu0 %v1160
      %1554 = vmatprep.subr.mxu0 0.0
      %1555 = vmatpush1.msra.mxu0 %v1161
      %1556 = vmatprep.subr.mxu0 0.0
      %1557 = vmatpush1.msra.mxu0 %v1162
      %1558 = vmatprep.subr.mxu0 0.0
      %1559 = vmatpush1.msra.mxu0 %v1163
      %1560 = vmatprep.subr.mxu0 0.0
      %1561 = vmatpush1.msra.mxu0 %v1164
      %1562 = vmatprep.subr.mxu0 0.0
      %1563 = vmatpush1.msra.mxu0 %v1165
      %1564 = vmatprep.subr.mxu0 0.0
      %1565 = vmatpush1.msra.mxu0 %v1166
      %1566 = vmatprep.subr.mxu0 0.0
      %1567 = vmatpush1.msra.mxu0 %v1167
      %1568 = vmatprep.subr.mxu0 0.0
      %1569 = vmatpush1.msra.mxu0 0.0
      %1570 = vmatprep.subr.mxu0 0.0
      %1571 = vmatpush1.msra.mxu0 0.0
      %1572 = vmatprep.subr.mxu0 0.0
      %1573 = vmatpush1.msra.mxu0 0.0
      %1574 = vmatprep.subr.mxu0 0.0
      %1575 = vmatpush1.msra.mxu0 0.0
      %1576 = vmatprep.subr.mxu0 0.0
      %1577 = vmatpush1.msra.mxu0 0.0
      %1578 = vmatprep.subr.mxu0 0.0
      %1579 = vmatpush1.msra.mxu0 0.0
      %1580 = vmatprep.subr.mxu0 0.0
      %1581 = vmatpush1.msra.mxu0 0.0
      %1582 = vmatprep.subr.mxu0 0.0
      %1583 = vmatpush1.msra.mxu0 0.0
      %1584 = vmatprep.subr.mxu0 0.0
      %1585 = vmatpush1.msra.mxu0 0.0
      %1586 = vmatprep.subr.mxu0 0.0
      %1587 = vmatpush1.msra.mxu0 0.0
      %1588 = vmatprep.subr.mxu0 0.0
      %1589 = vmatpush1.msra.mxu0 0.0
      %1590 = vmatprep.subr.mxu0 0.0
      %1591 = vmatpush1.msra.mxu0 0.0
      %1592 = vmatprep.subr.mxu0 0.0
      %1593 = vmatpush1.msra.mxu0 0.0
      %1594 = vmatprep.subr.mxu0 0.0
      %1595 = vmatpush1.msra.mxu0 0.0
      %1596 = vmatprep.subr.mxu0 0.0
      %1597 = vmatpush1.msra.mxu0 0.0
      %1598 = vmatprep.subr.mxu0 0.0
      %1599 = vmatpush1.msra.mxu0 0.0
      %1600 = vmatprep.subr.mxu0 0.0
      %1601 = vmatpush1.msra.mxu0 0.0
      %1602 = vmatprep.subr.mxu0 0.0
      %1603 = vmatpush1.msra.mxu0 0.0
      %1604 = vmatprep.subr.mxu0 0.0
      %1605 = vmatpush1.msra.mxu0 0.0
      %1606 = vmatprep.subr.mxu0 0.0
      %1607 = vmatpush1.msra.mxu0 0.0
      %1608 = vmatprep.subr.mxu0 0.0
      %1609 = vmatpush1.msra.mxu0 0.0
      %1610 = vmatprep.subr.mxu0 0.0
      %1611 = vmatpush1.msra.mxu0 0.0
      %1612 = vmatprep.subr.mxu0 0.0
      %1613 = vmatpush1.msra.mxu0 0.0
      %1614 = vmatprep.subr.mxu0 0.0
      %1615 = vmatpush1.msra.mxu0 0.0
      %1616 = vmatprep.mubr.f32.mxu0 0.0
      %1617 = vmatmul.mubr.f32.gmra.mrb[0].mxu0 %v1550
      %v1618 = vpop.f32.mrb[0].mxu0
      %v1619 = vadd.f32 0.0, %v1618
      %v1620 = vpop.f32.mrb[0].mxu0
      %1621 = vdwg.mxu0
      %v1623 = vsel %vm1256, %v899, 0
      %1625 = vmatprep.subr.mxu0 0.0
      %1626 = vmatpush1.msra.mxu0 %v1168
      %1627 = vmatprep.subr.mxu0 0.0
      %1628 = vmatpush1.msra.mxu0 %v1169
      %1629 = vmatprep.subr.mxu0 0.0
      %1630 = vmatpush1.msra.mxu0 %v1170
      %1631 = vmatprep.subr.mxu0 0.0
      %1632 = vmatpush1.msra.mxu0 %v1171
      %1633 = vmatprep.subr.mxu0 0.0
      %1634 = vmatpush1.msra.mxu0 %v1172
      %1635 = vmatprep.subr.mxu0 0.0
      %1636 = vmatpush1.msra.mxu0 %v1173
      %1637 = vmatprep.subr.mxu0 0.0
      %1638 = vmatpush1.msra.mxu0 %v1174
      %1639 = vmatprep.subr.mxu0 0.0
      %1640 = vmatpush1.msra.mxu0 %v1175
      %1641 = vmatprep.subr.mxu0 0.0
      %1642 = vmatpush1.msra.mxu0 0.0
      %1643 = vmatprep.subr.mxu0 0.0
      %1644 = vmatpush1.msra.mxu0 0.0
      %1645 = vmatprep.subr.mxu0 0.0
      %1646 = vmatpush1.msra.mxu0 0.0
      %1647 = vmatprep.subr.mxu0 0.0
      %1648 = vmatpush1.msra.mxu0 0.0
      %1649 = vmatprep.subr.mxu0 0.0
      %1650 = vmatpush1.msra.mxu0 0.0
      %1651 = vmatprep.subr.mxu0 0.0
      %1652 = vmatpush1.msra.mxu0 0.0
      %1653 = vmatprep.subr.mxu0 0.0
      %1654 = vmatpush1.msra.mxu0 0.0
      %1655 = vmatprep.subr.mxu0 0.0
      %1656 = vmatpush1.msra.mxu0 0.0
      %1657 = vmatprep.subr.mxu0 0.0
      %1658 = vmatpush1.msra.mxu0 0.0
      %1659 = vmatprep.subr.mxu0 0.0
      %1660 = vmatpush1.msra.mxu0 0.0
      %1661 = vmatprep.subr.mxu0 0.0
      %1662 = vmatpush1.msra.mxu0 0.0
      %1663 = vmatprep.subr.mxu0 0.0
      %1664 = vmatpush1.msra.mxu0 0.0
      %1665 = vmatprep.subr.mxu0 0.0
      %1666 = vmatpush1.msra.mxu0 0.0
      %1667 = vmatprep.subr.mxu0 0.0
      %1668 = vmatpush1.msra.mxu0 0.0
      %1669 = vmatprep.subr.mxu0 0.0
      %1670 = vmatpush1.msra.mxu0 0.0
      %1671 = vmatprep.subr.mxu0 0.0
      %1672 = vmatpush1.msra.mxu0 0.0
      %1673 = vmatprep.subr.mxu0 0.0
      %1674 = vmatpush1.msra.mxu0 0.0
      %1675 = vmatprep.subr.mxu0 0.0
      %1676 = vmatpush1.msra.mxu0 0.0
      %1677 = vmatprep.subr.mxu0 0.0
      %1678 = vmatpush1.msra.mxu0 0.0
      %1679 = vmatprep.subr.mxu0 0.0
      %1680 = vmatpush1.msra.mxu0 0.0
      %1681 = vmatprep.subr.mxu0 0.0
      %1682 = vmatpush1.msra.mxu0 0.0
      %1683 = vmatprep.subr.mxu0 0.0
      %1684 = vmatpush1.msra.mxu0 0.0
      %1685 = vmatprep.subr.mxu0 0.0
      %1686 = vmatpush1.msra.mxu0 0.0
      %1687 = vmatprep.subr.mxu0 0.0
      %1688 = vmatpush1.msra.mxu0 0.0
      %1689 = vmatprep.mubr.f32.mxu0 0.0
      %1690 = vmatmul.mubr.f32.gmra.mrb[0].mxu0 %v1623
      %v1691 = vpop.f32.mrb[0].mxu0
      %v1692 = vadd.f32 0.0, %v1691
      %v1693 = vpop.f32.mrb[0].mxu0
      %1694 = vdwg.mxu0
      %v1696 = vsel %vm1256, %v900, 0
      %1698 = vmatprep.subr.mxu0 0.0
      %1699 = vmatpush1.msra.mxu0 %v1176
      %1700 = vmatprep.subr.mxu0 0.0
      %1701 = vmatpush1.msra.mxu0 %v1177
      %1702 = vmatprep.subr.mxu0 0.0
      %1703 = vmatpush1.msra.mxu0 %v1178
      %1704 = vmatprep.subr.mxu0 0.0
      %1705 = vmatpush1.msra.mxu0 %v1179
      %1706 = vmatprep.subr.mxu0 0.0
      %1707 = vmatpush1.msra.mxu0 %v1180
      %1708 = vmatprep.subr.mxu0 0.0
      %1709 = vmatpush1.msra.mxu0 %v1181
      %1710 = vmatprep.subr.mxu0 0.0
      %1711 = vmatpush1.msra.mxu0 %v1182
      %1712 = vmatprep.subr.mxu0 0.0
      %1713 = vmatpush1.msra.mxu0 %v1183
      %1714 = vmatprep.subr.mxu0 0.0
      %1715 = vmatpush1.msra.mxu0 0.0
      %1716 = vmatprep.subr.mxu0 0.0
      %1717 = vmatpush1.msra.mxu0 0.0
      %1718 = vmatprep.subr.mxu0 0.0
      %1719 = vmatpush1.msra.mxu0 0.0
      %1720 = vmatprep.subr.mxu0 0.0
      %1721 = vmatpush1.msra.mxu0 0.0
      %1722 = vmatprep.subr.mxu0 0.0
      %1723 = vmatpush1.msra.mxu0 0.0
      %1724 = vmatprep.subr.mxu0 0.0
      %1725 = vmatpush1.msra.mxu0 0.0
      %1726 = vmatprep.subr.mxu0 0.0
      %1727 = vmatpush1.msra.mxu0 0.0
      %1728 = vmatprep.subr.mxu0 0.0
      %1729 = vmatpush1.msra.mxu0 0.0
      %1730 = vmatprep.subr.mxu0 0.0
      %1731 = vmatpush1.msra.mxu0 0.0
      %1732 = vmatprep.subr.mxu0 0.0
      %1733 = vmatpush1.msra.mxu0 0.0
      %1734 = vmatprep.subr.mxu0 0.0
      %1735 = vmatpush1.msra.mxu0 0.0
      %1736 = vmatprep.subr.mxu0 0.0
      %1737 = vmatpush1.msra.mxu0 0.0
      %1738 = vmatprep.subr.mxu0 0.0
      %1739 = vmatpush1.msra.mxu0 0.0
      %1740 = vmatprep.subr.mxu0 0.0
      %1741 = vmatpush1.msra.mxu0 0.0
      %1742 = vmatprep.subr.mxu0 0.0
      %1743 = vmatpush1.msra.mxu0 0.0
      %1744 = vmatprep.subr.mxu0 0.0
      %1745 = vmatpush1.msra.mxu0 0.0
      %1746 = vmatprep.subr.mxu0 0.0
      %1747 = vmatpush1.msra.mxu0 0.0
      %1748 = vmatprep.subr.mxu0 0.0
      %1749 = vmatpush1.msra.mxu0 0.0
      %1750 = vmatprep.subr.mxu0 0.0
      %1751 = vmatpush1.msra.mxu0 0.0
      %1752 = vmatprep.subr.mxu0 0.0
      %1753 = vmatpush1.msra.mxu0 0.0
      %1754 = vmatprep.subr.mxu0 0.0
      %1755 = vmatpush1.msra.mxu0 0.0
      %1756 = vmatprep.subr.mxu0 0.0
      %1757 = vmatpush1.msra.mxu0 0.0
      %1758 = vmatprep.subr.mxu0 0.0
      %1759 = vmatpush1.msra.mxu0 0.0
      %1760 = vmatprep.subr.mxu0 0.0
      %1761 = vmatpush1.msra.mxu0 0.0
      %1762 = vmatprep.mubr.f32.mxu0 0.0
      %1763 = vmatmul.mubr.f32.gmra.mrb[0].mxu0 %v1696
      %v1764 = vpop.f32.mrb[0].mxu0
      %v1765 = vadd.f32 0.0, %v1764
      %v1766 = vpop.f32.mrb[0].mxu0
      %1767 = vdwg.mxu0
      %v1769 = vsel %vm1256, %v901, 0
      %1771 = vmatprep.subr.mxu0 0.0
      %1772 = vmatpush1.msra.mxu0 %v1184
      %1773 = vmatprep.subr.mxu0 0.0
      %1774 = vmatpush1.msra.mxu0 %v1185
      %1775 = vmatprep.subr.mxu0 0.0
      %1776 = vmatpush1.msra.mxu0 %v1186
      %1777 = vmatprep.subr.mxu0 0.0
      %1778 = vmatpush1.msra.mxu0 %v1187
      %1779 = vmatprep.subr.mxu0 0.0
      %1780 = vmatpush1.msra.mxu0 %v1188
      %1781 = vmatprep.subr.mxu0 0.0
      %1782 = vmatpush1.msra.mxu0 %v1189
      %1783 = vmatprep.subr.mxu0 0.0
      %1784 = vmatpush1.msra.mxu0 %v1190
      %1785 = vmatprep.subr.mxu0 0.0
      %1786 = vmatpush1.msra.mxu0 %v1191
      %1787 = vmatprep.subr.mxu0 0.0
      %1788 = vmatpush1.msra.mxu0 0.0
      %1789 = vmatprep.subr.mxu0 0.0
      %1790 = vmatpush1.msra.mxu0 0.0
      %1791 = vmatprep.subr.mxu0 0.0
      %1792 = vmatpush1.msra.mxu0 0.0
      %1793 = vmatprep.subr.mxu0 0.0
      %1794 = vmatpush1.msra.mxu0 0.0
      %1795 = vmatprep.subr.mxu0 0.0
      %1796 = vmatpush1.msra.mxu0 0.0
      %1797 = vmatprep.subr.mxu0 0.0
      %1798 = vmatpush1.msra.mxu0 0.0
      %1799 = vmatprep.subr.mxu0 0.0
      %1800 = vmatpush1.msra.mxu0 0.0
      %1801 = vmatprep.subr.mxu0 0.0
      %1802 = vmatpush1.msra.mxu0 0.0
      %1803 = vmatprep.subr.mxu0 0.0
      %1804 = vmatpush1.msra.mxu0 0.0
      %1805 = vmatprep.subr.mxu0 0.0
      %1806 = vmatpush1.msra.mxu0 0.0
      %1807 = vmatprep.subr.mxu0 0.0
      %1808 = vmatpush1.msra.mxu0 0.0
      %1809 = vmatprep.subr.mxu0 0.0
      %1810 = vmatpush1.msra.mxu0 0.0
      %1811 = vmatprep.subr.mxu0 0.0
      %1812 = vmatpush1.msra.mxu0 0.0
      %1813 = vmatprep.subr.mxu0 0.0
      %1814 = vmatpush1.msra.mxu0 0.0
      %1815 = vmatprep.subr.mxu0 0.0
      %1816 = vmatpush1.msra.mxu0 0.0
      %1817 = vmatprep.subr.mxu0 0.0
      %1818 = vmatpush1.msra.mxu0 0.0
      %1819 = vmatprep.subr.mxu0 0.0
      %1820 = vmatpush1.msra.mxu0 0.0
      %1821 = vmatprep.subr.mxu0 0.0
      %1822 = vmatpush1.msra.mxu0 0.0
      %1823 = vmatprep.subr.mxu0 0.0
      %1824 = vmatpush1.msra.mxu0 0.0
      %1825 = vmatprep.subr.mxu0 0.0
      %1826 = vmatpush1.msra.mxu0 0.0
      %1827 = vmatprep.subr.mxu0 0.0
      %1828 = vmatpush1.msra.mxu0 0.0
      %1829 = vmatprep.subr.mxu0 0.0
      %1830 = vmatpush1.msra.mxu0 0.0
      %1831 = vmatprep.subr.mxu0 0.0
      %1832 = vmatpush1.msra.mxu0 0.0
      %1833 = vmatprep.subr.mxu0 0.0
      %1834 = vmatpush1.msra.mxu0 0.0
      %1835 = vmatprep.mubr.f32.mxu0 0.0
      %1836 = vmatmul.mubr.f32.gmra.mrb[0].mxu0 %v1769
      %v1837 = vpop.f32.mrb[0].mxu0
      %v1838 = vadd.f32 0.0, %v1837
      %v1839 = vpop.f32.mrb[0].mxu0
      %1840 = vdwg.mxu0
      %v1842 = vsel %vm1256, %v902, 0
      %1844 = vmatprep.subr.mxu0 0.0
      %1845 = vmatpush1.msra.mxu0 %v1192
      %1846 = vmatprep.subr.mxu0 0.0
      %1847 = vmatpush1.msra.mxu0 %v1193
      %1848 = vmatprep.subr.mxu0 0.0
      %1849 = vmatpush1.msra.mxu0 %v1194
      %1850 = vmatprep.subr.mxu0 0.0
      %1851 = vmatpush1.msra.mxu0 %v1195
      %1852 = vmatprep.subr.mxu0 0.0
      %1853 = vmatpush1.msra.mxu0 %v1196
      %1854 = vmatprep.subr.mxu0 0.0
      %1855 = vmatpush1.msra.mxu0 %v1197
      %1856 = vmatprep.subr.mxu0 0.0
      %1857 = vmatpush1.msra.mxu0 %v1198
      %1858 = vmatprep.subr.mxu0 0.0
      %1859 = vmatpush1.msra.mxu0 %v1199
      %1860 = vmatprep.subr.mxu0 0.0
      %1861 = vmatpush1.msra.mxu0 0.0
      %1862 = vmatprep.subr.mxu0 0.0
      %1863 = vmatpush1.msra.mxu0 0.0
      %1864 = vmatprep.subr.mxu0 0.0
      %1865 = vmatpush1.msra.mxu0 0.0
      %1866 = vmatprep.subr.mxu0 0.0
      %1867 = vmatpush1.msra.mxu0 0.0
      %1868 = vmatprep.subr.mxu0 0.0
      %1869 = vmatpush1.msra.mxu0 0.0
      %1870 = vmatprep.subr.mxu0 0.0
      %1871 = vmatpush1.msra.mxu0 0.0
      %1872 = vmatprep.subr.mxu0 0.0
      %1873 = vmatpush1.msra.mxu0 0.0
      %1874 = vmatprep.subr.mxu0 0.0
      %1875 = vmatpush1.msra.mxu0 0.0
      %1876 = vmatprep.subr.mxu0 0.0
      %1877 = vmatpush1.msra.mxu0 0.0
      %1878 = vmatprep.subr.mxu0 0.0
      %1879 = vmatpush1.msra.mxu0 0.0
      %1880 = vmatprep.subr.mxu0 0.0
      %1881 = vmatpush1.msra.mxu0 0.0
      %1882 = vmatprep.subr.mxu0 0.0
      %1883 = vmatpush1.msra.mxu0 0.0
      %1884 = vmatprep.subr.mxu0 0.0
      %1885 = vmatpush1.msra.mxu0 0.0
      %1886 = vmatprep.subr.mxu0 0.0
      %1887 = vmatpush1.msra.mxu0 0.0
      %1888 = vmatprep.subr.mxu0 0.0
      %1889 = vmatpush1.msra.mxu0 0.0
      %1890 = vmatprep.subr.mxu0 0.0
      %1891 = vmatpush1.msra.mxu0 0.0
      %1892 = vmatprep.subr.mxu0 0.0
      %1893 = vmatpush1.msra.mxu0 0.0
      %1894 = vmatprep.subr.mxu0 0.0
      %1895 = vmatpush1.msra.mxu0 0.0
      %1896 = vmatprep.subr.mxu0 0.0
      %1897 = vmatpush1.msra.mxu0 0.0
      %1898 = vmatprep.subr.mxu0 0.0
      %1899 = vmatpush1.msra.mxu0 0.0
      %1900 = vmatprep.subr.mxu0 0.0
      %1901 = vmatpush1.msra.mxu0 0.0
      %1902 = vmatprep.subr.mxu0 0.0
      %1903 = vmatpush1.msra.mxu0 0.0
      %1904 = vmatprep.subr.mxu0 0.0
      %1905 = vmatpush1.msra.mxu0 0.0
      %1906 = vmatprep.subr.mxu0 0.0
      %1907 = vmatpush1.msra.mxu0 0.0
      %1908 = vmatprep.mubr.f32.mxu0 0.0
      %1909 = vmatmul.mubr.f32.gmra.mrb[0].mxu0 %v1842
      %v1910 = vpop.f32.mrb[0].mxu0
      %v1911 = vadd.f32 0.0, %v1910
      %v1912 = vpop.f32.mrb[0].mxu0
      %1913 = vdwg.mxu0
      %v1915 = vsel %vm1256, %v903, 0
      %1917 = vmatprep.subr.mxu0 0.0
      %1918 = vmatpush1.msra.mxu0 %v1200
      %1919 = vmatprep.subr.mxu0 0.0
      %1920 = vmatpush1.msra.mxu0 %v1201
      %1921 = vmatprep.subr.mxu0 0.0
      %1922 = vmatpush1.msra.mxu0 %v1202
      %1923 = vmatprep.subr.mxu0 0.0
      %1924 = vmatpush1.msra.mxu0 %v1203
      %1925 = vmatprep.subr.mxu0 0.0
      %1926 = vmatpush1.msra.mxu0 %v1204
      %1927 = vmatprep.subr.mxu0 0.0
      %1928 = vmatpush1.msra.mxu0 %v1205
      %1929 = vmatprep.subr.mxu0 0.0
      %1930 = vmatpush1.msra.mxu0 %v1206
      %1931 = vmatprep.subr.mxu0 0.0
      %1932 = vmatpush1.msra.mxu0 %v1207
      %1933 = vmatprep.subr.mxu0 0.0
      %1934 = vmatpush1.msra.mxu0 0.0
      %1935 = vmatprep.subr.mxu0 0.0
      %1936 = vmatpush1.msra.mxu0 0.0
      %1937 = vmatprep.subr.mxu0 0.0
      %1938 = vmatpush1.msra.mxu0 0.0
      %1939 = vmatprep.subr.mxu0 0.0
      %1940 = vmatpush1.msra.mxu0 0.0
      %1941 = vmatprep.subr.mxu0 0.0
      %1942 = vmatpush1.msra.mxu0 0.0
      %1943 = vmatprep.subr.mxu0 0.0
      %1944 = vmatpush1.msra.mxu0 0.0
      %1945 = vmatprep.subr.mxu0 0.0
      %1946 = vmatpush1.msra.mxu0 0.0
      %1947 = vmatprep.subr.mxu0 0.0
      %1948 = vmatpush1.msra.mxu0 0.0
      %1949 = vmatprep.subr.mxu0 0.0
      %1950 = vmatpush1.msra.mxu0 0.0
      %1951 = vmatprep.subr.mxu0 0.0
      %1952 = vmatpush1.msra.mxu0 0.0
      %1953 = vmatprep.subr.mxu0 0.0
      %1954 = vmatpush1.msra.mxu0 0.0
      %1955 = vmatprep.subr.mxu0 0.0
      %1956 = vmatpush1.msra.mxu0 0.0
      %1957 = vmatprep.subr.mxu0 0.0
      %1958 = vmatpush1.msra.mxu0 0.0
      %1959 = vmatprep.subr.mxu0 0.0
      %1960 = vmatpush1.msra.mxu0 0.0
      %1961 = vmatprep.subr.mxu0 0.0
      %1962 = vmatpush1.msra.mxu0 0.0
      %1963 = vmatprep.subr.mxu0 0.0
      %1964 = vmatpush1.msra.mxu0 0.0
      %1965 = vmatprep.subr.mxu0 0.0
      %1966 = vmatpush1.msra.mxu0 0.0
      %1967 = vmatprep.subr.mxu0 0.0
      %1968 = vmatpush1.msra.mxu0 0.0
      %1969 = vmatprep.subr.mxu0 0.0
      %1970 = vmatpush1.msra.mxu0 0.0
      %1971 = vmatprep.subr.mxu0 0.0
      %1972 = vmatpush1.msra.mxu0 0.0
      %1973 = vmatprep.subr.mxu0 0.0
      %1974 = vmatpush1.msra.mxu0 0.0
      %1975 = vmatprep.subr.mxu0 0.0
      %1976 = vmatpush1.msra.mxu0 0.0
      %1977 = vmatprep.subr.mxu0 0.0
      %1978 = vmatpush1.msra.mxu0 0.0
      %1979 = vmatprep.subr.mxu0 0.0
      %1980 = vmatpush1.msra.mxu0 0.0
      %1981 = vmatprep.mubr.f32.mxu0 0.0
      %1982 = vmatmul.mubr.f32.gmra.mrb[0].mxu0 %v1915
      %v1983 = vpop.f32.mrb[0].mxu0
      %v1984 = vadd.f32 0.0, %v1983
      %v1985 = vpop.f32.mrb[0].mxu0
      %1986 = vdwg.mxu0
      %v1988 = vsel %vm1256, %v904, 0
      %1990 = vmatprep.subr.mxu0 0.0
      %1991 = vmatpush1.msra.mxu0 %v1208
      %1992 = vmatprep.subr.mxu0 0.0
      %1993 = vmatpush1.msra.mxu0 %v1209
      %1994 = vmatprep.subr.mxu0 0.0
      %1995 = vmatpush1.msra.mxu0 %v1210
      %1996 = vmatprep.subr.mxu0 0.0
      %1997 = vmatpush1.msra.mxu0 %v1211
      %1998 = vmatprep.subr.mxu0 0.0
      %1999 = vmatpush1.msra.mxu0 %v1212
      %2000 = vmatprep.subr.mxu0 0.0
      %2001 = vmatpush1.msra.mxu0 %v1213
      %2002 = vmatprep.subr.mxu0 0.0
      %2003 = vmatpush1.msra.mxu0 %v1214
      %2004 = vmatprep.subr.mxu0 0.0
      %2005 = vmatpush1.msra.mxu0 %v1215
      %2006 = vmatprep.subr.mxu0 0.0
      %2007 = vmatpush1.msra.mxu0 0.0
      %2008 = vmatprep.subr.mxu0 0.0
      %2009 = vmatpush1.msra.mxu0 0.0
      %2010 = vmatprep.subr.mxu0 0.0
      %2011 = vmatpush1.msra.mxu0 0.0
      %2012 = vmatprep.subr.mxu0 0.0
      %2013 = vmatpush1.msra.mxu0 0.0
      %2014 = vmatprep.subr.mxu0 0.0
      %2015 = vmatpush1.msra.mxu0 0.0
      %2016 = vmatprep.subr.mxu0 0.0
      %2017 = vmatpush1.msra.mxu0 0.0
      %2018 = vmatprep.subr.mxu0 0.0
      %2019 = vmatpush1.msra.mxu0 0.0
      %2020 = vmatprep.subr.mxu0 0.0
      %2021 = vmatpush1.msra.mxu0 0.0
      %2022 = vmatprep.subr.mxu0 0.0
      %2023 = vmatpush1.msra.mxu0 0.0
      %2024 = vmatprep.subr.mxu0 0.0
      %2025 = vmatpush1.msra.mxu0 0.0
      %2026 = vmatprep.subr.mxu0 0.0
      %2027 = vmatpush1.msra.mxu0 0.0
      %2028 = vmatprep.subr.mxu0 0.0
      %2029 = vmatpush1.msra.mxu0 0.0
      %2030 = vmatprep.subr.mxu0 0.0
      %2031 = vmatpush1.msra.mxu0 0.0
      %2032 = vmatprep.subr.mxu0 0.0
      %2033 = vmatpush1.msra.mxu0 0.0
      %2034 = vmatprep.subr.mxu0 0.0
      %2035 = vmatpush1.msra.mxu0 0.0
      %2036 = vmatprep.subr.mxu0 0.0
      %2037 = vmatpush1.msra.mxu0 0.0
      %2038 = vmatprep.subr.mxu0 0.0
      %2039 = vmatpush1.msra.mxu0 0.0
      %2040 = vmatprep.subr.mxu0 0.0
      %2041 = vmatpush1.msra.mxu0 0.0
      %2042 = vmatprep.subr.mxu0 0.0
      %2043 = vmatpush1.msra.mxu0 0.0
      %2044 = vmatprep.subr.mxu0 0.0
      %2045 = vmatpush1.msra.mxu0 0.0
      %2046 = vmatprep.subr.mxu0 0.0
      %2047 = vmatpush1.msra.mxu0 0.0
      %2048 = vmatprep.subr.mxu0 0.0
      %2049 = vmatpush1.msra.mxu0 0.0
      %2050 = vmatprep.subr.mxu0 0.0
      %2051 = vmatpush1.msra.mxu0 0.0
      %2052 = vmatprep.subr.mxu0 0.0
      %2053 = vmatpush1.msra.mxu0 0.0
      %2054 = vmatprep.mubr.f32.mxu0 0.0
      %2055 = vmatmul.mubr.f32.gmra.mrb[0].mxu0 %v1988
      %v2056 = vpop.f32.mrb[0].mxu0
      %v2057 = vadd.f32 0.0, %v2056
      %v2058 = vpop.f32.mrb[0].mxu0
      %2059 = vdwg.mxu0
      %v2061 = vsel %vm1256, %v905, 0
      %2063 = vmatprep.subr.mxu0 0.0
      %2064 = vmatpush1.msra.mxu0 %v1216
      %2065 = vmatprep.subr.mxu0 0.0
      %2066 = vmatpush1.msra.mxu0 %v1217
      %2067 = vmatprep.subr.mxu0 0.0
      %2068 = vmatpush1.msra.mxu0 %v1218
      %2069 = vmatprep.subr.mxu0 0.0
      %2070 = vmatpush1.msra.mxu0 %v1219
      %2071 = vmatprep.subr.mxu0 0.0
      %2072 = vmatpush1.msra.mxu0 %v1220
      %2073 = vmatprep.subr.mxu0 0.0
      %2074 = vmatpush1.msra.mxu0 %v1221
      %2075 = vmatprep.subr.mxu0 0.0
      %2076 = vmatpush1.msra.mxu0 %v1222
      %2077 = vmatprep.subr.mxu0 0.0
      %2078 = vmatpush1.msra.mxu0 %v1223
      %2079 = vmatprep.subr.mxu0 0.0
      %2080 = vmatpush1.msra.mxu0 0.0
      %2081 = vmatprep.subr.mxu0 0.0
      %2082 = vmatpush1.msra.mxu0 0.0
      %2083 = vmatprep.subr.mxu0 0.0
      %2084 = vmatpush1.msra.mxu0 0.0
      %2085 = vmatprep.subr.mxu0 0.0
      %2086 = vmatpush1.msra.mxu0 0.0
      %2087 = vmatprep.subr.mxu0 0.0
      %2088 = vmatpush1.msra.mxu0 0.0
      %2089 = vmatprep.subr.mxu0 0.0
      %2090 = vmatpush1.msra.mxu0 0.0
      %2091 = vmatprep.subr.mxu0 0.0
      %2092 = vmatpush1.msra.mxu0 0.0
      %2093 = vmatprep.subr.mxu0 0.0
      %2094 = vmatpush1.msra.mxu0 0.0
      %2095 = vmatprep.subr.mxu0 0.0
      %2096 = vmatpush1.msra.mxu0 0.0
      %2097 = vmatprep.subr.mxu0 0.0
      %2098 = vmatpush1.msra.mxu0 0.0
      %2099 = vmatprep.subr.mxu0 0.0
      %2100 = vmatpush1.msra.mxu0 0.0
      %2101 = vmatprep.subr.mxu0 0.0
      %2102 = vmatpush1.msra.mxu0 0.0
      %2103 = vmatprep.subr.mxu0 0.0
      %2104 = vmatpush1.msra.mxu0 0.0
      %2105 = vmatprep.subr.mxu0 0.0
      %2106 = vmatpush1.msra.mxu0 0.0
      %2107 = vmatprep.subr.mxu0 0.0
      %2108 = vmatpush1.msra.mxu0 0.0
      %2109 = vmatprep.subr.mxu0 0.0
      %2110 = vmatpush1.msra.mxu0 0.0
      %2111 = vmatprep.subr.mxu0 0.0
      %2112 = vmatpush1.msra.mxu0 0.0
      %2113 = vmatprep.subr.mxu0 0.0
      %2114 = vmatpush1.msra.mxu0 0.0
      %2115 = vmatprep.subr.mxu0 0.0
      %2116 = vmatpush1.msra.mxu0 0.0
      %2117 = vmatprep.subr.mxu0 0.0
      %2118 = vmatpush1.msra.mxu0 0.0
      %2119 = vmatprep.subr.mxu0 0.0
      %2120 = vmatpush1.msra.mxu0 0.0
      %2121 = vmatprep.subr.mxu0 0.0
      %2122 = vmatpush1.msra.mxu0 0.0
      %2123 = vmatprep.subr.mxu0 0.0
      %2124 = vmatpush1.msra.mxu0 0.0
      %2125 = vmatprep.subr.mxu0 0.0
      %2126 = vmatpush1.msra.mxu0 0.0
      %2127 = vmatprep.mubr.f32.mxu0 0.0
      %2128 = vmatmul.mubr.f32.gmra.mrb[0].mxu0 %v2061
      %v2129 = vpop.f32.mrb[0].mxu0
      %v2130 = vadd.f32 0.0, %v2129
      %v2131 = vpop.f32.mrb[0].mxu0
      %2132 = vdwg.mxu0
      %v2134 = vsel %vm1256, %v906, 0
      %2136 = vmatprep.subr.mxu0 0.0
      %2137 = vmatpush1.msra.mxu0 %v1224
      %2138 = vmatprep.subr.mxu0 0.0
      %2139 = vmatpush1.msra.mxu0 %v1225
      %2140 = vmatprep.subr.mxu0 0.0
      %2141 = vmatpush1.msra.mxu0 %v1226
      %2142 = vmatprep.subr.mxu0 0.0
      %2143 = vmatpush1.msra.mxu0 %v1227
      %2144 = vmatprep.subr.mxu0 0.0
      %2145 = vmatpush1.msra.mxu0 %v1228
      %2146 = vmatprep.subr.mxu0 0.0
      %2147 = vmatpush1.msra.mxu0 %v1229
      %2148 = vmatprep.subr.mxu0 0.0
      %2149 = vmatpush1.msra.mxu0 %v1230
      %2150 = vmatprep.subr.mxu0 0.0
      %2151 = vmatpush1.msra.mxu0 %v1231
      %2152 = vmatprep.subr.mxu0 0.0
      %2153 = vmatpush1.msra.mxu0 0.0
      %2154 = vmatprep.subr.mxu0 0.0
      %2155 = vmatpush1.msra.mxu0 0.0
      %2156 = vmatprep.subr.mxu0 0.0
      %2157 = vmatpush1.msra.mxu0 0.0
      %2158 = vmatprep.subr.mxu0 0.0
      %2159 = vmatpush1.msra.mxu0 0.0
      %2160 = vmatprep.subr.mxu0 0.0
      %2161 = vmatpush1.msra.mxu0 0.0
      %2162 = vmatprep.subr.mxu0 0.0
      %2163 = vmatpush1.msra.mxu0 0.0
      %2164 = vmatprep.subr.mxu0 0.0
      %2165 = vmatpush1.msra.mxu0 0.0
      %2166 = vmatprep.subr.mxu0 0.0
      %2167 = vmatpush1.msra.mxu0 0.0
      %2168 = vmatprep.subr.mxu0 0.0
      %2169 = vmatpush1.msra.mxu0 0.0
      %2170 = vmatprep.subr.mxu0 0.0
      %2171 = vmatpush1.msra.mxu0 0.0
      %2172 = vmatprep.subr.mxu0 0.0
      %2173 = vmatpush1.msra.mxu0 0.0
      %2174 = vmatprep.subr.mxu0 0.0
      %2175 = vmatpush1.msra.mxu0 0.0
      %2176 = vmatprep.subr.mxu0 0.0
      %2177 = vmatpush1.msra.mxu0 0.0
      %2178 = vmatprep.subr.mxu0 0.0
      %2179 = vmatpush1.msra.mxu0 0.0
      %2180 = vmatprep.subr.mxu0 0.0
      %2181 = vmatpush1.msra.mxu0 0.0
      %2182 = vmatprep.subr.mxu0 0.0
      %2183 = vmatpush1.msra.mxu0 0.0
      %2184 = vmatprep.subr.mxu0 0.0
      %2185 = vmatpush1.msra.mxu0 0.0
      %2186 = vmatprep.subr.mxu0 0.0
      %2187 = vmatpush1.msra.mxu0 0.0
      %2188 = vmatprep.subr.mxu0 0.0
      %2189 = vmatpush1.msra.mxu0 0.0
      %2190 = vmatprep.subr.mxu0 0.0
      %2191 = vmatpush1.msra.mxu0 0.0
      %2192 = vmatprep.subr.mxu0 0.0
      %2193 = vmatpush1.msra.mxu0 0.0
      %2194 = vmatprep.subr.mxu0 0.0
      %2195 = vmatpush1.msra.mxu0 0.0
      %2196 = vmatprep.subr.mxu0 0.0
      %2197 = vmatpush1.msra.mxu0 0.0
      %2198 = vmatprep.subr.mxu0 0.0
      %2199 = vmatpush1.msra.mxu0 0.0
      %2200 = vmatprep.mubr.f32.mxu0 0.0
      %2201 = vmatmul.mubr.f32.gmra.mrb[0].mxu0 %v2134
      %v2202 = vpop.f32.mrb[0].mxu0
      %v2203 = vadd.f32 0.0, %v2202
      %v2204 = vpop.f32.mrb[0].mxu0
      %2205 = vdwg.mxu0
      %v2207 = vsel %vm1256, %v907, 0
      %2209 = vmatprep.subr.mxu0 0.0
      %2210 = vmatpush1.msra.mxu0 %v1232
      %2211 = vmatprep.subr.mxu0 0.0
      %2212 = vmatpush1.msra.mxu0 %v1233
      %2213 = vmatprep.subr.mxu0 0.0
      %2214 = vmatpush1.msra.mxu0 %v1234
      %2215 = vmatprep.subr.mxu0 0.0
      %2216 = vmatpush1.msra.mxu0 %v1235
      %2217 = vmatprep.subr.mxu0 0.0
      %2218 = vmatpush1.msra.mxu0 %v1236
      %2219 = vmatprep.subr.mxu0 0.0
      %2220 = vmatpush1.msra.mxu0 %v1237
      %2221 = vmatprep.subr.mxu0 0.0
      %2222 = vmatpush1.msra.mxu0 %v1238
      %2223 = vmatprep.subr.mxu0 0.0
      %2224 = vmatpush1.msra.mxu0 %v1239
      %2225 = vmatprep.subr.mxu0 0.0
      %2226 = vmatpush1.msra.mxu0 0.0
      %2227 = vmatprep.subr.mxu0 0.0
      %2228 = vmatpush1.msra.mxu0 0.0
      %2229 = vmatprep.subr.mxu0 0.0
      %2230 = vmatpush1.msra.mxu0 0.0
      %2231 = vmatprep.subr.mxu0 0.0
      %2232 = vmatpush1.msra.mxu0 0.0
      %2233 = vmatprep.subr.mxu0 0.0
      %2234 = vmatpush1.msra.mxu0 0.0
      %2235 = vmatprep.subr.mxu0 0.0
      %2236 = vmatpush1.msra.mxu0 0.0
      %2237 = vmatprep.subr.mxu0 0.0
      %2238 = vmatpush1.msra.mxu0 0.0
      %2239 = vmatprep.subr.mxu0 0.0
      %2240 = vmatpush1.msra.mxu0 0.0
      %2241 = vmatprep.subr.mxu0 0.0
      %2242 = vmatpush1.msra.mxu0 0.0
      %2243 = vmatprep.subr.mxu0 0.0
      %2244 = vmatpush1.msra.mxu0 0.0
      %2245 = vmatprep.subr.mxu0 0.0
      %2246 = vmatpush1.msra.mxu0 0.0
      %2247 = vmatprep.subr.mxu0 0.0
      %2248 = vmatpush1.msra.mxu0 0.0
      %2249 = vmatprep.subr.mxu0 0.0
      %2250 = vmatpush1.msra.mxu0 0.0
      %2251 = vmatprep.subr.mxu0 0.0
      %2252 = vmatpush1.msra.mxu0 0.0
      %2253 = vmatprep.subr.mxu0 0.0
      %2254 = vmatpush1.msra.mxu0 0.0
      %2255 = vmatprep.subr.mxu0 0.0
      %2256 = vmatpush1.msra.mxu0 0.0
      %2257 = vmatprep.subr.mxu0 0.0
      %2258 = vmatpush1.msra.mxu0 0.0
      %2259 = vmatprep.subr.mxu0 0.0
      %2260 = vmatpush1.msra.mxu0 0.0
      %2261 = vmatprep.subr.mxu0 0.0
      %2262 = vmatpush1.msra.mxu0 0.0
      %2263 = vmatprep.subr.mxu0 0.0
      %2264 = vmatpush1.msra.mxu0 0.0
      %2265 = vmatprep.subr.mxu0 0.0
      %2266 = vmatpush1.msra.mxu0 0.0
      %2267 = vmatprep.subr.mxu0 0.0
      %2268 = vmatpush1.msra.mxu0 0.0
      %2269 = vmatprep.subr.mxu0 0.0
      %2270 = vmatpush1.msra.mxu0 0.0
      %2271 = vmatprep.subr.mxu0 0.0
      %2272 = vmatpush1.msra.mxu0 0.0
      %2273 = vmatprep.mubr.f32.mxu0 0.0
      %2274 = vmatmul.mubr.f32.gmra.mrb[0].mxu0 %v2207
      %v2275 = vpop.f32.mrb[0].mxu0
      %v2276 = vadd.f32 0.0, %v2275
      %v2277 = vpop.f32.mrb[0].mxu0
      %2278 = vdwg.mxu0
      %v2280 = vsel %vm1256, %v908, 0
      %2282 = vmatprep.subr.mxu0 0.0
      %2283 = vmatpush1.msra.mxu0 %v1240
      %2284 = vmatprep.subr.mxu0 0.0
      %2285 = vmatpush1.msra.mxu0 %v1241
      %2286 = vmatprep.subr.mxu0 0.0
      %2287 = vmatpush1.msra.mxu0 %v1242
      %2288 = vmatprep.subr.mxu0 0.0
      %2289 = vmatpush1.msra.mxu0 %v1243
      %2290 = vmatprep.subr.mxu0 0.0
      %2291 = vmatpush1.msra.mxu0 %v1244
      %2292 = vmatprep.subr.mxu0 0.0
      %2293 = vmatpush1.msra.mxu0 %v1245
      %2294 = vmatprep.subr.mxu0 0.0
      %2295 = vmatpush1.msra.mxu0 %v1246
      %2296 = vmatprep.subr.mxu0 0.0
      %2297 = vmatpush1.msra.mxu0 %v1247
      %2298 = vmatprep.subr.mxu0 0.0
      %2299 = vmatpush1.msra.mxu0 0.0
      %2300 = vmatprep.subr.mxu0 0.0
      %2301 = vmatpush1.msra.mxu0 0.0
      %2302 = vmatprep.subr.mxu0 0.0
      %2303 = vmatpush1.msra.mxu0 0.0
      %2304 = vmatprep.subr.mxu0 0.0
      %2305 = vmatpush1.msra.mxu0 0.0
      %2306 = vmatprep.subr.mxu0 0.0
      %2307 = vmatpush1.msra.mxu0 0.0
      %2308 = vmatprep.subr.mxu0 0.0
      %2309 = vmatpush1.msra.mxu0 0.0
      %2310 = vmatprep.subr.mxu0 0.0
      %2311 = vmatpush1.msra.mxu0 0.0
      %2312 = vmatprep.subr.mxu0 0.0
      %2313 = vmatpush1.msra.mxu0 0.0
      %2314 = vmatprep.subr.mxu0 0.0
      %2315 = vmatpush1.msra.mxu0 0.0
      %2316 = vmatprep.subr.mxu0 0.0
      %2317 = vmatpush1.msra.mxu0 0.0
      %2318 = vmatprep.subr.mxu0 0.0
      %2319 = vmatpush1.msra.mxu0 0.0
      %2320 = vmatprep.subr.mxu0 0.0
      %2321 = vmatpush1.msra.mxu0 0.0
      %2322 = vmatprep.subr.mxu0 0.0
      %2323 = vmatpush1.msra.mxu0 0.0
      %2324 = vmatprep.subr.mxu0 0.0
      %2325 = vmatpush1.msra.mxu0 0.0
      %2326 = vmatprep.subr.mxu0 0.0
      %2327 = vmatpush1.msra.mxu0 0.0
      %2328 = vmatprep.subr.mxu0 0.0
      %2329 = vmatpush1.msra.mxu0 0.0
      %2330 = vmatprep.subr.mxu0 0.0
      %2331 = vmatpush1.msra.mxu0 0.0
      %2332 = vmatprep.subr.mxu0 0.0
      %2333 = vmatpush1.msra.mxu0 0.0
      %2334 = vmatprep.subr.mxu0 0.0
      %2335 = vmatpush1.msra.mxu0 0.0
      %2336 = vmatprep.subr.mxu0 0.0
      %2337 = vmatpush1.msra.mxu0 0.0
      %2338 = vmatprep.subr.mxu0 0.0
      %2339 = vmatpush1.msra.mxu0 0.0
      %2340 = vmatprep.subr.mxu0 0.0
      %2341 = vmatpush1.msra.mxu0 0.0
      %2342 = vmatprep.subr.mxu0 0.0
      %2343 = vmatpush1.msra.mxu0 0.0
      %2344 = vmatprep.subr.mxu0 0.0
      %2345 = vmatpush1.msra.mxu0 0.0
      %2346 = vmatprep.mubr.f32.mxu0 0.0
      %2347 = vmatmul.mubr.f32.gmra.mrb[0].mxu0 %v2280
      %v2348 = vpop.f32.mrb[0].mxu0
      %v2349 = vadd.f32 0.0, %v2348
      %v2350 = vpop.f32.mrb[0].mxu0
      %2351 = vdwg.mxu0
      %v2353 = vsel %vm1256, %v909, 0
      %2355 = vmatprep.subr.mxu0 0.0
      %2356 = vmatpush1.msra.mxu0 %v1248
      %2357 = vmatprep.subr.mxu0 0.0
      %2358 = vmatpush1.msra.mxu0 %v1249
      %2359 = vmatprep.subr.mxu0 0.0
      %2360 = vmatpush1.msra.mxu0 %v1250
      %2361 = vmatprep.subr.mxu0 0.0
      %2362 = vmatpush1.msra.mxu0 %v1251
      %2363 = vmatprep.subr.mxu0 0.0
      %2364 = vmatpush1.msra.mxu0 %v1252
      %2365 = vmatprep.subr.mxu0 0.0
      %2366 = vmatpush1.msra.mxu0 %v1253
      %2367 = vmatprep.subr.mxu0 0.0
      %2368 = vmatpush1.msra.mxu0 %v1254
      %2369 = vmatprep.subr.mxu0 0.0
      %2370 = vmatpush1.msra.mxu0 %v1255
      %2371 = vmatprep.subr.mxu0 0.0
      %2372 = vmatpush1.msra.mxu0 0.0
      %2373 = vmatprep.subr.mxu0 0.0
      %2374 = vmatpush1.msra.mxu0 0.0
      %2375 = vmatprep.subr.mxu0 0.0
      %2376 = vmatpush1.msra.mxu0 0.0
      %2377 = vmatprep.subr.mxu0 0.0
      %2378 = vmatpush1.msra.mxu0 0.0
      %2379 = vmatprep.subr.mxu0 0.0
      %2380 = vmatpush1.msra.mxu0 0.0
      %2381 = vmatprep.subr.mxu0 0.0
      %2382 = vmatpush1.msra.mxu0 0.0
      %2383 = vmatprep.subr.mxu0 0.0
      %2384 = vmatpush1.msra.mxu0 0.0
      %2385 = vmatprep.subr.mxu0 0.0
      %2386 = vmatpush1.msra.mxu0 0.0
      %2387 = vmatprep.subr.mxu0 0.0
      %2388 = vmatpush1.msra.mxu0 0.0
      %2389 = vmatprep.subr.mxu0 0.0
      %2390 = vmatpush1.msra.mxu0 0.0
      %2391 = vmatprep.subr.mxu0 0.0
      %2392 = vmatpush1.msra.mxu0 0.0
      %2393 = vmatprep.subr.mxu0 0.0
      %2394 = vmatpush1.msra.mxu0 0.0
      %2395 = vmatprep.subr.mxu0 0.0
      %2396 = vmatpush1.msra.mxu0 0.0
      %2397 = vmatprep.subr.mxu0 0.0
      %2398 = vmatpush1.msra.mxu0 0.0
      %2399 = vmatprep.subr.mxu0 0.0
      %2400 = vmatpush1.msra.mxu0 0.0
      %2401 = vmatprep.subr.mxu0 0.0
      %2402 = vmatpush1.msra.mxu0 0.0
      %2403 = vmatprep.subr.mxu0 0.0
      %2404 = vmatpush1.msra.mxu0 0.0
      %2405 = vmatprep.subr.mxu0 0.0
      %2406 = vmatpush1.msra.mxu0 0.0
      %2407 = vmatprep.subr.mxu0 0.0
      %2408 = vmatpush1.msra.mxu0 0.0
      %2409 = vmatprep.subr.mxu0 0.0
      %2410 = vmatpush1.msra.mxu0 0.0
      %2411 = vmatprep.subr.mxu0 0.0
      %2412 = vmatpush1.msra.mxu0 0.0
      %2413 = vmatprep.subr.mxu0 0.0
      %2414 = vmatpush1.msra.mxu0 0.0
      %2415 = vmatprep.subr.mxu0 0.0
      %2416 = vmatpush1.msra.mxu0 0.0
      %2417 = vmatprep.subr.mxu0 0.0
      %2418 = vmatpush1.msra.mxu0 0.0
      %2419 = vmatprep.mubr.f32.mxu0 0.0
      %2420 = vmatmul.mubr.f32.gmra.mrb[0].mxu0 %v2353
      %v2421 = vpop.f32.mrb[0].mxu0
      %v2422 = vadd.f32 0.0, %v2421
      %v2423 = vpop.f32.mrb[0].mxu0
      %2424 = vdwg.mxu0
      %vm2425 = vcmask 277504
      %v2426 = vsel %vm2425, %v1327, 0.0
      %v2427 = vsel %vm2425, %v1400, 0.0
      %v2428 = vadd.f32 %v2426, %v2427
      %v2429 = vsel %vm2425, %v1473, 0.0
      %v2430 = vadd.f32 %v2428, %v2429
      %v2431 = vsel %vm2425, %v1546, 0.0
      %v2432 = vadd.f32 %v2430, %v2431
      %v2433 = vsel %vm2425, %v1619, 0.0
      %v2434 = vadd.f32 %v2432, %v2433
      %v2435 = vsel %vm2425, %v1692, 0.0
      %v2436 = vadd.f32 %v2434, %v2435
      %v2437 = vsel %vm2425, %v1765, 0.0
      %v2438 = vadd.f32 %v2436, %v2437
      %v2439 = vsel %vm2425, %v1838, 0.0
      %v2440 = vadd.f32 %v2438, %v2439
      %v2441 = vsel %vm2425, %v1911, 0.0
      %v2442 = vadd.f32 %v2440, %v2441
      %v2443 = vsel %vm2425, %v1984, 0.0
      %v2444 = vadd.f32 %v2442, %v2443
      %v2445 = vsel %vm2425, %v2057, 0.0
      %v2446 = vadd.f32 %v2444, %v2445
      %v2447 = vsel %vm2425, %v2130, 0.0
      %v2448 = vadd.f32 %v2446, %v2447
      %v2449 = vsel %vm2425, %v2203, 0.0
      %v2450 = vadd.f32 %v2448, %v2449
      %v2451 = vsel %vm2425, %v2276, 0.0
      %v2452 = vadd.f32 %v2450, %v2451
      %v2453 = vsel %vm2425, %v2349, 0.0
      %v2454 = vadd.f32 %v2452, %v2453
      %v2455 = vsel %vm2425, %v2422, 0.0
      %v2456 = vadd.f32 %v2454, %v2455
      %v2457 = vld [vmem:[%s8] sm:$0xff]
      %v2458 = vld [vmem:[%s8 + $0x8] sm:$0xff]
      %v2459 = vld [vmem:[%s8 + $0x10] sm:$0xff]
      %v2460 = vld [vmem:[%s8 + $0x18] sm:$0xff]
      %v2461 = vld [vmem:[%s8 + $0x20] sm:$0xff]
      %v2462 = vld [vmem:[%s8 + $0x28] sm:$0xff]
      %v2463 = vld [vmem:[%s8 + $0x30] sm:$0xff]
      %v2464 = vld [vmem:[%s8 + $0x38] sm:$0xff]
      %v2465 = vld [vmem:[%s8 + $0x40] sm:$0xff]
      %v2466 = vld [vmem:[%s8 + $0x48] sm:$0xff]
      %v2467 = vld [vmem:[%s8 + $0x50] sm:$0xff]
      %v2468 = vld [vmem:[%s8 + $0x58] sm:$0xff]
      %v2469 = vld [vmem:[%s8 + $0x60] sm:$0xff]
      %v2470 = vld [vmem:[%s8 + $0x68] sm:$0xff]
      %v2471 = vld [vmem:[%s8 + $0x70] sm:$0xff]
      %v2472 = vld [vmem:[%s8 + $0x78] sm:$0xff]
      %v2473 = vld [vmem:[%s8 + $0x80] sm:$0xff]
      %v2474 = vld [vmem:[%s8 + $0x88] sm:$0xff]
      %v2475 = vld [vmem:[%s8 + $0x90] sm:$0xff]
      %v2476 = vld [vmem:[%s8 + $0x98] sm:$0xff]
      %v2477 = vld [vmem:[%s8 + $0xa0] sm:$0xff]
      %v2478 = vld [vmem:[%s8 + $0xa8] sm:$0xff]
      %v2479 = vld [vmem:[%s8 + $0xb0] sm:$0xff]
      %v2480 = vld [vmem:[%s8 + $0xb8] sm:$0xff]
      %v2481 = vld [vmem:[%s8 + $0xc0] sm:$0xff]
      %v2482 = vld [vmem:[%s8 + $0xc8] sm:$0xff]
      %v2483 = vld [vmem:[%s8 + $0xd0] sm:$0xff]
      %v2484 = vld [vmem:[%s8 + $0xd8] sm:$0xff]
      %v2485 = vld [vmem:[%s8 + $0xe0] sm:$0xff]
      %v2486 = vld [vmem:[%s8 + $0xe8] sm:$0xff]
      %v2487 = vld [vmem:[%s8 + $0xf0] sm:$0xff]
      %v2488 = vld [vmem:[%s8 + $0xf8] sm:$0xff]
      %v2489 = vld [vmem:[%s8 + $0x100] sm:$0xff]
      %v2490 = vld [vmem:[%s8 + $0x108] sm:$0xff]
      %v2491 = vld [vmem:[%s8 + $0x110] sm:$0xff]
      %v2492 = vld [vmem:[%s8 + $0x118] sm:$0xff]
      %v2493 = vld [vmem:[%s8 + $0x120] sm:$0xff]
      %v2494 = vld [vmem:[%s8 + $0x128] sm:$0xff]
      %v2495 = vld [vmem:[%s8 + $0x130] sm:$0xff]
      %v2496 = vld [vmem:[%s8 + $0x138] sm:$0xff]
      %v2497 = vld [vmem:[%s8 + $0x140] sm:$0xff]
      %v2498 = vld [vmem:[%s8 + $0x148] sm:$0xff]
      %v2499 = vld [vmem:[%s8 + $0x150] sm:$0xff]
      %v2500 = vld [vmem:[%s8 + $0x158] sm:$0xff]
      %v2501 = vld [vmem:[%s8 + $0x160] sm:$0xff]
      %v2502 = vld [vmem:[%s8 + $0x168] sm:$0xff]
      %v2503 = vld [vmem:[%s8 + $0x170] sm:$0xff]
      %v2504 = vld [vmem:[%s8 + $0x178] sm:$0xff]
      %v2505 = vld [vmem:[%s8 + $0x180] sm:$0xff]
      %v2506 = vld [vmem:[%s8 + $0x188] sm:$0xff]
      %v2507 = vld [vmem:[%s8 + $0x190] sm:$0xff]
      %v2508 = vld [vmem:[%s8 + $0x198] sm:$0xff]
      %v2509 = vld [vmem:[%s8 + $0x1a0] sm:$0xff]
      %v2510 = vld [vmem:[%s8 + $0x1a8] sm:$0xff]
      %v2511 = vld [vmem:[%s8 + $0x1b0] sm:$0xff]
      %v2512 = vld [vmem:[%s8 + $0x1b8] sm:$0xff]
      %v2513 = vld [vmem:[%s8 + $0x1c0] sm:$0xff]
      %v2514 = vld [vmem:[%s8 + $0x1c8] sm:$0xff]
      %v2515 = vld [vmem:[%s8 + $0x1d0] sm:$0xff]
      %v2516 = vld [vmem:[%s8 + $0x1d8] sm:$0xff]
      %v2517 = vld [vmem:[%s8 + $0x1e0] sm:$0xff]
      %v2518 = vld [vmem:[%s8 + $0x1e8] sm:$0xff]
      %v2519 = vld [vmem:[%s8 + $0x1f0] sm:$0xff]
      %v2520 = vld [vmem:[%s8 + $0x1f8] sm:$0xff]
      %v2521 = vld [vmem:[%s8 + $0x200] sm:$0xff]
      %v2522 = vld [vmem:[%s8 + $0x208] sm:$0xff]
      %v2523 = vld [vmem:[%s8 + $0x210] sm:$0xff]
      %v2524 = vld [vmem:[%s8 + $0x218] sm:$0xff]
      %v2525 = vld [vmem:[%s8 + $0x220] sm:$0xff]
      %v2526 = vld [vmem:[%s8 + $0x228] sm:$0xff]
      %v2527 = vld [vmem:[%s8 + $0x230] sm:$0xff]
      %v2528 = vld [vmem:[%s8 + $0x238] sm:$0xff]
      %v2529 = vld [vmem:[%s8 + $0x240] sm:$0xff]
      %v2530 = vld [vmem:[%s8 + $0x248] sm:$0xff]
      %v2531 = vld [vmem:[%s8 + $0x250] sm:$0xff]
      %v2532 = vld [vmem:[%s8 + $0x258] sm:$0xff]
      %v2533 = vld [vmem:[%s8 + $0x260] sm:$0xff]
      %v2534 = vld [vmem:[%s8 + $0x268] sm:$0xff]
      %v2535 = vld [vmem:[%s8 + $0x270] sm:$0xff]
      %v2536 = vld [vmem:[%s8 + $0x278] sm:$0xff]
      %v2537 = vld [vmem:[%s8 + $0x280] sm:$0xff]
      %v2538 = vld [vmem:[%s8 + $0x288] sm:$0xff]
      %v2539 = vld [vmem:[%s8 + $0x290] sm:$0xff]
      %v2540 = vld [vmem:[%s8 + $0x298] sm:$0xff]
      %v2541 = vld [vmem:[%s8 + $0x2a0] sm:$0xff]
      %v2542 = vld [vmem:[%s8 + $0x2a8] sm:$0xff]
      %v2543 = vld [vmem:[%s8 + $0x2b0] sm:$0xff]
      %v2544 = vld [vmem:[%s8 + $0x2b8] sm:$0xff]
      %v2545 = vld [vmem:[%s8 + $0x2c0] sm:$0xff]
      %v2546 = vld [vmem:[%s8 + $0x2c8] sm:$0xff]
      %v2547 = vld [vmem:[%s8 + $0x2d0] sm:$0xff]
      %v2548 = vld [vmem:[%s8 + $0x2d8] sm:$0xff]
      %v2549 = vld [vmem:[%s8 + $0x2e0] sm:$0xff]
      %v2550 = vld [vmem:[%s8 + $0x2e8] sm:$0xff]
      %v2551 = vld [vmem:[%s8 + $0x2f0] sm:$0xff]
      %v2552 = vld [vmem:[%s8 + $0x2f8] sm:$0xff]
      %v2553 = vld [vmem:[%s8 + $0x300] sm:$0xff]
      %v2554 = vld [vmem:[%s8 + $0x308] sm:$0xff]
      %v2555 = vld [vmem:[%s8 + $0x310] sm:$0xff]
      %v2556 = vld [vmem:[%s8 + $0x318] sm:$0xff]
      %v2557 = vld [vmem:[%s8 + $0x320] sm:$0xff]
      %v2558 = vld [vmem:[%s8 + $0x328] sm:$0xff]
      %v2559 = vld [vmem:[%s8 + $0x330] sm:$0xff]
      %v2560 = vld [vmem:[%s8 + $0x338] sm:$0xff]
      %v2561 = vld [vmem:[%s8 + $0x340] sm:$0xff]
      %v2562 = vld [vmem:[%s8 + $0x348] sm:$0xff]
      %v2563 = vld [vmem:[%s8 + $0x350] sm:$0xff]
      %v2564 = vld [vmem:[%s8 + $0x358] sm:$0xff]
      %v2565 = vld [vmem:[%s8 + $0x360] sm:$0xff]
      %v2566 = vld [vmem:[%s8 + $0x368] sm:$0xff]
      %v2567 = vld [vmem:[%s8 + $0x370] sm:$0xff]
      %v2568 = vld [vmem:[%s8 + $0x378] sm:$0xff]
      %v2569 = vld [vmem:[%s8 + $0x380] sm:$0xff]
      %v2570 = vld [vmem:[%s8 + $0x388] sm:$0xff]
      %v2571 = vld [vmem:[%s8 + $0x390] sm:$0xff]
      %v2572 = vld [vmem:[%s8 + $0x398] sm:$0xff]
      %v2573 = vld [vmem:[%s8 + $0x3a0] sm:$0xff]
      %v2574 = vld [vmem:[%s8 + $0x3a8] sm:$0xff]
      %v2575 = vld [vmem:[%s8 + $0x3b0] sm:$0xff]
      %v2576 = vld [vmem:[%s8 + $0x3b8] sm:$0xff]
      %v2577 = vld [vmem:[%s8 + $0x3c0] sm:$0xff]
      %v2578 = vld [vmem:[%s8 + $0x3c8] sm:$0xff]
      %v2579 = vld [vmem:[%s8 + $0x3d0] sm:$0xff]
      %v2580 = vld [vmem:[%s8 + $0x3d8] sm:$0xff]
      %v2581 = vld [vmem:[%s8 + $0x3e0] sm:$0xff]
      %v2582 = vld [vmem:[%s8 + $0x3e8] sm:$0xff]
      %v2583 = vld [vmem:[%s8 + $0x3f0] sm:$0xff]
      %v2584 = vld [vmem:[%s8 + $0x3f8] sm:$0xff]
      %v2586 = vsel %vm1256, %v1050, 0
      %2588 = vmatprep.subr.mxu0 0.0
      %2589 = vmatpush1.msra.mxu0 %v2457
      %2590 = vmatprep.subr.mxu0 0.0
      %2591 = vmatpush1.msra.mxu0 %v2458
      %2592 = vmatprep.subr.mxu0 0.0
      %2593 = vmatpush1.msra.mxu0 %v2459
      %2594 = vmatprep.subr.mxu0 0.0
      %2595 = vmatpush1.msra.mxu0 %v2460
      %2596 = vmatprep.subr.mxu0 0.0
      %2597 = vmatpush1.msra.mxu0 %v2461
      %2598 = vmatprep.subr.mxu0 0.0
      %2599 = vmatpush1.msra.mxu0 %v2462
      %2600 = vmatprep.subr.mxu0 0.0
      %2601 = vmatpush1.msra.mxu0 %v2463
      %2602 = vmatprep.subr.mxu0 0.0
      %2603 = vmatpush1.msra.mxu0 %v2464
      %2604 = vmatprep.subr.mxu0 0.0
      %2605 = vmatpush1.msra.mxu0 0.0
      %2606 = vmatprep.subr.mxu0 0.0
      %2607 = vmatpush1.msra.mxu0 0.0
      %2608 = vmatprep.subr.mxu0 0.0
      %2609 = vmatpush1.msra.mxu0 0.0
      %2610 = vmatprep.subr.mxu0 0.0
      %2611 = vmatpush1.msra.mxu0 0.0
      %2612 = vmatprep.subr.mxu0 0.0
      %2613 = vmatpush1.msra.mxu0 0.0
      %2614 = vmatprep.subr.mxu0 0.0
      %2615 = vmatpush1.msra.mxu0 0.0
      %2616 = vmatprep.subr.mxu0 0.0
      %2617 = vmatpush1.msra.mxu0 0.0
      %2618 = vmatprep.subr.mxu0 0.0
      %2619 = vmatpush1.msra.mxu0 0.0
      %2620 = vmatprep.subr.mxu0 0.0
      %2621 = vmatpush1.msra.mxu0 0.0
      %2622 = vmatprep.subr.mxu0 0.0
      %2623 = vmatpush1.msra.mxu0 0.0
      %2624 = vmatprep.subr.mxu0 0.0
      %2625 = vmatpush1.msra.mxu0 0.0
      %2626 = vmatprep.subr.mxu0 0.0
      %2627 = vmatpush1.msra.mxu0 0.0
      %2628 = vmatprep.subr.mxu0 0.0
      %2629 = vmatpush1.msra.mxu0 0.0
      %2630 = vmatprep.subr.mxu0 0.0
      %2631 = vmatpush1.msra.mxu0 0.0
      %2632 = vmatprep.subr.mxu0 0.0
      %2633 = vmatpush1.msra.mxu0 0.0
      %2634 = vmatprep.subr.mxu0 0.0
      %2635 = vmatpush1.msra.mxu0 0.0
      %2636 = vmatprep.subr.mxu0 0.0
      %2637 = vmatpush1.msra.mxu0 0.0
      %2638 = vmatprep.subr.mxu0 0.0
      %2639 = vmatpush1.msra.mxu0 0.0
      %2640 = vmatprep.subr.mxu0 0.0
      %2641 = vmatpush1.msra.mxu0 0.0
      %2642 = vmatprep.subr.mxu0 0.0
      %2643 = vmatpush1.msra.mxu0 0.0
      %2644 = vmatprep.subr.mxu0 0.0
      %2645 = vmatpush1.msra.mxu0 0.0
      %2646 = vmatprep.subr.mxu0 0.0
      %2647 = vmatpush1.msra.mxu0 0.0
      %2648 = vmatprep.subr.mxu0 0.0
      %2649 = vmatpush1.msra.mxu0 0.0
      %2650 = vmatprep.subr.mxu0 0.0
      %2651 = vmatpush1.msra.mxu0 0.0
      %2652 = vmatprep.mubr.f32.mxu0 0.0
      %2653 = vmatmul.mubr.f32.gmra.mrb[0].mxu0 %v2586
      %v2654 = vpop.f32.mrb[0].mxu0
      %v2655 = vadd.f32 0.0, %v2654
      %v2656 = vpop.f32.mrb[0].mxu0
      %2657 = vdwg.mxu0
      %v2659 = vsel %vm1256, %v1055, 0
      %2661 = vmatprep.subr.mxu0 0.0
      %2662 = vmatpush1.msra.mxu0 %v2465
      %2663 = vmatprep.subr.mxu0 0.0
      %2664 = vmatpush1.msra.mxu0 %v2466
      %2665 = vmatprep.subr.mxu0 0.0
      %2666 = vmatpush1.msra.mxu0 %v2467
      %2667 = vmatprep.subr.mxu0 0.0
      %2668 = vmatpush1.msra.mxu0 %v2468
      %2669 = vmatprep.subr.mxu0 0.0
      %2670 = vmatpush1.msra.mxu0 %v2469
      %2671 = vmatprep.subr.mxu0 0.0
      %2672 = vmatpush1.msra.mxu0 %v2470
      %2673 = vmatprep.subr.mxu0 0.0
      %2674 = vmatpush1.msra.mxu0 %v2471
      %2675 = vmatprep.subr.mxu0 0.0
      %2676 = vmatpush1.msra.mxu0 %v2472
      %2677 = vmatprep.subr.mxu0 0.0
      %2678 = vmatpush1.msra.mxu0 0.0
      %2679 = vmatprep.subr.mxu0 0.0
      %2680 = vmatpush1.msra.mxu0 0.0
      %2681 = vmatprep.subr.mxu0 0.0
      %2682 = vmatpush1.msra.mxu0 0.0
      %2683 = vmatprep.subr.mxu0 0.0
      %2684 = vmatpush1.msra.mxu0 0.0
      %2685 = vmatprep.subr.mxu0 0.0
      %2686 = vmatpush1.msra.mxu0 0.0
      %2687 = vmatprep.subr.mxu0 0.0
      %2688 = vmatpush1.msra.mxu0 0.0
      %2689 = vmatprep.subr.mxu0 0.0
      %2690 = vmatpush1.msra.mxu0 0.0
      %2691 = vmatprep.subr.mxu0 0.0
      %2692 = vmatpush1.msra.mxu0 0.0
      %2693 = vmatprep.subr.mxu0 0.0
      %2694 = vmatpush1.msra.mxu0 0.0
      %2695 = vmatprep.subr.mxu0 0.0
      %2696 = vmatpush1.msra.mxu0 0.0
      %2697 = vmatprep.subr.mxu0 0.0
      %2698 = vmatpush1.msra.mxu0 0.0
      %2699 = vmatprep.subr.mxu0 0.0
      %2700 = vmatpush1.msra.mxu0 0.0
      %2701 = vmatprep.subr.mxu0 0.0
      %2702 = vmatpush1.msra.mxu0 0.0
      %2703 = vmatprep.subr.mxu0 0.0
      %2704 = vmatpush1.msra.mxu0 0.0
      %2705 = vmatprep.subr.mxu0 0.0
      %2706 = vmatpush1.msra.mxu0 0.0
      %2707 = vmatprep.subr.mxu0 0.0
      %2708 = vmatpush1.msra.mxu0 0.0
      %2709 = vmatprep.subr.mxu0 0.0
      %2710 = vmatpush1.msra.mxu0 0.0
      %2711 = vmatprep.subr.mxu0 0.0
      %2712 = vmatpush1.msra.mxu0 0.0
      %2713 = vmatprep.subr.mxu0 0.0
      %2714 = vmatpush1.msra.mxu0 0.0
      %2715 = vmatprep.subr.mxu0 0.0
      %2716 = vmatpush1.msra.mxu0 0.0
      %2717 = vmatprep.subr.mxu0 0.0
      %2718 = vmatpush1.msra.mxu0 0.0
      %2719 = vmatprep.subr.mxu0 0.0
      %2720 = vmatpush1.msra.mxu0 0.0
      %2721 = vmatprep.subr.mxu0 0.0
      %2722 = vmatpush1.msra.mxu0 0.0
      %2723 = vmatprep.subr.mxu0 0.0
      %2724 = vmatpush1.msra.mxu0 0.0
      %2725 = vmatprep.mubr.f32.mxu0 0.0
      %2726 = vmatmul.mubr.f32.gmra.mrb[0].mxu0 %v2659
      %v2727 = vpop.f32.mrb[0].mxu0
      %v2728 = vadd.f32 0.0, %v2727
      %v2729 = vpop.f32.mrb[0].mxu0
      %2730 = vdwg.mxu0
      %v2732 = vsel %vm1256, %v1060, 0
      %2734 = vmatprep.subr.mxu0 0.0
      %2735 = vmatpush1.msra.mxu0 %v2473
      %2736 = vmatprep.subr.mxu0 0.0
      %2737 = vmatpush1.msra.mxu0 %v2474
      %2738 = vmatprep.subr.mxu0 0.0
      %2739 = vmatpush1.msra.mxu0 %v2475
      %2740 = vmatprep.subr.mxu0 0.0
      %2741 = vmatpush1.msra.mxu0 %v2476
      %2742 = vmatprep.subr.mxu0 0.0
      %2743 = vmatpush1.msra.mxu0 %v2477
      %2744 = vmatprep.subr.mxu0 0.0
      %2745 = vmatpush1.msra.mxu0 %v2478
      %2746 = vmatprep.subr.mxu0 0.0
      %2747 = vmatpush1.msra.mxu0 %v2479
      %2748 = vmatprep.subr.mxu0 0.0
      %2749 = vmatpush1.msra.mxu0 %v2480
      %2750 = vmatprep.subr.mxu0 0.0
      %2751 = vmatpush1.msra.mxu0 0.0
      %2752 = vmatprep.subr.mxu0 0.0
      %2753 = vmatpush1.msra.mxu0 0.0
      %2754 = vmatprep.subr.mxu0 0.0
      %2755 = vmatpush1.msra.mxu0 0.0
      %2756 = vmatprep.subr.mxu0 0.0
      %2757 = vmatpush1.msra.mxu0 0.0
      %2758 = vmatprep.subr.mxu0 0.0
      %2759 = vmatpush1.msra.mxu0 0.0
      %2760 = vmatprep.subr.mxu0 0.0
      %2761 = vmatpush1.msra.mxu0 0.0
      %2762 = vmatprep.subr.mxu0 0.0
      %2763 = vmatpush1.msra.mxu0 0.0
      %2764 = vmatprep.subr.mxu0 0.0
      %2765 = vmatpush1.msra.mxu0 0.0
      %2766 = vmatprep.subr.mxu0 0.0
      %2767 = vmatpush1.msra.mxu0 0.0
      %2768 = vmatprep.subr.mxu0 0.0
      %2769 = vmatpush1.msra.mxu0 0.0
      %2770 = vmatprep.subr.mxu0 0.0
      %2771 = vmatpush1.msra.mxu0 0.0
      %2772 = vmatprep.subr.mxu0 0.0
      %2773 = vmatpush1.msra.mxu0 0.0
      %2774 = vmatprep.subr.mxu0 0.0
      %2775 = vmatpush1.msra.mxu0 0.0
      %2776 = vmatprep.subr.mxu0 0.0
      %2777 = vmatpush1.msra.mxu0 0.0
      %2778 = vmatprep.subr.mxu0 0.0
      %2779 = vmatpush1.msra.mxu0 0.0
      %2780 = vmatprep.subr.mxu0 0.0
      %2781 = vmatpush1.msra.mxu0 0.0
      %2782 = vmatprep.subr.mxu0 0.0
      %2783 = vmatpush1.msra.mxu0 0.0
      %2784 = vmatprep.subr.mxu0 0.0
      %2785 = vmatpush1.msra.mxu0 0.0
      %2786 = vmatprep.subr.mxu0 0.0
      %2787 = vmatpush1.msra.mxu0 0.0
      %2788 = vmatprep.subr.mxu0 0.0
      %2789 = vmatpush1.msra.mxu0 0.0
      %2790 = vmatprep.subr.mxu0 0.0
      %2791 = vmatpush1.msra.mxu0 0.0
      %2792 = vmatprep.subr.mxu0 0.0
      %2793 = vmatpush1.msra.mxu0 0.0
      %2794 = vmatprep.subr.mxu0 0.0
      %2795 = vmatpush1.msra.mxu0 0.0
      %2796 = vmatprep.subr.mxu0 0.0
      %2797 = vmatpush1.msra.mxu0 0.0
      %2798 = vmatprep.mubr.f32.mxu0 0.0
      %2799 = vmatmul.mubr.f32.gmra.mrb[0].mxu0 %v2732
      %v2800 = vpop.f32.mrb[0].mxu0
      %v2801 = vadd.f32 0.0, %v2800
      %v2802 = vpop.f32.mrb[0].mxu0
      %2803 = vdwg.mxu0
      %v2805 = vsel %vm1256, %v1065, 0
      %2807 = vmatprep.subr.mxu0 0.0
      %2808 = vmatpush1.msra.mxu0 %v2481
      %2809 = vmatprep.subr.mxu0 0.0
      %2810 = vmatpush1.msra.mxu0 %v2482
      %2811 = vmatprep.subr.mxu0 0.0
      %2812 = vmatpush1.msra.mxu0 %v2483
      %2813 = vmatprep.subr.mxu0 0.0
      %2814 = vmatpush1.msra.mxu0 %v2484
      %2815 = vmatprep.subr.mxu0 0.0
      %2816 = vmatpush1.msra.mxu0 %v2485
      %2817 = vmatprep.subr.mxu0 0.0
      %2818 = vmatpush1.msra.mxu0 %v2486
      %2819 = vmatprep.subr.mxu0 0.0
      %2820 = vmatpush1.msra.mxu0 %v2487
      %2821 = vmatprep.subr.mxu0 0.0
      %2822 = vmatpush1.msra.mxu0 %v2488
      %2823 = vmatprep.subr.mxu0 0.0
      %2824 = vmatpush1.msra.mxu0 0.0
      %2825 = vmatprep.subr.mxu0 0.0
      %2826 = vmatpush1.msra.mxu0 0.0
      %2827 = vmatprep.subr.mxu0 0.0
      %2828 = vmatpush1.msra.mxu0 0.0
      %2829 = vmatprep.subr.mxu0 0.0
      %2830 = vmatpush1.msra.mxu0 0.0
      %2831 = vmatprep.subr.mxu0 0.0
      %2832 = vmatpush1.msra.mxu0 0.0
      %2833 = vmatprep.subr.mxu0 0.0
      %2834 = vmatpush1.msra.mxu0 0.0
      %2835 = vmatprep.subr.mxu0 0.0
      %2836 = vmatpush1.msra.mxu0 0.0
      %2837 = vmatprep.subr.mxu0 0.0
      %2838 = vmatpush1.msra.mxu0 0.0
      %2839 = vmatprep.subr.mxu0 0.0
      %2840 = vmatpush1.msra.mxu0 0.0
      %2841 = vmatprep.subr.mxu0 0.0
      %2842 = vmatpush1.msra.mxu0 0.0
      %2843 = vmatprep.subr.mxu0 0.0
      %2844 = vmatpush1.msra.mxu0 0.0
      %2845 = vmatprep.subr.mxu0 0.0
      %2846 = vmatpush1.msra.mxu0 0.0
      %2847 = vmatprep.subr.mxu0 0.0
      %2848 = vmatpush1.msra.mxu0 0.0
      %2849 = vmatprep.subr.mxu0 0.0
      %2850 = vmatpush1.msra.mxu0 0.0
      %2851 = vmatprep.subr.mxu0 0.0
      %2852 = vmatpush1.msra.mxu0 0.0
      %2853 = vmatprep.subr.mxu0 0.0
      %2854 = vmatpush1.msra.mxu0 0.0
      %2855 = vmatprep.subr.mxu0 0.0
      %2856 = vmatpush1.msra.mxu0 0.0
      %2857 = vmatprep.subr.mxu0 0.0
      %2858 = vmatpush1.msra.mxu0 0.0
      %2859 = vmatprep.subr.mxu0 0.0
      %2860 = vmatpush1.msra.mxu0 0.0
      %2861 = vmatprep.subr.mxu0 0.0
      %2862 = vmatpush1.msra.mxu0 0.0
      %2863 = vmatprep.subr.mxu0 0.0
      %2864 = vmatpush1.msra.mxu0 0.0
      %2865 = vmatprep.subr.mxu0 0.0
      %2866 = vmatpush1.msra.mxu0 0.0
      %2867 = vmatprep.subr.mxu0 0.0
      %2868 = vmatpush1.msra.mxu0 0.0
      %2869 = vmatprep.subr.mxu0 0.0
      %2870 = vmatpush1.msra.mxu0 0.0
      %2871 = vmatprep.mubr.f32.mxu0 0.0
      %2872 = vmatmul.mubr.f32.gmra.mrb[0].mxu0 %v2805
      %v2873 = vpop.f32.mrb[0].mxu0
      %v2874 = vadd.f32 0.0, %v2873
      %v2875 = vpop.f32.mrb[0].mxu0
      %2876 = vdwg.mxu0
      %v2878 = vsel %vm1256, %v1070, 0
      %2880 = vmatprep.subr.mxu0 0.0
      %2881 = vmatpush1.msra.mxu0 %v2489
      %2882 = vmatprep.subr.mxu0 0.0
      %2883 = vmatpush1.msra.mxu0 %v2490
      %2884 = vmatprep.subr.mxu0 0.0
      %2885 = vmatpush1.msra.mxu0 %v2491
      %2886 = vmatprep.subr.mxu0 0.0
      %2887 = vmatpush1.msra.mxu0 %v2492
      %2888 = vmatprep.subr.mxu0 0.0
      %2889 = vmatpush1.msra.mxu0 %v2493
      %2890 = vmatprep.subr.mxu0 0.0
      %2891 = vmatpush1.msra.mxu0 %v2494
      %2892 = vmatprep.subr.mxu0 0.0
      %2893 = vmatpush1.msra.mxu0 %v2495
      %2894 = vmatprep.subr.mxu0 0.0
      %2895 = vmatpush1.msra.mxu0 %v2496
      %2896 = vmatprep.subr.mxu0 0.0
      %2897 = vmatpush1.msra.mxu0 0.0
      %2898 = vmatprep.subr.mxu0 0.0
      %2899 = vmatpush1.msra.mxu0 0.0
      %2900 = vmatprep.subr.mxu0 0.0
      %2901 = vmatpush1.msra.mxu0 0.0
      %2902 = vmatprep.subr.mxu0 0.0
      %2903 = vmatpush1.msra.mxu0 0.0
      %2904 = vmatprep.subr.mxu0 0.0
      %2905 = vmatpush1.msra.mxu0 0.0
      %2906 = vmatprep.subr.mxu0 0.0
      %2907 = vmatpush1.msra.mxu0 0.0
      %2908 = vmatprep.subr.mxu0 0.0
      %2909 = vmatpush1.msra.mxu0 0.0
      %2910 = vmatprep.subr.mxu0 0.0
      %2911 = vmatpush1.msra.mxu0 0.0
      %2912 = vmatprep.subr.mxu0 0.0
      %2913 = vmatpush1.msra.mxu0 0.0
      %2914 = vmatprep.subr.mxu0 0.0
      %2915 = vmatpush1.msra.mxu0 0.0
      %2916 = vmatprep.subr.mxu0 0.0
      %2917 = vmatpush1.msra.mxu0 0.0
      %2918 = vmatprep.subr.mxu0 0.0
      %2919 = vmatpush1.msra.mxu0 0.0
      %2920 = vmatprep.subr.mxu0 0.0
      %2921 = vmatpush1.msra.mxu0 0.0
      %2922 = vmatprep.subr.mxu0 0.0
      %2923 = vmatpush1.msra.mxu0 0.0
      %2924 = vmatprep.subr.mxu0 0.0
      %2925 = vmatpush1.msra.mxu0 0.0
      %2926 = vmatprep.subr.mxu0 0.0
      %2927 = vmatpush1.msra.mxu0 0.0
      %2928 = vmatprep.subr.mxu0 0.0
      %2929 = vmatpush1.msra.mxu0 0.0
      %2930 = vmatprep.subr.mxu0 0.0
      %2931 = vmatpush1.msra.mxu0 0.0
      %2932 = vmatprep.subr.mxu0 0.0
      %2933 = vmatpush1.msra.mxu0 0.0
      %2934 = vmatprep.subr.mxu0 0.0
      %2935 = vmatpush1.msra.mxu0 0.0
      %2936 = vmatprep.subr.mxu0 0.0
      %2937 = vmatpush1.msra.mxu0 0.0
      %2938 = vmatprep.subr.mxu0 0.0
      %2939 = vmatpush1.msra.mxu0 0.0
      %2940 = vmatprep.subr.mxu0 0.0
      %2941 = vmatpush1.msra.mxu0 0.0
      %2942 = vmatprep.subr.mxu0 0.0
      %2943 = vmatpush1.msra.mxu0 0.0
      %2944 = vmatprep.mubr.f32.mxu0 0.0
      %2945 = vmatmul.mubr.f32.gmra.mrb[0].mxu0 %v2878
      %v2946 = vpop.f32.mrb[0].mxu0
      %v2947 = vadd.f32 0.0, %v2946
      %v2948 = vpop.f32.mrb[0].mxu0
      %2949 = vdwg.mxu0
      %v2951 = vsel %vm1256, %v1075, 0
      %2953 = vmatprep.subr.mxu0 0.0
      %2954 = vmatpush1.msra.mxu0 %v2497
      %2955 = vmatprep.subr.mxu0 0.0
      %2956 = vmatpush1.msra.mxu0 %v2498
      %2957 = vmatprep.subr.mxu0 0.0
      %2958 = vmatpush1.msra.mxu0 %v2499
      %2959 = vmatprep.subr.mxu0 0.0
      %2960 = vmatpush1.msra.mxu0 %v2500
      %2961 = vmatprep.subr.mxu0 0.0
      %2962 = vmatpush1.msra.mxu0 %v2501
      %2963 = vmatprep.subr.mxu0 0.0
      %2964 = vmatpush1.msra.mxu0 %v2502
      %2965 = vmatprep.subr.mxu0 0.0
      %2966 = vmatpush1.msra.mxu0 %v2503
      %2967 = vmatprep.subr.mxu0 0.0
      %2968 = vmatpush1.msra.mxu0 %v2504
      %2969 = vmatprep.subr.mxu0 0.0
      %2970 = vmatpush1.msra.mxu0 0.0
      %2971 = vmatprep.subr.mxu0 0.0
      %2972 = vmatpush1.msra.mxu0 0.0
      %2973 = vmatprep.subr.mxu0 0.0
      %2974 = vmatpush1.msra.mxu0 0.0
      %2975 = vmatprep.subr.mxu0 0.0
      %2976 = vmatpush1.msra.mxu0 0.0
      %2977 = vmatprep.subr.mxu0 0.0
      %2978 = vmatpush1.msra.mxu0 0.0
      %2979 = vmatprep.subr.mxu0 0.0
      %2980 = vmatpush1.msra.mxu0 0.0
      %2981 = vmatprep.subr.mxu0 0.0
      %2982 = vmatpush1.msra.mxu0 0.0
      %2983 = vmatprep.subr.mxu0 0.0
      %2984 = vmatpush1.msra.mxu0 0.0
      %2985 = vmatprep.subr.mxu0 0.0
      %2986 = vmatpush1.msra.mxu0 0.0
      %2987 = vmatprep.subr.mxu0 0.0
      %2988 = vmatpush1.msra.mxu0 0.0
      %2989 = vmatprep.subr.mxu0 0.0
      %2990 = vmatpush1.msra.mxu0 0.0
      %2991 = vmatprep.subr.mxu0 0.0
      %2992 = vmatpush1.msra.mxu0 0.0
      %2993 = vmatprep.subr.mxu0 0.0
      %2994 = vmatpush1.msra.mxu0 0.0
      %2995 = vmatprep.subr.mxu0 0.0
      %2996 = vmatpush1.msra.mxu0 0.0
      %2997 = vmatprep.subr.mxu0 0.0
      %2998 = vmatpush1.msra.mxu0 0.0
      %2999 = vmatprep.subr.mxu0 0.0
      %3000 = vmatpush1.msra.mxu0 0.0
      %3001 = vmatprep.subr.mxu0 0.0
      %3002 = vmatpush1.msra.mxu0 0.0
      %3003 = vmatprep.subr.mxu0 0.0
      %3004 = vmatpush1.msra.mxu0 0.0
      %3005 = vmatprep.subr.mxu0 0.0
      %3006 = vmatpush1.msra.mxu0 0.0
      %3007 = vmatprep.subr.mxu0 0.0
      %3008 = vmatpush1.msra.mxu0 0.0
      %3009 = vmatprep.subr.mxu0 0.0
      %3010 = vmatpush1.msra.mxu0 0.0
      %3011 = vmatprep.subr.mxu0 0.0
      %3012 = vmatpush1.msra.mxu0 0.0
      %3013 = vmatprep.subr.mxu0 0.0
      %3014 = vmatpush1.msra.mxu0 0.0
      %3015 = vmatprep.subr.mxu0 0.0
      %3016 = vmatpush1.msra.mxu0 0.0
      %3017 = vmatprep.mubr.f32.mxu0 0.0
      %3018 = vmatmul.mubr.f32.gmra.mrb[0].mxu0 %v2951
      %v3019 = vpop.f32.mrb[0].mxu0
      %v3020 = vadd.f32 0.0, %v3019
      %v3021 = vpop.f32.mrb[0].mxu0
      %3022 = vdwg.mxu0
      %v3024 = vsel %vm1256, %v1080, 0
      %3026 = vmatprep.subr.mxu0 0.0
      %3027 = vmatpush1.msra.mxu0 %v2505
      %3028 = vmatprep.subr.mxu0 0.0
      %3029 = vmatpush1.msra.mxu0 %v2506
      %3030 = vmatprep.subr.mxu0 0.0
      %3031 = vmatpush1.msra.mxu0 %v2507
      %3032 = vmatprep.subr.mxu0 0.0
      %3033 = vmatpush1.msra.mxu0 %v2508
      %3034 = vmatprep.subr.mxu0 0.0
      %3035 = vmatpush1.msra.mxu0 %v2509
      %3036 = vmatprep.subr.mxu0 0.0
      %3037 = vmatpush1.msra.mxu0 %v2510
      %3038 = vmatprep.subr.mxu0 0.0
      %3039 = vmatpush1.msra.mxu0 %v2511
      %3040 = vmatprep.subr.mxu0 0.0
      %3041 = vmatpush1.msra.mxu0 %v2512
      %3042 = vmatprep.subr.mxu0 0.0
      %3043 = vmatpush1.msra.mxu0 0.0
      %3044 = vmatprep.subr.mxu0 0.0
      %3045 = vmatpush1.msra.mxu0 0.0
      %3046 = vmatprep.subr.mxu0 0.0
      %3047 = vmatpush1.msra.mxu0 0.0
      %3048 = vmatprep.subr.mxu0 0.0
      %3049 = vmatpush1.msra.mxu0 0.0
      %3050 = vmatprep.subr.mxu0 0.0
      %3051 = vmatpush1.msra.mxu0 0.0
      %3052 = vmatprep.subr.mxu0 0.0
      %3053 = vmatpush1.msra.mxu0 0.0
      %3054 = vmatprep.subr.mxu0 0.0
      %3055 = vmatpush1.msra.mxu0 0.0
      %3056 = vmatprep.subr.mxu0 0.0
      %3057 = vmatpush1.msra.mxu0 0.0
      %3058 = vmatprep.subr.mxu0 0.0
      %3059 = vmatpush1.msra.mxu0 0.0
      %3060 = vmatprep.subr.mxu0 0.0
      %3061 = vmatpush1.msra.mxu0 0.0
      %3062 = vmatprep.subr.mxu0 0.0
      %3063 = vmatpush1.msra.mxu0 0.0
      %3064 = vmatprep.subr.mxu0 0.0
      %3065 = vmatpush1.msra.mxu0 0.0
      %3066 = vmatprep.subr.mxu0 0.0
      %3067 = vmatpush1.msra.mxu0 0.0
      %3068 = vmatprep.subr.mxu0 0.0
      %3069 = vmatpush1.msra.mxu0 0.0
      %3070 = vmatprep.subr.mxu0 0.0
      %3071 = vmatpush1.msra.mxu0 0.0
      %3072 = vmatprep.subr.mxu0 0.0
      %3073 = vmatpush1.msra.mxu0 0.0
      %3074 = vmatprep.subr.mxu0 0.0
      %3075 = vmatpush1.msra.mxu0 0.0
      %3076 = vmatprep.subr.mxu0 0.0
      %3077 = vmatpush1.msra.mxu0 0.0
      %3078 = vmatprep.subr.mxu0 0.0
      %3079 = vmatpush1.msra.mxu0 0.0
      %3080 = vmatprep.subr.mxu0 0.0
      %3081 = vmatpush1.msra.mxu0 0.0
      %3082 = vmatprep.subr.mxu0 0.0
      %3083 = vmatpush1.msra.mxu0 0.0
      %3084 = vmatprep.subr.mxu0 0.0
      %3085 = vmatpush1.msra.mxu0 0.0
      %3086 = vmatprep.subr.mxu0 0.0
      %3087 = vmatpush1.msra.mxu0 0.0
      %3088 = vmatprep.subr.mxu0 0.0
      %3089 = vmatpush1.msra.mxu0 0.0
      %3090 = vmatprep.mubr.f32.mxu0 0.0
      %3091 = vmatmul.mubr.f32.gmra.mrb[0].mxu0 %v3024
      %v3092 = vpop.f32.mrb[0].mxu0
      %v3093 = vadd.f32 0.0, %v3092
      %v3094 = vpop.f32.mrb[0].mxu0
      %3095 = vdwg.mxu0
      %v3097 = vsel %vm1256, %v1085, 0
      %3099 = vmatprep.subr.mxu0 0.0
      %3100 = vmatpush1.msra.mxu0 %v2513
      %3101 = vmatprep.subr.mxu0 0.0
      %3102 = vmatpush1.msra.mxu0 %v2514
      %3103 = vmatprep.subr.mxu0 0.0
      %3104 = vmatpush1.msra.mxu0 %v2515
      %3105 = vmatprep.subr.mxu0 0.0
      %3106 = vmatpush1.msra.mxu0 %v2516
      %3107 = vmatprep.subr.mxu0 0.0
      %3108 = vmatpush1.msra.mxu0 %v2517
      %3109 = vmatprep.subr.mxu0 0.0
      %3110 = vmatpush1.msra.mxu0 %v2518
      %3111 = vmatprep.subr.mxu0 0.0
      %3112 = vmatpush1.msra.mxu0 %v2519
      %3113 = vmatprep.subr.mxu0 0.0
      %3114 = vmatpush1.msra.mxu0 %v2520
      %3115 = vmatprep.subr.mxu0 0.0
      %3116 = vmatpush1.msra.mxu0 0.0
      %3117 = vmatprep.subr.mxu0 0.0
      %3118 = vmatpush1.msra.mxu0 0.0
      %3119 = vmatprep.subr.mxu0 0.0
      %3120 = vmatpush1.msra.mxu0 0.0
      %3121 = vmatprep.subr.mxu0 0.0
      %3122 = vmatpush1.msra.mxu0 0.0
      %3123 = vmatprep.subr.mxu0 0.0
      %3124 = vmatpush1.msra.mxu0 0.0
      %3125 = vmatprep.subr.mxu0 0.0
      %3126 = vmatpush1.msra.mxu0 0.0
      %3127 = vmatprep.subr.mxu0 0.0
      %3128 = vmatpush1.msra.mxu0 0.0
      %3129 = vmatprep.subr.mxu0 0.0
      %3130 = vmatpush1.msra.mxu0 0.0
      %3131 = vmatprep.subr.mxu0 0.0
      %3132 = vmatpush1.msra.mxu0 0.0
      %3133 = vmatprep.subr.mxu0 0.0
      %3134 = vmatpush1.msra.mxu0 0.0
      %3135 = vmatprep.subr.mxu0 0.0
      %3136 = vmatpush1.msra.mxu0 0.0
      %3137 = vmatprep.subr.mxu0 0.0
      %3138 = vmatpush1.msra.mxu0 0.0
      %3139 = vmatprep.subr.mxu0 0.0
      %3140 = vmatpush1.msra.mxu0 0.0
      %3141 = vmatprep.subr.mxu0 0.0
      %3142 = vmatpush1.msra.mxu0 0.0
      %3143 = vmatprep.subr.mxu0 0.0
      %3144 = vmatpush1.msra.mxu0 0.0
      %3145 = vmatprep.subr.mxu0 0.0
      %3146 = vmatpush1.msra.mxu0 0.0
      %3147 = vmatprep.subr.mxu0 0.0
      %3148 = vmatpush1.msra.mxu0 0.0
      %3149 = vmatprep.subr.mxu0 0.0
      %3150 = vmatpush1.msra.mxu0 0.0
      %3151 = vmatprep.subr.mxu0 0.0
      %3152 = vmatpush1.msra.mxu0 0.0
      %3153 = vmatprep.subr.mxu0 0.0
      %3154 = vmatpush1.msra.mxu0 0.0
      %3155 = vmatprep.subr.mxu0 0.0
      %3156 = vmatpush1.msra.mxu0 0.0
      %3157 = vmatprep.subr.mxu0 0.0
      %3158 = vmatpush1.msra.mxu0 0.0
      %3159 = vmatprep.subr.mxu0 0.0
      %3160 = vmatpush1.msra.mxu0 0.0
      %3161 = vmatprep.subr.mxu0 0.0
      %3162 = vmatpush1.msra.mxu0 0.0
      %3163 = vmatprep.mubr.f32.mxu0 0.0
      %3164 = vmatmul.mubr.f32.gmra.mrb[0].mxu0 %v3097
      %v3165 = vpop.f32.mrb[0].mxu0
      %v3166 = vadd.f32 0.0, %v3165
      %v3167 = vpop.f32.mrb[0].mxu0
      %3168 = vdwg.mxu0
      %v3170 = vsel %vm1256, %v1090, 0
      %3172 = vmatprep.subr.mxu0 0.0
      %3173 = vmatpush1.msra.mxu0 %v2521
      %3174 = vmatprep.subr.mxu0 0.0
      %3175 = vmatpush1.msra.mxu0 %v2522
      %3176 = vmatprep.subr.mxu0 0.0
      %3177 = vmatpush1.msra.mxu0 %v2523
      %3178 = vmatprep.subr.mxu0 0.0
      %3179 = vmatpush1.msra.mxu0 %v2524
      %3180 = vmatprep.subr.mxu0 0.0
      %3181 = vmatpush1.msra.mxu0 %v2525
      %3182 = vmatprep.subr.mxu0 0.0
      %3183 = vmatpush1.msra.mxu0 %v2526
      %3184 = vmatprep.subr.mxu0 0.0
      %3185 = vmatpush1.msra.mxu0 %v2527
      %3186 = vmatprep.subr.mxu0 0.0
      %3187 = vmatpush1.msra.mxu0 %v2528
      %3188 = vmatprep.subr.mxu0 0.0
      %3189 = vmatpush1.msra.mxu0 0.0
      %3190 = vmatprep.subr.mxu0 0.0
      %3191 = vmatpush1.msra.mxu0 0.0
      %3192 = vmatprep.subr.mxu0 0.0
      %3193 = vmatpush1.msra.mxu0 0.0
      %3194 = vmatprep.subr.mxu0 0.0
      %3195 = vmatpush1.msra.mxu0 0.0
      %3196 = vmatprep.subr.mxu0 0.0
      %3197 = vmatpush1.msra.mxu0 0.0
      %3198 = vmatprep.subr.mxu0 0.0
      %3199 = vmatpush1.msra.mxu0 0.0
      %3200 = vmatprep.subr.mxu0 0.0
      %3201 = vmatpush1.msra.mxu0 0.0
      %3202 = vmatprep.subr.mxu0 0.0
      %3203 = vmatpush1.msra.mxu0 0.0
      %3204 = vmatprep.subr.mxu0 0.0
      %3205 = vmatpush1.msra.mxu0 0.0
      %3206 = vmatprep.subr.mxu0 0.0
      %3207 = vmatpush1.msra.mxu0 0.0
      %3208 = vmatprep.subr.mxu0 0.0
      %3209 = vmatpush1.msra.mxu0 0.0
      %3210 = vmatprep.subr.mxu0 0.0
      %3211 = vmatpush1.msra.mxu0 0.0
      %3212 = vmatprep.subr.mxu0 0.0
      %3213 = vmatpush1.msra.mxu0 0.0
      %3214 = vmatprep.subr.mxu0 0.0
      %3215 = vmatpush1.msra.mxu0 0.0
      %3216 = vmatprep.subr.mxu0 0.0
      %3217 = vmatpush1.msra.mxu0 0.0
      %3218 = vmatprep.subr.mxu0 0.0
      %3219 = vmatpush1.msra.mxu0 0.0
      %3220 = vmatprep.subr.mxu0 0.0
      %3221 = vmatpush1.msra.mxu0 0.0
      %3222 = vmatprep.subr.mxu0 0.0
      %3223 = vmatpush1.msra.mxu0 0.0
      %3224 = vmatprep.subr.mxu0 0.0
      %3225 = vmatpush1.msra.mxu0 0.0
      %3226 = vmatprep.subr.mxu0 0.0
      %3227 = vmatpush1.msra.mxu0 0.0
      %3228 = vmatprep.subr.mxu0 0.0
      %3229 = vmatpush1.msra.mxu0 0.0
      %3230 = vmatprep.subr.mxu0 0.0
      %3231 = vmatpush1.msra.mxu0 0.0
      %3232 = vmatprep.subr.mxu0 0.0
      %3233 = vmatpush1.msra.mxu0 0.0
      %3234 = vmatprep.subr.mxu0 0.0
      %3235 = vmatpush1.msra.mxu0 0.0
      %3236 = vmatprep.mubr.f32.mxu0 0.0
      %3237 = vmatmul.mubr.f32.gmra.mrb[0].mxu0 %v3170
      %v3238 = vpop.f32.mrb[0].mxu0
      %v3239 = vadd.f32 0.0, %v3238
      %v3240 = vpop.f32.mrb[0].mxu0
      %3241 = vdwg.mxu0
      %v3243 = vsel %vm1256, %v1095, 0
      %3245 = vmatprep.subr.mxu0 0.0
      %3246 = vmatpush1.msra.mxu0 %v2529
      %3247 = vmatprep.subr.mxu0 0.0
      %3248 = vmatpush1.msra.mxu0 %v2530
      %3249 = vmatprep.subr.mxu0 0.0
      %3250 = vmatpush1.msra.mxu0 %v2531
      %3251 = vmatprep.subr.mxu0 0.0
      %3252 = vmatpush1.msra.mxu0 %v2532
      %3253 = vmatprep.subr.mxu0 0.0
      %3254 = vmatpush1.msra.mxu0 %v2533
      %3255 = vmatprep.subr.mxu0 0.0
      %3256 = vmatpush1.msra.mxu0 %v2534
      %3257 = vmatprep.subr.mxu0 0.0
      %3258 = vmatpush1.msra.mxu0 %v2535
      %3259 = vmatprep.subr.mxu0 0.0
      %3260 = vmatpush1.msra.mxu0 %v2536
      %3261 = vmatprep.subr.mxu0 0.0
      %3262 = vmatpush1.msra.mxu0 0.0
      %3263 = vmatprep.subr.mxu0 0.0
      %3264 = vmatpush1.msra.mxu0 0.0
      %3265 = vmatprep.subr.mxu0 0.0
      %3266 = vmatpush1.msra.mxu0 0.0
      %3267 = vmatprep.subr.mxu0 0.0
      %3268 = vmatpush1.msra.mxu0 0.0
      %3269 = vmatprep.subr.mxu0 0.0
      %3270 = vmatpush1.msra.mxu0 0.0
      %3271 = vmatprep.subr.mxu0 0.0
      %3272 = vmatpush1.msra.mxu0 0.0
      %3273 = vmatprep.subr.mxu0 0.0
      %3274 = vmatpush1.msra.mxu0 0.0
      %3275 = vmatprep.subr.mxu0 0.0
      %3276 = vmatpush1.msra.mxu0 0.0
      %3277 = vmatprep.subr.mxu0 0.0
      %3278 = vmatpush1.msra.mxu0 0.0
      %3279 = vmatprep.subr.mxu0 0.0
      %3280 = vmatpush1.msra.mxu0 0.0
      %3281 = vmatprep.subr.mxu0 0.0
      %3282 = vmatpush1.msra.mxu0 0.0
      %3283 = vmatprep.subr.mxu0 0.0
      %3284 = vmatpush1.msra.mxu0 0.0
      %3285 = vmatprep.subr.mxu0 0.0
      %3286 = vmatpush1.msra.mxu0 0.0
      %3287 = vmatprep.subr.mxu0 0.0
      %3288 = vmatpush1.msra.mxu0 0.0
      %3289 = vmatprep.subr.mxu0 0.0
      %3290 = vmatpush1.msra.mxu0 0.0
      %3291 = vmatprep.subr.mxu0 0.0
      %3292 = vmatpush1.msra.mxu0 0.0
      %3293 = vmatprep.subr.mxu0 0.0
      %3294 = vmatpush1.msra.mxu0 0.0
      %3295 = vmatprep.subr.mxu0 0.0
      %3296 = vmatpush1.msra.mxu0 0.0
      %3297 = vmatprep.subr.mxu0 0.0
      %3298 = vmatpush1.msra.mxu0 0.0
      %3299 = vmatprep.subr.mxu0 0.0
      %3300 = vmatpush1.msra.mxu0 0.0
      %3301 = vmatprep.subr.mxu0 0.0
      %3302 = vmatpush1.msra.mxu0 0.0
      %3303 = vmatprep.subr.mxu0 0.0
      %3304 = vmatpush1.msra.mxu0 0.0
      %3305 = vmatprep.subr.mxu0 0.0
      %3306 = vmatpush1.msra.mxu0 0.0
      %3307 = vmatprep.subr.mxu0 0.0
      %3308 = vmatpush1.msra.mxu0 0.0
      %3309 = vmatprep.mubr.f32.mxu0 0.0
      %3310 = vmatmul.mubr.f32.gmra.mrb[0].mxu0 %v3243
      %v3311 = vpop.f32.mrb[0].mxu0
      %v3312 = vadd.f32 0.0, %v3311
      %v3313 = vpop.f32.mrb[0].mxu0
      %3314 = vdwg.mxu0
      %v3316 = vsel %vm1256, %v1100, 0
      %3318 = vmatprep.subr.mxu0 0.0
      %3319 = vmatpush1.msra.mxu0 %v2537
      %3320 = vmatprep.subr.mxu0 0.0
      %3321 = vmatpush1.msra.mxu0 %v2538
      %3322 = vmatprep.subr.mxu0 0.0
      %3323 = vmatpush1.msra.mxu0 %v2539
      %3324 = vmatprep.subr.mxu0 0.0
      %3325 = vmatpush1.msra.mxu0 %v2540
      %3326 = vmatprep.subr.mxu0 0.0
      %3327 = vmatpush1.msra.mxu0 %v2541
      %3328 = vmatprep.subr.mxu0 0.0
      %3329 = vmatpush1.msra.mxu0 %v2542
      %3330 = vmatprep.subr.mxu0 0.0
      %3331 = vmatpush1.msra.mxu0 %v2543
      %3332 = vmatprep.subr.mxu0 0.0
      %3333 = vmatpush1.msra.mxu0 %v2544
      %3334 = vmatprep.subr.mxu0 0.0
      %3335 = vmatpush1.msra.mxu0 0.0
      %3336 = vmatprep.subr.mxu0 0.0
      %3337 = vmatpush1.msra.mxu0 0.0
      %3338 = vmatprep.subr.mxu0 0.0
      %3339 = vmatpush1.msra.mxu0 0.0
      %3340 = vmatprep.subr.mxu0 0.0
      %3341 = vmatpush1.msra.mxu0 0.0
      %3342 = vmatprep.subr.mxu0 0.0
      %3343 = vmatpush1.msra.mxu0 0.0
      %3344 = vmatprep.subr.mxu0 0.0
      %3345 = vmatpush1.msra.mxu0 0.0
      %3346 = vmatprep.subr.mxu0 0.0
      %3347 = vmatpush1.msra.mxu0 0.0
      %3348 = vmatprep.subr.mxu0 0.0
      %3349 = vmatpush1.msra.mxu0 0.0
      %3350 = vmatprep.subr.mxu0 0.0
      %3351 = vmatpush1.msra.mxu0 0.0
      %3352 = vmatprep.subr.mxu0 0.0
      %3353 = vmatpush1.msra.mxu0 0.0
      %3354 = vmatprep.subr.mxu0 0.0
      %3355 = vmatpush1.msra.mxu0 0.0
      %3356 = vmatprep.subr.mxu0 0.0
      %3357 = vmatpush1.msra.mxu0 0.0
      %3358 = vmatprep.subr.mxu0 0.0
      %3359 = vmatpush1.msra.mxu0 0.0
      %3360 = vmatprep.subr.mxu0 0.0
      %3361 = vmatpush1.msra.mxu0 0.0
      %3362 = vmatprep.subr.mxu0 0.0
      %3363 = vmatpush1.msra.mxu0 0.0
      %3364 = vmatprep.subr.mxu0 0.0
      %3365 = vmatpush1.msra.mxu0 0.0
      %3366 = vmatprep.subr.mxu0 0.0
      %3367 = vmatpush1.msra.mxu0 0.0
      %3368 = vmatprep.subr.mxu0 0.0
      %3369 = vmatpush1.msra.mxu0 0.0
      %3370 = vmatprep.subr.mxu0 0.0
      %3371 = vmatpush1.msra.mxu0 0.0
      %3372 = vmatprep.subr.mxu0 0.0
      %3373 = vmatpush1.msra.mxu0 0.0
      %3374 = vmatprep.subr.mxu0 0.0
      %3375 = vmatpush1.msra.mxu0 0.0
      %3376 = vmatprep.subr.mxu0 0.0
      %3377 = vmatpush1.msra.mxu0 0.0
      %3378 = vmatprep.subr.mxu0 0.0
      %3379 = vmatpush1.msra.mxu0 0.0
      %3380 = vmatprep.subr.mxu0 0.0
      %3381 = vmatpush1.msra.mxu0 0.0
      %3382 = vmatprep.mubr.f32.mxu0 0.0
      %3383 = vmatmul.mubr.f32.gmra.mrb[0].mxu0 %v3316
      %v3384 = vpop.f32.mrb[0].mxu0
      %v3385 = vadd.f32 0.0, %v3384
      %v3386 = vpop.f32.mrb[0].mxu0
      %3387 = vdwg.mxu0
      %v3389 = vsel %vm1256, %v1105, 0
      %3391 = vmatprep.subr.mxu0 0.0
      %3392 = vmatpush1.msra.mxu0 %v2545
      %3393 = vmatprep.subr.mxu0 0.0
      %3394 = vmatpush1.msra.mxu0 %v2546
      %3395 = vmatprep.subr.mxu0 0.0
      %3396 = vmatpush1.msra.mxu0 %v2547
      %3397 = vmatprep.subr.mxu0 0.0
      %3398 = vmatpush1.msra.mxu0 %v2548
      %3399 = vmatprep.subr.mxu0 0.0
      %3400 = vmatpush1.msra.mxu0 %v2549
      %3401 = vmatprep.subr.mxu0 0.0
      %3402 = vmatpush1.msra.mxu0 %v2550
      %3403 = vmatprep.subr.mxu0 0.0
      %3404 = vmatpush1.msra.mxu0 %v2551
      %3405 = vmatprep.subr.mxu0 0.0
      %3406 = vmatpush1.msra.mxu0 %v2552
      %3407 = vmatprep.subr.mxu0 0.0
      %3408 = vmatpush1.msra.mxu0 0.0
      %3409 = vmatprep.subr.mxu0 0.0
      %3410 = vmatpush1.msra.mxu0 0.0
      %3411 = vmatprep.subr.mxu0 0.0
      %3412 = vmatpush1.msra.mxu0 0.0
      %3413 = vmatprep.subr.mxu0 0.0
      %3414 = vmatpush1.msra.mxu0 0.0
      %3415 = vmatprep.subr.mxu0 0.0
      %3416 = vmatpush1.msra.mxu0 0.0
      %3417 = vmatprep.subr.mxu0 0.0
      %3418 = vmatpush1.msra.mxu0 0.0
      %3419 = vmatprep.subr.mxu0 0.0
      %3420 = vmatpush1.msra.mxu0 0.0
      %3421 = vmatprep.subr.mxu0 0.0
      %3422 = vmatpush1.msra.mxu0 0.0
      %3423 = vmatprep.subr.mxu0 0.0
      %3424 = vmatpush1.msra.mxu0 0.0
      %3425 = vmatprep.subr.mxu0 0.0
      %3426 = vmatpush1.msra.mxu0 0.0
      %3427 = vmatprep.subr.mxu0 0.0
      %3428 = vmatpush1.msra.mxu0 0.0
      %3429 = vmatprep.subr.mxu0 0.0
      %3430 = vmatpush1.msra.mxu0 0.0
      %3431 = vmatprep.subr.mxu0 0.0
      %3432 = vmatpush1.msra.mxu0 0.0
      %3433 = vmatprep.subr.mxu0 0.0
      %3434 = vmatpush1.msra.mxu0 0.0
      %3435 = vmatprep.subr.mxu0 0.0
      %3436 = vmatpush1.msra.mxu0 0.0
      %3437 = vmatprep.subr.mxu0 0.0
      %3438 = vmatpush1.msra.mxu0 0.0
      %3439 = vmatprep.subr.mxu0 0.0
      %3440 = vmatpush1.msra.mxu0 0.0
      %3441 = vmatprep.subr.mxu0 0.0
      %3442 = vmatpush1.msra.mxu0 0.0
      %3443 = vmatprep.subr.mxu0 0.0
      %3444 = vmatpush1.msra.mxu0 0.0
      %3445 = vmatprep.subr.mxu0 0.0
      %3446 = vmatpush1.msra.mxu0 0.0
      %3447 = vmatprep.subr.mxu0 0.0
      %3448 = vmatpush1.msra.mxu0 0.0
      %3449 = vmatprep.subr.mxu0 0.0
      %3450 = vmatpush1.msra.mxu0 0.0
      %3451 = vmatprep.subr.mxu0 0.0
      %3452 = vmatpush1.msra.mxu0 0.0
      %3453 = vmatprep.subr.mxu0 0.0
      %3454 = vmatpush1.msra.mxu0 0.0
      %3455 = vmatprep.mubr.f32.mxu0 0.0
      %3456 = vmatmul.mubr.f32.gmra.mrb[0].mxu0 %v3389
      %v3457 = vpop.f32.mrb[0].mxu0
      %v3458 = vadd.f32 0.0, %v3457
      %v3459 = vpop.f32.mrb[0].mxu0
      %3460 = vdwg.mxu0
      %v3462 = vsel %vm1256, %v1110, 0
      %3464 = vmatprep.subr.mxu0 0.0
      %3465 = vmatpush1.msra.mxu0 %v2553
      %3466 = vmatprep.subr.mxu0 0.0
      %3467 = vmatpush1.msra.mxu0 %v2554
      %3468 = vmatprep.subr.mxu0 0.0
      %3469 = vmatpush1.msra.mxu0 %v2555
      %3470 = vmatprep.subr.mxu0 0.0
      %3471 = vmatpush1.msra.mxu0 %v2556
      %3472 = vmatprep.subr.mxu0 0.0
      %3473 = vmatpush1.msra.mxu0 %v2557
      %3474 = vmatprep.subr.mxu0 0.0
      %3475 = vmatpush1.msra.mxu0 %v2558
      %3476 = vmatprep.subr.mxu0 0.0
      %3477 = vmatpush1.msra.mxu0 %v2559
      %3478 = vmatprep.subr.mxu0 0.0
      %3479 = vmatpush1.msra.mxu0 %v2560
      %3480 = vmatprep.subr.mxu0 0.0
      %3481 = vmatpush1.msra.mxu0 0.0
      %3482 = vmatprep.subr.mxu0 0.0
      %3483 = vmatpush1.msra.mxu0 0.0
      %3484 = vmatprep.subr.mxu0 0.0
      %3485 = vmatpush1.msra.mxu0 0.0
      %3486 = vmatprep.subr.mxu0 0.0
      %3487 = vmatpush1.msra.mxu0 0.0
      %3488 = vmatprep.subr.mxu0 0.0
      %3489 = vmatpush1.msra.mxu0 0.0
      %3490 = vmatprep.subr.mxu0 0.0
      %3491 = vmatpush1.msra.mxu0 0.0
      %3492 = vmatprep.subr.mxu0 0.0
      %3493 = vmatpush1.msra.mxu0 0.0
      %3494 = vmatprep.subr.mxu0 0.0
      %3495 = vmatpush1.msra.mxu0 0.0
      %3496 = vmatprep.subr.mxu0 0.0
      %3497 = vmatpush1.msra.mxu0 0.0
      %3498 = vmatprep.subr.mxu0 0.0
      %3499 = vmatpush1.msra.mxu0 0.0
      %3500 = vmatprep.subr.mxu0 0.0
      %3501 = vmatpush1.msra.mxu0 0.0
      %3502 = vmatprep.subr.mxu0 0.0
      %3503 = vmatpush1.msra.mxu0 0.0
      %3504 = vmatprep.subr.mxu0 0.0
      %3505 = vmatpush1.msra.mxu0 0.0
      %3506 = vmatprep.subr.mxu0 0.0
      %3507 = vmatpush1.msra.mxu0 0.0
      %3508 = vmatprep.subr.mxu0 0.0
      %3509 = vmatpush1.msra.mxu0 0.0
      %3510 = vmatprep.subr.mxu0 0.0
      %3511 = vmatpush1.msra.mxu0 0.0
      %3512 = vmatprep.subr.mxu0 0.0
      %3513 = vmatpush1.msra.mxu0 0.0
      %3514 = vmatprep.subr.mxu0 0.0
      %3515 = vmatpush1.msra.mxu0 0.0
      %3516 = vmatprep.subr.mxu0 0.0
      %3517 = vmatpush1.msra.mxu0 0.0
      %3518 = vmatprep.subr.mxu0 0.0
      %3519 = vmatpush1.msra.mxu0 0.0
      %3520 = vmatprep.subr.mxu0 0.0
      %3521 = vmatpush1.msra.mxu0 0.0
      %3522 = vmatprep.subr.mxu0 0.0
      %3523 = vmatpush1.msra.mxu0 0.0
      %3524 = vmatprep.subr.mxu0 0.0
      %3525 = vmatpush1.msra.mxu0 0.0
      %3526 = vmatprep.subr.mxu0 0.0
      %3527 = vmatpush1.msra.mxu0 0.0
      %3528 = vmatprep.mubr.f32.mxu0 0.0
      %3529 = vmatmul.mubr.f32.gmra.mrb[0].mxu0 %v3462
      %v3530 = vpop.f32.mrb[0].mxu0
      %v3531 = vadd.f32 0.0, %v3530
      %v3532 = vpop.f32.mrb[0].mxu0
      %3533 = vdwg.mxu0
      %v3535 = vsel %vm1256, %v1115, 0
      %3537 = vmatprep.subr.mxu0 0.0
      %3538 = vmatpush1.msra.mxu0 %v2561
      %3539 = vmatprep.subr.mxu0 0.0
      %3540 = vmatpush1.msra.mxu0 %v2562
      %3541 = vmatprep.subr.mxu0 0.0
      %3542 = vmatpush1.msra.mxu0 %v2563
      %3543 = vmatprep.subr.mxu0 0.0
      %3544 = vmatpush1.msra.mxu0 %v2564
      %3545 = vmatprep.subr.mxu0 0.0
      %3546 = vmatpush1.msra.mxu0 %v2565
      %3547 = vmatprep.subr.mxu0 0.0
      %3548 = vmatpush1.msra.mxu0 %v2566
      %3549 = vmatprep.subr.mxu0 0.0
      %3550 = vmatpush1.msra.mxu0 %v2567
      %3551 = vmatprep.subr.mxu0 0.0
      %3552 = vmatpush1.msra.mxu0 %v2568
      %3553 = vmatprep.subr.mxu0 0.0
      %3554 = vmatpush1.msra.mxu0 0.0
      %3555 = vmatprep.subr.mxu0 0.0
      %3556 = vmatpush1.msra.mxu0 0.0
      %3557 = vmatprep.subr.mxu0 0.0
      %3558 = vmatpush1.msra.mxu0 0.0
      %3559 = vmatprep.subr.mxu0 0.0
      %3560 = vmatpush1.msra.mxu0 0.0
      %3561 = vmatprep.subr.mxu0 0.0
      %3562 = vmatpush1.msra.mxu0 0.0
      %3563 = vmatprep.subr.mxu0 0.0
      %3564 = vmatpush1.msra.mxu0 0.0
      %3565 = vmatprep.subr.mxu0 0.0
      %3566 = vmatpush1.msra.mxu0 0.0
      %3567 = vmatprep.subr.mxu0 0.0
      %3568 = vmatpush1.msra.mxu0 0.0
      %3569 = vmatprep.subr.mxu0 0.0
      %3570 = vmatpush1.msra.mxu0 0.0
      %3571 = vmatprep.subr.mxu0 0.0
      %3572 = vmatpush1.msra.mxu0 0.0
      %3573 = vmatprep.subr.mxu0 0.0
      %3574 = vmatpush1.msra.mxu0 0.0
      %3575 = vmatprep.subr.mxu0 0.0
      %3576 = vmatpush1.msra.mxu0 0.0
      %3577 = vmatprep.subr.mxu0 0.0
      %3578 = vmatpush1.msra.mxu0 0.0
      %3579 = vmatprep.subr.mxu0 0.0
      %3580 = vmatpush1.msra.mxu0 0.0
      %3581 = vmatprep.subr.mxu0 0.0
      %3582 = vmatpush1.msra.mxu0 0.0
      %3583 = vmatprep.subr.mxu0 0.0
      %3584 = vmatpush1.msra.mxu0 0.0
      %3585 = vmatprep.subr.mxu0 0.0
      %3586 = vmatpush1.msra.mxu0 0.0
      %3587 = vmatprep.subr.mxu0 0.0
      %3588 = vmatpush1.msra.mxu0 0.0
      %3589 = vmatprep.subr.mxu0 0.0
      %3590 = vmatpush1.msra.mxu0 0.0
      %3591 = vmatprep.subr.mxu0 0.0
      %3592 = vmatpush1.msra.mxu0 0.0
      %3593 = vmatprep.subr.mxu0 0.0
      %3594 = vmatpush1.msra.mxu0 0.0
      %3595 = vmatprep.subr.mxu0 0.0
      %3596 = vmatpush1.msra.mxu0 0.0
      %3597 = vmatprep.subr.mxu0 0.0
      %3598 = vmatpush1.msra.mxu0 0.0
      %3599 = vmatprep.subr.mxu0 0.0
      %3600 = vmatpush1.msra.mxu0 0.0
      %3601 = vmatprep.mubr.f32.mxu0 0.0
      %3602 = vmatmul.mubr.f32.gmra.mrb[0].mxu0 %v3535
      %v3603 = vpop.f32.mrb[0].mxu0
      %v3604 = vadd.f32 0.0, %v3603
      %v3605 = vpop.f32.mrb[0].mxu0
      %3606 = vdwg.mxu0
      %v3608 = vsel %vm1256, %v1120, 0
      %3610 = vmatprep.subr.mxu0 0.0
      %3611 = vmatpush1.msra.mxu0 %v2569
      %3612 = vmatprep.subr.mxu0 0.0
      %3613 = vmatpush1.msra.mxu0 %v2570
      %3614 = vmatprep.subr.mxu0 0.0
      %3615 = vmatpush1.msra.mxu0 %v2571
      %3616 = vmatprep.subr.mxu0 0.0
      %3617 = vmatpush1.msra.mxu0 %v2572
      %3618 = vmatprep.subr.mxu0 0.0
      %3619 = vmatpush1.msra.mxu0 %v2573
      %3620 = vmatprep.subr.mxu0 0.0
      %3621 = vmatpush1.msra.mxu0 %v2574
      %3622 = vmatprep.subr.mxu0 0.0
      %3623 = vmatpush1.msra.mxu0 %v2575
      %3624 = vmatprep.subr.mxu0 0.0
      %3625 = vmatpush1.msra.mxu0 %v2576
      %3626 = vmatprep.subr.mxu0 0.0
      %3627 = vmatpush1.msra.mxu0 0.0
      %3628 = vmatprep.subr.mxu0 0.0
      %3629 = vmatpush1.msra.mxu0 0.0
      %3630 = vmatprep.subr.mxu0 0.0
      %3631 = vmatpush1.msra.mxu0 0.0
      %3632 = vmatprep.subr.mxu0 0.0
      %3633 = vmatpush1.msra.mxu0 0.0
      %3634 = vmatprep.subr.mxu0 0.0
      %3635 = vmatpush1.msra.mxu0 0.0
      %3636 = vmatprep.subr.mxu0 0.0
      %3637 = vmatpush1.msra.mxu0 0.0
      %3638 = vmatprep.subr.mxu0 0.0
      %3639 = vmatpush1.msra.mxu0 0.0
      %3640 = vmatprep.subr.mxu0 0.0
      %3641 = vmatpush1.msra.mxu0 0.0
      %3642 = vmatprep.subr.mxu0 0.0
      %3643 = vmatpush1.msra.mxu0 0.0
      %3644 = vmatprep.subr.mxu0 0.0
      %3645 = vmatpush1.msra.mxu0 0.0
      %3646 = vmatprep.subr.mxu0 0.0
      %3647 = vmatpush1.msra.mxu0 0.0
      %3648 = vmatprep.subr.mxu0 0.0
      %3649 = vmatpush1.msra.mxu0 0.0
      %3650 = vmatprep.subr.mxu0 0.0
      %3651 = vmatpush1.msra.mxu0 0.0
      %3652 = vmatprep.subr.mxu0 0.0
      %3653 = vmatpush1.msra.mxu0 0.0
      %3654 = vmatprep.subr.mxu0 0.0
      %3655 = vmatpush1.msra.mxu0 0.0
      %3656 = vmatprep.subr.mxu0 0.0
      %3657 = vmatpush1.msra.mxu0 0.0
      %3658 = vmatprep.subr.mxu0 0.0
      %3659 = vmatpush1.msra.mxu0 0.0
      %3660 = vmatprep.subr.mxu0 0.0
      %3661 = vmatpush1.msra.mxu0 0.0
      %3662 = vmatprep.subr.mxu0 0.0
      %3663 = vmatpush1.msra.mxu0 0.0
      %3664 = vmatprep.subr.mxu0 0.0
      %3665 = vmatpush1.msra.mxu0 0.0
      %3666 = vmatprep.subr.mxu0 0.0
      %3667 = vmatpush1.msra.mxu0 0.0
      %3668 = vmatprep.subr.mxu0 0.0
      %3669 = vmatpush1.msra.mxu0 0.0
      %3670 = vmatprep.subr.mxu0 0.0
      %3671 = vmatpush1.msra.mxu0 0.0
      %3672 = vmatprep.subr.mxu0 0.0
      %3673 = vmatpush1.msra.mxu0 0.0
      %3674 = vmatprep.mubr.f32.mxu0 0.0
      %3675 = vmatmul.mubr.f32.gmra.mrb[0].mxu0 %v3608
      %v3676 = vpop.f32.mrb[0].mxu0
      %v3677 = vadd.f32 0.0, %v3676
      %v3678 = vpop.f32.mrb[0].mxu0
      %3679 = vdwg.mxu0
      %v3681 = vsel %vm1256, %v1125, 0
      %3683 = vmatprep.subr.mxu0 0.0
      %3684 = vmatpush1.msra.mxu0 %v2577
      %3685 = vmatprep.subr.mxu0 0.0
      %3686 = vmatpush1.msra.mxu0 %v2578
      %3687 = vmatprep.subr.mxu0 0.0
      %3688 = vmatpush1.msra.mxu0 %v2579
      %3689 = vmatprep.subr.mxu0 0.0
      %3690 = vmatpush1.msra.mxu0 %v2580
      %3691 = vmatprep.subr.mxu0 0.0
      %3692 = vmatpush1.msra.mxu0 %v2581
      %3693 = vmatprep.subr.mxu0 0.0
      %3694 = vmatpush1.msra.mxu0 %v2582
      %3695 = vmatprep.subr.mxu0 0.0
      %3696 = vmatpush1.msra.mxu0 %v2583
      %3697 = vmatprep.subr.mxu0 0.0
      %3698 = vmatpush1.msra.mxu0 %v2584
      %3699 = vmatprep.subr.mxu0 0.0
      %3700 = vmatpush1.msra.mxu0 0.0
      %3701 = vmatprep.subr.mxu0 0.0
      %3702 = vmatpush1.msra.mxu0 0.0
      %3703 = vmatprep.subr.mxu0 0.0
      %3704 = vmatpush1.msra.mxu0 0.0
      %3705 = vmatprep.subr.mxu0 0.0
      %3706 = vmatpush1.msra.mxu0 0.0
      %3707 = vmatprep.subr.mxu0 0.0
      %3708 = vmatpush1.msra.mxu0 0.0
      %3709 = vmatprep.subr.mxu0 0.0
      %3710 = vmatpush1.msra.mxu0 0.0
      %3711 = vmatprep.subr.mxu0 0.0
      %3712 = vmatpush1.msra.mxu0 0.0
      %3713 = vmatprep.subr.mxu0 0.0
      %3714 = vmatpush1.msra.mxu0 0.0
      %3715 = vmatprep.subr.mxu0 0.0
      %3716 = vmatpush1.msra.mxu0 0.0
      %3717 = vmatprep.subr.mxu0 0.0
      %3718 = vmatpush1.msra.mxu0 0.0
      %3719 = vmatprep.subr.mxu0 0.0
      %3720 = vmatpush1.msra.mxu0 0.0
      %3721 = vmatprep.subr.mxu0 0.0
      %3722 = vmatpush1.msra.mxu0 0.0
      %3723 = vmatprep.subr.mxu0 0.0
      %3724 = vmatpush1.msra.mxu0 0.0
      %3725 = vmatprep.subr.mxu0 0.0
      %3726 = vmatpush1.msra.mxu0 0.0
      %3727 = vmatprep.subr.mxu0 0.0
      %3728 = vmatpush1.msra.mxu0 0.0
      %3729 = vmatprep.subr.mxu0 0.0
      %3730 = vmatpush1.msra.mxu0 0.0
      %3731 = vmatprep.subr.mxu0 0.0
      %3732 = vmatpush1.msra.mxu0 0.0
      %3733 = vmatprep.subr.mxu0 0.0
      %3734 = vmatpush1.msra.mxu0 0.0
      %3735 = vmatprep.subr.mxu0 0.0
      %3736 = vmatpush1.msra.mxu0 0.0
      %3737 = vmatprep.subr.mxu0 0.0
      %3738 = vmatpush1.msra.mxu0 0.0
      %3739 = vmatprep.subr.mxu0 0.0
      %3740 = vmatpush1.msra.mxu0 0.0
      %3741 = vmatprep.subr.mxu0 0.0
      %3742 = vmatpush1.msra.mxu0 0.0
      %3743 = vmatprep.subr.mxu0 0.0
      %3744 = vmatpush1.msra.mxu0 0.0
      %3745 = vmatprep.subr.mxu0 0.0
      %3746 = vmatpush1.msra.mxu0 0.0
      %3747 = vmatprep.mubr.f32.mxu0 0.0
      %3748 = vmatmul.mubr.f32.gmra.mrb[0].mxu0 %v3681
      %v3749 = vpop.f32.mrb[0].mxu0
      %v3750 = vadd.f32 0.0, %v3749
      %v3751 = vpop.f32.mrb[0].mxu0
      %3752 = vdwg.mxu0
      %v3753 = vsel %vm2425, %v2655, 0.0
      %v3754 = vsel %vm2425, %v2728, 0.0
      %v3755 = vadd.f32 %v3753, %v3754
      %v3756 = vsel %vm2425, %v2801, 0.0
      %v3757 = vadd.f32 %v3755, %v3756
      %v3758 = vsel %vm2425, %v2874, 0.0
      %v3759 = vadd.f32 %v3757, %v3758
      %v3760 = vsel %vm2425, %v2947, 0.0
      %v3761 = vadd.f32 %v3759, %v3760
      %v3762 = vsel %vm2425, %v3020, 0.0
      %v3763 = vadd.f32 %v3761, %v3762
      %v3764 = vsel %vm2425, %v3093, 0.0
      %v3765 = vadd.f32 %v3763, %v3764
      %v3766 = vsel %vm2425, %v3166, 0.0
      %v3767 = vadd.f32 %v3765, %v3766
      %v3768 = vsel %vm2425, %v3239, 0.0
      %v3769 = vadd.f32 %v3767, %v3768
      %v3770 = vsel %vm2425, %v3312, 0.0
      %v3771 = vadd.f32 %v3769, %v3770
      %v3772 = vsel %vm2425, %v3385, 0.0
      %v3773 = vadd.f32 %v3771, %v3772
      %v3774 = vsel %vm2425, %v3458, 0.0
      %v3775 = vadd.f32 %v3773, %v3774
      %v3776 = vsel %vm2425, %v3531, 0.0
      %v3777 = vadd.f32 %v3775, %v3776
      %v3778 = vsel %vm2425, %v3604, 0.0
      %v3779 = vadd.f32 %v3777, %v3778
      %v3780 = vsel %vm2425, %v3677, 0.0
      %v3781 = vadd.f32 %v3779, %v3780
      %v3782 = vsel %vm2425, %v3750, 0.0
      %v3783 = vadd.f32 %v3781, %v3782
      %v3784 = vadd.f32 %v2456, %v3783
      %v3785 = vld [vmem:[%s9] sm:$0x1]
      %v3787 = vlaneseq
      %v3788 = vshrl.u32 %v3787, 7
      %v3789 = vsub.s32 0, %v3788
      %v3790 = vrot.slane %v3785, %v3789
      %3791 = vrot.lane.b32.xlu0 %v3790, 32
      %v3792 = vpop.permute.xlu0 %3791
      %v3794 = vadd.f32 %v3784, %v3792
      %3796 = vrot.lane.b32.xlu0 %v3794, 127
      %v3797 = vpop.permute.xlu0 %3796
      %v3799 = vsub.f32 %v3794, %v3797
      %v3800 = vxor.u32 %v3799, 2147483648
      %v3801 = vmul.f32 %v3800, 1.442695
      %v3802 = vpow.pop %v3801
      %v3803 = vadd.f32 %v3802, 1.0
      %v3804 = vrcp.pop %v3803
      %v3805 = vmul.f32 1.0, %v3804
      %v3806 = vsub.f32 0.0, %v3799
      %v3807 = vxor.u32 %v3806, 2147483648
      %v3808 = vmul.f32 %v3807, 1.442695
      %v3809 = vpow.pop %v3808
      %v3810 = vadd.f32 %v3809, 1.0
      %v3811 = vrcp.pop %v3810
      %v3812 = vmul.f32 1.0, %v3811
      %3814 = vset.pattern.permute.xlu0 32
      %3815 = vperm.xlu0 %3814, %v3805
      %v3816 = vpop.permute.xlu0 %3815
      %v3818 = vmul.f32 %v3816, %v2456
      %3820 = vset.pattern.permute.xlu0 32
      %3821 = vperm.xlu0 %3820, %v3812
      %v3822 = vpop.permute.xlu0 %3821
      %v3824 = vmul.f32 %v3822, %v3783
      %v3825 = vadd.f32 %v3818, %v3824
      %v3826 = vld [vmem:[%s10] sm:$0x1]
      %v3828 = vlaneseq
      %v3829 = vshrl.u32 %v3828, 7
      %v3830 = vsub.s32 0, %v3829
      %v3831 = vrot.slane %v3826, %v3830
      %v3833 = vadd.f32 %v3825, %v3831
      %v3834 = vmax.f32 %v3833, 0.0
      %v3835 = vld [vmem:[%s11] sm:$0xff]
      %v3836 = vld [vmem:[%s11 + $0x8] sm:$0xff]
      %v3837 = vld [vmem:[%s11 + $0x10] sm:$0xff]
      %v3838 = vld [vmem:[%s11 + $0x18] sm:$0xff]
      %v3839 = vld [vmem:[%s12] sm:$0x1]
      %v3841 = vlaneseq
      %v3842 = vshrl.u32 %v3841, 7
      %v3843 = vsub.s32 0, %v3842
      %v3844 = vrot.slane %v3839, %v3843
      %vm3846 = vcmask 261120
      %v3848 = vsel %vm3846, %v3834, 0
      %3850 = vmatprep.subr.mxu0 0.0
      %3851 = vmatpush1.msra.mxu0 %v3835
      %3852 = vmatprep.subr.mxu0 0.0
      %3853 = vmatpush1.msra.mxu0 %v3836
      %3854 = vmatprep.subr.mxu0 0.0
      %3855 = vmatpush1.msra.mxu0 %v3837
      %3856 = vmatprep.subr.mxu0 0.0
      %3857 = vmatpush1.msra.mxu0 %v3838
      %3858 = vmatprep.subr.mxu0 0.0
      %3859 = vmatpush1.msra.mxu0 0.0
      %3860 = vmatprep.subr.mxu0 0.0
      %3861 = vmatpush1.msra.mxu0 0.0
      %3862 = vmatprep.subr.mxu0 0.0
      %3863 = vmatpush1.msra.mxu0 0.0
      %3864 = vmatprep.subr.mxu0 0.0
      %3865 = vmatpush1.msra.mxu0 0.0
      %3866 = vmatprep.subr.mxu0 0.0
      %3867 = vmatpush1.msra.mxu0 0.0
      %3868 = vmatprep.subr.mxu0 0.0
      %3869 = vmatpush1.msra.mxu0 0.0
      %3870 = vmatprep.subr.mxu0 0.0
      %3871 = vmatpush1.msra.mxu0 0.0
      %3872 = vmatprep.subr.mxu0 0.0
      %3873 = vmatpush1.msra.mxu0 0.0
      %3874 = vmatprep.subr.mxu0 0.0
      %3875 = vmatpush1.msra.mxu0 0.0
      %3876 = vmatprep.subr.mxu0 0.0
      %3877 = vmatpush1.msra.mxu0 0.0
      %3878 = vmatprep.subr.mxu0 0.0
      %3879 = vmatpush1.msra.mxu0 0.0
      %3880 = vmatprep.subr.mxu0 0.0
      %3881 = vmatpush1.msra.mxu0 0.0
      %3882 = vmatprep.subr.mxu0 0.0
      %3883 = vmatpush1.msra.mxu0 0.0
      %3884 = vmatprep.subr.mxu0 0.0
      %3885 = vmatpush1.msra.mxu0 0.0
      %3886 = vmatprep.subr.mxu0 0.0
      %3887 = vmatpush1.msra.mxu0 0.0
      %3888 = vmatprep.subr.mxu0 0.0
      %3889 = vmatpush1.msra.mxu0 0.0
      %3890 = vmatprep.subr.mxu0 0.0
      %3891 = vmatpush1.msra.mxu0 0.0
      %3892 = vmatprep.subr.mxu0 0.0
      %3893 = vmatpush1.msra.mxu0 0.0
      %3894 = vmatprep.subr.mxu0 0.0
      %3895 = vmatpush1.msra.mxu0 0.0
      %3896 = vmatprep.subr.mxu0 0.0
      %3897 = vmatpush1.msra.mxu0 0.0
      %3898 = vmatprep.subr.mxu0 0.0
      %3899 = vmatpush1.msra.mxu0 0.0
      %3900 = vmatprep.subr.mxu0 0.0
      %3901 = vmatpush1.msra.mxu0 0.0
      %3902 = vmatprep.subr.mxu0 0.0
      %3903 = vmatpush1.msra.mxu0 0.0
      %3904 = vmatprep.subr.mxu0 0.0
      %3905 = vmatpush1.msra.mxu0 0.0
      %3906 = vmatprep.subr.mxu0 0.0
      %3907 = vmatpush1.msra.mxu0 0.0
      %3908 = vmatprep.subr.mxu0 0.0
      %3909 = vmatpush1.msra.mxu0 0.0
      %3910 = vmatprep.subr.mxu0 0.0
      %3911 = vmatpush1.msra.mxu0 0.0
      %3912 = vmatprep.subr.mxu0 0.0
      %3913 = vmatpush1.msra.mxu0 0.0
      %3914 = vmatprep.mubr.f32.mxu0 0.0
      %3915 = vmatmul.mubr.f32.gmra.mrb[0].mxu0 %v3848
      %v3916 = vpop.f32.mrb[0].mxu0
      %v3917 = vadd.f32 %v3844, %v3916
      %v3918 = vpop.f32.mrb[0].mxu0
      %3919 = vdwg.mxu0
      %v3920 = vld [vmem:[%s13] sm:$0xff]
      %v3921 = vld [vmem:[%s13 + $0x8] sm:$0xff]
      %v3922 = vld [vmem:[%s13 + $0x10] sm:$0xff]
      %v3923 = vld [vmem:[%s13 + $0x18] sm:$0xff]
      %v3924 = vld [vmem:[%s13 + $0x20] sm:$0xff]
      %v3925 = vld [vmem:[%s13 + $0x28] sm:$0xff]
      %v3926 = vld [vmem:[%s13 + $0x30] sm:$0xff]
      %v3927 = vld [vmem:[%s13 + $0x38] sm:$0xff]
      %v3928 = vld [vmem:[%s14] sm:$0x3]
      %v3930 = vlaneseq
      %v3931 = vshrl.u32 %v3930, 7
      %v3932 = vsub.s32 0, %v3931
      %v3933 = vrot.slane %v3928, %v3932
      %v3934 = vlaneseq
      %v3935 = vshrl.u32 %v3934, 7
      %v3936 = vsub.s32 1, %v3935
      %v3937 = vrot.slane %v3928, %v3936
      %v3941 = vsel %vm3846, %v3917, 0
      %3943 = vmatprep.subr.mxu0 %v3921
      %3944 = vmatpush1.msra.mxu0 %v3920
      %3945 = vmatprep.subr.mxu0 %v3923
      %3946 = vmatpush1.msra.mxu0 %v3922
      %3947 = vmatprep.subr.mxu0 %v3925
      %3948 = vmatpush1.msra.mxu0 %v3924
      %3949 = vmatprep.subr.mxu0 %v3927
      %3950 = vmatpush1.msra.mxu0 %v3926
      %3951 = vmatprep.subr.mxu0 0.0
      %3952 = vmatpush1.msra.mxu0 0.0
      %3953 = vmatprep.subr.mxu0 0.0
      %3954 = vmatpush1.msra.mxu0 0.0
      %3955 = vmatprep.subr.mxu0 0.0
      %3956 = vmatpush1.msra.mxu0 0.0
      %3957 = vmatprep.subr.mxu0 0.0
      %3958 = vmatpush1.msra.mxu0 0.0
      %3959 = vmatprep.subr.mxu0 0.0
      %3960 = vmatpush1.msra.mxu0 0.0
      %3961 = vmatprep.subr.mxu0 0.0
      %3962 = vmatpush1.msra.mxu0 0.0
      %3963 = vmatprep.subr.mxu0 0.0
      %3964 = vmatpush1.msra.mxu0 0.0
      %3965 = vmatprep.subr.mxu0 0.0
      %3966 = vmatpush1.msra.mxu0 0.0
      %3967 = vmatprep.subr.mxu0 0.0
      %3968 = vmatpush1.msra.mxu0 0.0
      %3969 = vmatprep.subr.mxu0 0.0
      %3970 = vmatpush1.msra.mxu0 0.0
      %3971 = vmatprep.subr.mxu0 0.0
      %3972 = vmatpush1.msra.mxu0 0.0
      %3973 = vmatprep.subr.mxu0 0.0
      %3974 = vmatpush1.msra.mxu0 0.0
      %3975 = vmatprep.subr.mxu0 0.0
      %3976 = vmatpush1.msra.mxu0 0.0
      %3977 = vmatprep.subr.mxu0 0.0
      %3978 = vmatpush1.msra.mxu0 0.0
      %3979 = vmatprep.subr.mxu0 0.0
      %3980 = vmatpush1.msra.mxu0 0.0
      %3981 = vmatprep.subr.mxu0 0.0
      %3982 = vmatpush1.msra.mxu0 0.0
      %3983 = vmatprep.subr.mxu0 0.0
      %3984 = vmatpush1.msra.mxu0 0.0
      %3985 = vmatprep.subr.mxu0 0.0
      %3986 = vmatpush1.msra.mxu0 0.0
      %3987 = vmatprep.subr.mxu0 0.0
      %3988 = vmatpush1.msra.mxu0 0.0
      %3989 = vmatprep.subr.mxu0 0.0
      %3990 = vmatpush1.msra.mxu0 0.0
      %3991 = vmatprep.subr.mxu0 0.0
      %3992 = vmatpush1.msra.mxu0 0.0
      %3993 = vmatprep.subr.mxu0 0.0
      %3994 = vmatpush1.msra.mxu0 0.0
      %3995 = vmatprep.subr.mxu0 0.0
      %3996 = vmatpush1.msra.mxu0 0.0
      %3997 = vmatprep.subr.mxu0 0.0
      %3998 = vmatpush1.msra.mxu0 0.0
      %3999 = vmatprep.subr.mxu0 0.0
      %4000 = vmatpush1.msra.mxu0 0.0
      %4001 = vmatprep.subr.mxu0 0.0
      %4002 = vmatpush1.msra.mxu0 0.0
      %4003 = vmatprep.subr.mxu0 0.0
      %4004 = vmatpush1.msra.mxu0 0.0
      %4005 = vmatprep.subr.mxu0 0.0
      %4006 = vmatpush1.msra.mxu0 0.0
      %4007 = vmatprep.mubr.f32.mxu0 0.0
      %4008 = vmatmul.mubr.f32.gmra.mrb[0].mxu0 %v3941
      %v4009 = vpop.f32.mrb[0].mxu0
      %v4010 = vadd.f32 %v3933, %v4009
      %v4011 = vpop.f32.mrb[0].mxu0
      %v4012 = vadd.f32 %v3937, %v4011
      %4013 = vdwg.mxu0
      %vm4014 = vcmask 1041408
      %v4015 = vsel %vm4014, %v4010, 0.0
      %v4016 = vrot.slane %v4015, 4
      %v4017 = vadd.f32 %v4015, %v4016
      %v4018 = vrot.slane %v4017, 2
      %v4019 = vadd.f32 %v4017, %v4018
      %v4020 = vrot.slane %v4019, 1
      %v4021 = vadd.f32 %v4019, %v4020
      %v4022 = vsel %vm4014, %v4012, 0.0
      %v4023 = vrot.slane %v4022, 4
      %v4024 = vadd.f32 %v4022, %v4023
      %v4025 = vrot.slane %v4024, 2
      %v4026 = vadd.f32 %v4024, %v4025
      %v4027 = vrot.slane %v4026, 1
      %v4028 = vadd.f32 %v4026, %v4027
      %v4029 = vrcp.pop 2.0
      %v4030 = vmul.f32 %v4021, %v4029
      %v4031 = vmul.f32 %v4028, %v4029
      %v4032 = vsub.f32 %v4010, %v4030
      %v4033 = vsub.f32 %v4012, %v4031
      %v4034 = vmul.f32 %v4032, %v4032
      %v4035 = vmul.f32 %v4033, %v4033
      %v4036 = vsel %vm4014, %v4034, 0.0
      %v4037 = vrot.slane %v4036, 4
      %v4038 = vadd.f32 %v4036, %v4037
      %v4039 = vrot.slane %v4038, 2
      %v4040 = vadd.f32 %v4038, %v4039
      %v4041 = vrot.slane %v4040, 1
      %v4042 = vadd.f32 %v4040, %v4041
      %v4043 = vsel %vm4014, %v4035, 0.0
      %v4044 = vrot.slane %v4043, 4
      %v4045 = vadd.f32 %v4043, %v4044
      %v4046 = vrot.slane %v4045, 2
      %v4047 = vadd.f32 %v4045, %v4046
      %v4048 = vrot.slane %v4047, 1
      %v4049 = vadd.f32 %v4047, %v4048
      %v4050 = vmul.f32 %v4042, %v4029
      %v4051 = vmul.f32 %v4049, %v4029
      %v4052 = vadd.f32 %v4050, 1e-05
      %v4053 = vadd.f32 %v4051, 1e-05
      %v4054 = vrsqrt.pop %v4052
      %v4055 = vrsqrt.pop %v4053
      %v4056 = vmul.f32 %v4032, %v4054
      %v4057 = vmul.f32 %v4033, %v4055
      %v4058 = vld [vmem:[%s15] sm:$0x3]
      %v4060 = vlaneseq
      %v4061 = vshrl.u32 %v4060, 7
      %v4062 = vsub.s32 0, %v4061
      %v4063 = vrot.slane %v4058, %v4062
      %v4064 = vlaneseq
      %v4065 = vshrl.u32 %v4064, 7
      %v4066 = vsub.s32 1, %v4065
      %v4067 = vrot.slane %v4058, %v4066
      %v4070 = vmul.f32 %v4056, %v4063
      %v4071 = vmul.f32 %v4057, %v4067
      %v4072 = vld [vmem:[%s16] sm:$0x3]
      %v4074 = vlaneseq
      %v4075 = vshrl.u32 %v4074, 7
      %v4076 = vsub.s32 0, %v4075
      %v4077 = vrot.slane %v4072, %v4076
      %v4078 = vlaneseq
      %v4079 = vshrl.u32 %v4078, 7
      %v4080 = vsub.s32 1, %v4079
      %v4081 = vrot.slane %v4072, %v4080
      %v4084 = vadd.f32 %v4070, %v4077
      %v4085 = vadd.f32 %v4071, %v4081
      %v4086 = vmax.f32 %v4084, 0.0
      %v4087 = vmax.f32 %v4085, 0.0
      %v4088 = vld [vmem:[%s17] sm:$0xff]
      %v4089 = vld [vmem:[%s17 + $0x8] sm:$0xff]
      %v4090 = vld [vmem:[%s17 + $0x10] sm:$0xff]
      %v4091 = vld [vmem:[%s17 + $0x18] sm:$0xff]
      %v4092 = vld [vmem:[%s17 + $0x20] sm:$0xff]
      %v4093 = vld [vmem:[%s17 + $0x28] sm:$0xff]
      %v4094 = vld [vmem:[%s17 + $0x30] sm:$0xff]
      %v4095 = vld [vmem:[%s17 + $0x38] sm:$0xff]
      %v4096 = vld [vmem:[%s17 + $0x40] sm:$0xff]
      %v4097 = vld [vmem:[%s17 + $0x48] sm:$0xff]
      %v4098 = vld [vmem:[%s17 + $0x50] sm:$0xff]
      %v4099 = vld [vmem:[%s17 + $0x58] sm:$0xff]
      %v4100 = vld [vmem:[%s17 + $0x60] sm:$0xff]
      %v4101 = vld [vmem:[%s17 + $0x68] sm:$0xff]
      %v4102 = vld [vmem:[%s17 + $0x70] sm:$0xff]
      %v4103 = vld [vmem:[%s17 + $0x78] sm:$0xff]
      %v4104 = vld [vmem:[%s17 + $0x80] sm:$0xff]
      %v4105 = vld [vmem:[%s17 + $0x88] sm:$0xff]
      %v4106 = vld [vmem:[%s17 + $0x90] sm:$0xff]
      %v4107 = vld [vmem:[%s17 + $0x98] sm:$0xff]
      %v4108 = vld [vmem:[%s17 + $0xa0] sm:$0xff]
      %v4109 = vld [vmem:[%s17 + $0xa8] sm:$0xff]
      %v4110 = vld [vmem:[%s17 + $0xb0] sm:$0xff]
      %v4111 = vld [vmem:[%s17 + $0xb8] sm:$0xff]
      %v4112 = vld [vmem:[%s17 + $0xc0] sm:$0xff]
      %v4113 = vld [vmem:[%s17 + $0xc8] sm:$0xff]
      %v4114 = vld [vmem:[%s17 + $0xd0] sm:$0xff]
      %v4115 = vld [vmem:[%s17 + $0xd8] sm:$0xff]
      %v4116 = vld [vmem:[%s17 + $0xe0] sm:$0xff]
      %v4117 = vld [vmem:[%s17 + $0xe8] sm:$0xff]
      %v4118 = vld [vmem:[%s17 + $0xf0] sm:$0xff]
      %v4119 = vld [vmem:[%s17 + $0xf8] sm:$0xff]
      %v4120 = vld [vmem:[%s18] sm:$0x1]
      %v4122 = vlaneseq
      %v4123 = vshrl.u32 %v4122, 7
      %v4124 = vsub.s32 0, %v4123
      %v4125 = vrot.slane %v4120, %v4124
      %4127 = vmatprep.subr.mxu0 0.0
      %4128 = vmatpush1.msra.mxu0 %v4088
      %4129 = vmatprep.subr.mxu0 0.0
      %4130 = vmatpush1.msra.mxu0 %v4089
      %4131 = vmatprep.subr.mxu0 0.0
      %4132 = vmatpush1.msra.mxu0 %v4090
      %4133 = vmatprep.subr.mxu0 0.0
      %4134 = vmatpush1.msra.mxu0 %v4091
      %4135 = vmatprep.subr.mxu0 0.0
      %4136 = vmatpush1.msra.mxu0 %v4092
      %4137 = vmatprep.subr.mxu0 0.0
      %4138 = vmatpush1.msra.mxu0 %v4093
      %4139 = vmatprep.subr.mxu0 0.0
      %4140 = vmatpush1.msra.mxu0 %v4094
      %4141 = vmatprep.subr.mxu0 0.0
      %4142 = vmatpush1.msra.mxu0 %v4095
      %4143 = vmatprep.subr.mxu0 0.0
      %4144 = vmatpush1.msra.mxu0 %v4096
      %4145 = vmatprep.subr.mxu0 0.0
      %4146 = vmatpush1.msra.mxu0 %v4097
      %4147 = vmatprep.subr.mxu0 0.0
      %4148 = vmatpush1.msra.mxu0 %v4098
      %4149 = vmatprep.subr.mxu0 0.0
      %4150 = vmatpush1.msra.mxu0 %v4099
      %4151 = vmatprep.subr.mxu0 0.0
      %4152 = vmatpush1.msra.mxu0 %v4100
      %4153 = vmatprep.subr.mxu0 0.0
      %4154 = vmatpush1.msra.mxu0 %v4101
      %4155 = vmatprep.subr.mxu0 0.0
      %4156 = vmatpush1.msra.mxu0 %v4102
      %4157 = vmatprep.subr.mxu0 0.0
      %4158 = vmatpush1.msra.mxu0 %v4103
      %4159 = vmatprep.subr.mxu0 0.0
      %4160 = vmatpush1.msra.mxu0 %v4104
      %4161 = vmatprep.subr.mxu0 0.0
      %4162 = vmatpush1.msra.mxu0 %v4105
      %4163 = vmatprep.subr.mxu0 0.0
      %4164 = vmatpush1.msra.mxu0 %v4106
      %4165 = vmatprep.subr.mxu0 0.0
      %4166 = vmatpush1.msra.mxu0 %v4107
      %4167 = vmatprep.subr.mxu0 0.0
      %4168 = vmatpush1.msra.mxu0 %v4108
      %4169 = vmatprep.subr.mxu0 0.0
      %4170 = vmatpush1.msra.mxu0 %v4109
      %4171 = vmatprep.subr.mxu0 0.0
      %4172 = vmatpush1.msra.mxu0 %v4110
      %4173 = vmatprep.subr.mxu0 0.0
      %4174 = vmatpush1.msra.mxu0 %v4111
      %4175 = vmatprep.subr.mxu0 0.0
      %4176 = vmatpush1.msra.mxu0 %v4112
      %4177 = vmatprep.subr.mxu0 0.0
      %4178 = vmatpush1.msra.mxu0 %v4113
      %4179 = vmatprep.subr.mxu0 0.0
      %4180 = vmatpush1.msra.mxu0 %v4114
      %4181 = vmatprep.subr.mxu0 0.0
      %4182 = vmatpush1.msra.mxu0 %v4115
      %4183 = vmatprep.subr.mxu0 0.0
      %4184 = vmatpush1.msra.mxu0 %v4116
      %4185 = vmatprep.subr.mxu0 0.0
      %4186 = vmatpush1.msra.mxu0 %v4117
      %4187 = vmatprep.subr.mxu0 0.0
      %4188 = vmatpush1.msra.mxu0 %v4118
      %4189 = vmatprep.subr.mxu0 0.0
      %4190 = vmatpush1.msra.mxu0 %v4119
      %4191 = vmatprep.mubr.f32.mxu0 %v4087
      %4192 = vmatmul.mubr.f32.gmra.mrb[0].mxu0 %v4086
      %v4193 = vpop.f32.mrb[0].mxu0
      %v4194 = vadd.f32 %v4125, %v4193
      %v4195 = vpop.f32.mrb[0].mxu0
      %4196 = vdwg.mxu0
      %vm4197 = vcmask 254976
      %4198 = vst.msk [vmem:[%s654] sm:$0x3] %vm4197, %v3917
      %4199 = vst [vmem:[%s658] sm:$0x3] %v4194
      %p4200 = scmp.lt.s32.totalorder %s32, 1
      %s4201 = scalar_select %p4200, %s32, 1
      %s4202 = smul.addr %s4201, 2
      %s4203 = scalar_lea.vmem %s19, %s4202
      %p4204 = scmp.lt.s32.totalorder %s32, 1
      %s4205 = scalar_select %p4204, %s32, 1
      %s4206 = smul.addr %s4205, 2
      %s4207 = scalar_lea.vmem %s20, %s4206
      // Predicated region
      $region97: #{tfc_forward.1} parent=95 // pred_check
        %p4208 = pneg %p459
      $region98: #{tfc_forward.1} parent=95 // pred_check_branch
        %4210 = sbr.rel (%p4208) target = $region100
      $region99: #{tfc_forward.1} parent=95 // pred_region
        _
      $region100: #{tfc_forward.1} parent=95 // pred_fallthru
        _
      // Predicated region
      $region101: #{tfc_forward.1} parent=95 // pred_check
        %p4211 = pneg %p485
      $region102: #{tfc_forward.1} parent=95 // pred_check_branch
        %4213 = sbr.rel (%p4211) target = $region104
      $region103: #{tfc_forward.1} parent=95 // pred_region
        _
      $region104: #{tfc_forward.1} parent=95 // pred_fallthru
        _
    $region96: #{tfc_forward.1} parent=5 // pred_fallthru
      _
    %p4214 = scmp.le.s32.totalorder 2, %s27
    // Predicated region
    $region105: #{tfc_forward.1} parent=5 // pred_check
      %p4215 = pneg %p4214
    $region106: #{tfc_forward.1} parent=5 // pred_check_branch
      %4217 = sbr.rel (%p4215) target = $region108
    $region107: #{tfc_forward.1} parent=5 // pred_region
      %s4218 = ssub.s32 %s27, 2
      // Predicated region
      $region109: #{tfc_forward.1} parent=107 // pred_check
        %p4219 = pneg %p465
      $region110: #{tfc_forward.1} parent=107 // pred_check_branch
        %4221 = sbr.rel (%p4219) target = $region112
      $region111: #{tfc_forward.1} parent=107 // pred_region
        %p4222 = scmp.lt.s32.totalorder %s33, 1
        %s4223 = scalar_select %p4222, %s33, 1
        %s4224 = smul.addr %s4223, 2
        %s4225 = scalar_lea.vmem %s19, %s4224
      $region112: #{tfc_forward.1} parent=107 // pred_fallthru
        _
      // Predicated region
      $region113: #{tfc_forward.1} parent=107 // pred_check
        %p4226 = pneg %p491
      $region114: #{tfc_forward.1} parent=107 // pred_check_branch
        %4228 = sbr.rel (%p4226) target = $region116
      $region115: #{tfc_forward.1} parent=107 // pred_region
        %p4229 = scmp.lt.s32.totalorder %s33, 1
        %s4230 = scalar_select %p4229, %s33, 1
        %s4231 = smul.addr %s4230, 2
        %s4232 = scalar_lea.vmem %s20, %s4231
      $region116: #{tfc_forward.1} parent=107 // pred_fallthru
        _
    $region108: #{tfc_forward.1} parent=5 // pred_fallthru
      _
  $region6: #{tfc_forward.1} parent=0 // loop_footer
    %s31 = sadd.s32 1, %s27
  $region7: #{tfc_forward.1} parent=0 // loop_footer_branch
    %26 = sbr.rel target = $region3
  $region8: #{tfc_forward.1} parent=0 // loop_exit
    _

</llo_original>
